<compile_context>
chip_gen: v5e
topology: v5e:2x2
jax: 0.10.0
libtpu: 0.0.40
codegen_flags: <defaults>
</compile_context>

<pallas_src>
import functools

import jax
import jax.numpy as jnp
from jax import lax
from jax.experimental import pallas as pl
from jax.experimental.pallas import tpu as pltpu


def make_token_predictor_kernel(num_layers: int, seq_len: int, block_b: int,
                                hidden: int, matmul_dtype):
    """One grid step = TB batch elements: full LSTM stack + projection + log_softmax."""
    T, TB, H = seq_len, block_b, hidden
    mmd = matmul_dtype

    def kernel(*refs):
        n_in = 1 + 3 * num_layers + 2
        x_ref = refs[0]                            # (1, T*TB, F)   time-major rows
        layer_refs = refs[1:1 + 3 * num_layers]    # per layer: w_ih (Cin,4H), w_hh (H,4H), b (1,4H)
        wp_ref = refs[1 + 3 * num_layers]          # (H, Vp)
        bp_ref = refs[2 + 3 * num_layers]          # (1, Vp)   padded cols hold -1e30
        out_ref = refs[n_in]                       # (1, T*TB, Vp)
        bufs = (refs[n_in + 1], refs[n_in + 2])    # (T*TB, H) ping / pong layer activations

        src = x_ref[0].astype(jnp.float32)         # (T*TB, C_in) for layer 0

        for l in range(num_layers):
            w_ih = layer_refs[3 * l][...]                           # (C_in, 4H), order [i,f,o,g]
            w_hh = layer_refs[3 * l + 1][...]                       # (H, 4H)
            bias = layer_refs[3 * l + 2][...].astype(jnp.float32)   # (1, 4H)

            # Input projection for ALL timesteps in one MXU matmul; bias added once.
            gx = jnp.dot(src.astype(mmd), w_ih,
                         preferred_element_type=jnp.float32) + bias  # (T*TB, 4H)

            dst = bufs[l % 2]
            h = jnp.zeros((TB, H), jnp.float32)
            c = jnp.zeros((TB, H), jnp.float32)

            # Fully unrolled recurrence (T is static & small).  For long
            # sequences switch to a blocked lax.fori_loop(..., unroll=k).
            for t in range(T):
                row = t * TB                                         # static offset
                gates = gx[row:row + TB, :] + jnp.dot(
                    h.astype(mmd), w_hh, preferred_element_type=jnp.float32)  # (TB, 4H)
                # gate order [i, f, o, g]: one sigmoid over 3H, one tanh over H
                sg = jax.nn.sigmoid(gates[:, :3 * H])
                g_g = jnp.tanh(gates[:, 3 * H:])
                i_g = sg[:, 0 * H:1 * H]
                f_g = sg[:, 1 * H:2 * H]
                o_g = sg[:, 2 * H:3 * H]
                c = f_g * c + i_g * g_g
                h = o_g * jnp.tanh(c)
                dst[pl.ds(row, TB), :] = h

            src = dst[...]                                           # (T*TB, H)

        # 1x1 Conv1d projection (one lane-dense matmul) + log_softmax over classes.
        logits = jnp.dot(src.astype(mmd), wp_ref[...],
                         preferred_element_type=jnp.float32) + bp_ref[...]   # (T*TB, Vp)
        m = jnp.max(logits, axis=-1, keepdims=True)
        lse = m + jnp.log(jnp.sum(jnp.exp(logits - m), axis=-1, keepdims=True))
        out_ref[0] = (logits - lse).astype(out_ref.dtype)

    return kernel


def token_predictor_forward(encodings, lengths, lstm_params, proj_w, proj_b, *,
                            block_b: int = 8, matmul_dtype=jnp.float32):
    """encodings: (B, F, T) float32. lengths: (B,) — unused, mirroring the torch forward.
    lstm_params: list of (w_ih (4H,Cin), w_hh (4H,H), b_ih (4H,), b_hh (4H,)) torch layout.
    proj_w: (V, H, 1) torch Conv1d layout; proj_b: (V,). Returns (B, V, T) log-probs."""
    del lengths  # unused by the reference forward
    B, F, T = encodings.shape
    num_layers = len(lstm_params)
    H = lstm_params[0][1].shape[1]
    V = proj_w.shape[0]
    Vp = ((V + 127) // 128) * 128          # lane-dense padded class axis
    TB = block_b
    nb = pl.cdiv(B, TB)
    Bp = nb * TB

    def reorder_gates(w):
        # torch gate order along last axis [i|f|g|o] -> [i|f|o|g]
        return jnp.concatenate(
            [w[..., 0 * H:1 * H], w[..., 1 * H:2 * H],
             w[..., 3 * H:4 * H], w[..., 2 * H:3 * H]], axis=-1)

    # (B, F, T) -> time-major, batch-blocked 2D slabs (nb, T*TB, F);
    # row t*TB + j inside block k corresponds to (time t, batch k*TB + j).
    x = jnp.transpose(encodings, (2, 0, 1)).astype(jnp.float32)       # (T, B, F)
    if Bp != B:
        x = jnp.pad(x, ((0, 0), (0, Bp - B), (0, 0)))
    x = x.reshape(T, nb, TB, F).transpose(1, 0, 2, 3).reshape(nb, T * TB, F)

    inputs = [x]
    in_specs = [pl.BlockSpec((1, T * TB, F), lambda b: (b, 0, 0))]
    for (w_ih, w_hh, b_ih, b_hh) in lstm_params:
        w_ih_t = reorder_gates(jnp.transpose(w_ih)).astype(matmul_dtype)   # (C_in, 4H)
        w_hh_t = reorder_gates(jnp.transpose(w_hh)).astype(matmul_dtype)   # (H, 4H)
        bias = reorder_gates(b_ih + b_hh).reshape(1, 4 * H).astype(jnp.float32)
        inputs += [w_ih_t, w_hh_t, bias]
        in_specs += [
            pl.BlockSpec(w_ih_t.shape, lambda b: (0, 0)),
            pl.BlockSpec((H, 4 * H), lambda b: (0, 0)),
            pl.BlockSpec((1, 4 * H), lambda b: (0, 0)),
        ]
    wp = jnp.transpose(proj_w[:, :, 0])                                     # (H, V)
    wp = jnp.pad(wp, ((0, 0), (0, Vp - V))).astype(matmul_dtype)            # zero pad cols
    bp = jnp.pad(proj_b, (0, Vp - V),
                 constant_values=-1e30).reshape(1, Vp).astype(jnp.float32)  # -inf-ish pad
    inputs += [wp, bp]
    in_specs += [pl.BlockSpec((H, Vp), lambda b: (0, 0)),
                 pl.BlockSpec((1, Vp), lambda b: (0, 0))]

    out = pl.pallas_call(
        make_token_predictor_kernel(num_layers, T, TB, H, matmul_dtype),
        out_shape=jax.ShapeDtypeStruct((nb, T * TB, Vp), jnp.float32),
        grid=(nb,),
        in_specs=in_specs,
        out_specs=pl.BlockSpec((1, T * TB, Vp), lambda b: (b, 0, 0)),
        scratch_shapes=[
            pltpu.VMEM((T * TB, H), jnp.float32),   # layer activations (ping)
            pltpu.VMEM((T * TB, H), jnp.float32),   # layer activations (pong)
        ],
        compiler_params=pltpu.CompilerParams(
            dimension_semantics=("parallel",),      # batch blocks shard across TCs
            vmem_limit_bytes=32 * 1024 * 1024),
    )(*inputs)

    # Un-block, strip batch/class padding, return torch NCW contract (B, V, T).
    out = out.reshape(nb, T, TB, Vp)
    out = jnp.transpose(out, (0, 2, 3, 1)).reshape(Bp, Vp, T)
    return out[:B, :V, :]


def reference_forward(encodings, lstm_params, proj_w, proj_b):
    """Pure-JAX reference matching torch.nn.LSTM / Conv1d(k=1) / log_softmax."""
    B, F, T = encodings.shape
    hp = lax.Precision.HIGHEST
    x = jnp.transpose(encodings, (2, 0, 1))        # (T, B, F)
    for (w_ih, w_hh, b_ih, b_hh) in lstm_params:
        H = w_hh.shape[1]

        def step(carry, x_t):
            h, c = carry
            gates = (jnp.dot(x_t, w_ih.T, precision=hp) + b_ih
                     + jnp.dot(h, w_hh.T, precision=hp) + b_hh)
            i, f, g, o = jnp.split(gates, 4, axis=-1)
            i = jax.nn.sigmoid(i)
            f = jax.nn.sigmoid(f)
            g = jnp.tanh(g)
            o = jax.nn.sigmoid(o)
            c = f * c + i * g
            h = o * jnp.tanh(c)
            return (h, c), h

        init = (jnp.zeros((B, H), jnp.float32), jnp.zeros((B, H), jnp.float32))
        _, x = lax.scan(step, init, x)             # (T, B, H)

    x = jnp.transpose(x, (1, 2, 0))                # (B, H, T)
    logits = (jnp.einsum('bht,vh->bvt', x, proj_w[:, :, 0], precision=hp)
              + proj_b[None, :, None])
    return jax.nn.log_softmax(logits, axis=1)


def init_params(key, feat, hidden, num_layers, num_classes):
    """Deterministic synthetic init, torch weight layouts."""
    lstm_params = []
    s = 1.0 / jnp.sqrt(hidden)
    for l in range(num_layers):
        in_size = feat if l == 0 else hidden
        key, k1, k2, k3, k4 = jax.random.split(key, 5)
        w_ih = s * jax.random.normal(k1, (4 * hidden, in_size), jnp.float32)
        w_hh = s * jax.random.normal(k2, (4 * hidden, hidden), jnp.float32)
        b_ih = s * jax.random.normal(k3, (4 * hidden,), jnp.float32)
        b_hh = s * jax.random.normal(k4, (4 * hidden,), jnp.float32)
        lstm_params.append((w_ih, w_hh, b_ih, b_hh))
    key, k5, k6 = jax.random.split(key, 3)
    proj_w = s * jax.random.normal(k5, (num_classes, hidden, 1), jnp.float32)
    proj_b = 0.1 * jax.random.normal(k6, (num_classes,), jnp.float32)
    return lstm_params, proj_w, proj_b


if __name__ == "__main__":
    # Small shapes consistent with the module hyper-parameters.
    B = 16             # batch (2 blocks of 8 -> both v7x TensorCores get work)
    F = 32             # hp.Encoder.Size
    H = 32             # hp.Token_Predictor.Size
    L = 2              # hp.Token_Predictor.LSTM.Stack
    T = 16             # sequence length
    tokens = 10        # hp.Tokens
    V = tokens + 1     # output classes

    key = jax.random.PRNGKey(0)
    kx, kp = jax.random.split(key)
    encodings = jax.random.normal(kx, (B, F, T), jnp.float32)
    lengths = jnp.full((B,), T, jnp.int32)   # unused by forward (parity with module)
    lstm_params, proj_w, proj_b = init_params(kp, F, H, L, V)

    ref = reference_forward(encodings, lstm_params, proj_w, proj_b)

    # f32 MXU path (safe on all generations).
    run = jax.jit(functools.partial(token_predictor_forward, block_b=8))
    out = jax.block_until_ready(run(encodings, lengths, lstm_params, proj_w, proj_b))
    assert out.shape == (B, V, T)
    max_diff = float(jnp.max(jnp.abs(out - ref)))
    assert jnp.allclose(out, ref, rtol=2e-2, atol=2e-2), f"max abs diff {max_diff}"
    assert jnp.allclose(jnp.sum(jnp.exp(out), axis=1), 1.0, atol=1e-3)

    # bf16 MXU-operand path (v6e/v7x fast path); elementwise math stays f32.
    run_bf16 = jax.jit(functools.partial(
        token_predictor_forward, block_b=8, matmul_dtype=jnp.bfloat16))
    out_bf16 = jax.block_until_ready(
        run_bf16(encodings, lengths, lstm_params, proj_w, proj_b))
    assert out_bf16.shape == (B, V, T)
    bf16_diff = float(jnp.max(jnp.abs(out_bf16 - ref)))
    assert bf16_diff < 0.25, f"bf16 path diverged: max abs diff {bf16_diff}"
    assert jnp.allclose(jnp.sum(jnp.exp(out_bf16), axis=1), 1.0, atol=1e-3)

    print("KERNEL_OK")
</pallas_src>

<mosaic_0001>
module attributes {stable_mosaic.version = 11 : i64} {
  func.func @kernel(%arg0: i32, %arg1: memref<1x128x32xf32, #tpu.memory_space<vmem>>, %arg2: memref<32x128xf32, #tpu.memory_space<vmem>>, %arg3: memref<32x128xf32, #tpu.memory_space<vmem>>, %arg4: memref<1x128xf32, #tpu.memory_space<vmem>>, %arg5: memref<32x128xf32, #tpu.memory_space<vmem>>, %arg6: memref<32x128xf32, #tpu.memory_space<vmem>>, %arg7: memref<1x128xf32, #tpu.memory_space<vmem>>, %arg8: memref<32x128xf32, #tpu.memory_space<vmem>>, %arg9: memref<1x128xf32, #tpu.memory_space<vmem>>, %arg10: memref<1x128x128xf32, #tpu.memory_space<vmem>>, %arg11: memref<128x32xf32, #tpu.memory_space<vmem>>, %arg12: memref<128x32xf32, #tpu.memory_space<vmem>>) attributes {dimension_semantics = [#tpu.dimension_semantics<parallel>], iteration_bounds = array<i64: 2>, scalar_prefetch = 0 : i64, scratch_operands = 2 : i64, tpu.core_type = #tpu.core_type<tc>, window_params = [{transform_indices = @transform_0, window_bounds = array<i64: 1, 128, 32>}, {pipeline_mode = #tpu.pipeline_mode<synchronous>, transform_indices = @transform_1, window_bounds = array<i64: 32, 128>}, {pipeline_mode = #tpu.pipeline_mode<synchronous>, transform_indices = @transform_2, window_bounds = array<i64: 32, 128>}, {pipeline_mode = #tpu.pipeline_mode<synchronous>, transform_indices = @transform_3, window_bounds = array<i64: 1, 128>}, {pipeline_mode = #tpu.pipeline_mode<synchronous>, transform_indices = @transform_4, window_bounds = array<i64: 32, 128>}, {pipeline_mode = #tpu.pipeline_mode<synchronous>, transform_indices = @transform_5, window_bounds = array<i64: 32, 128>}, {pipeline_mode = #tpu.pipeline_mode<synchronous>, transform_indices = @transform_6, window_bounds = array<i64: 1, 128>}, {pipeline_mode = #tpu.pipeline_mode<synchronous>, transform_indices = @transform_7, window_bounds = array<i64: 32, 128>}, {pipeline_mode = #tpu.pipeline_mode<synchronous>, transform_indices = @transform_8, window_bounds = array<i64: 1, 128>}, {transform_indices = @transform_9, window_bounds = array<i64: 1, 128, 128>}]} {
    %c0 = arith.constant 0 : index
    %c0_0 = arith.constant 0 : index
    %c0_1 = arith.constant 0 : index
    %0 = vector.load %arg1[%c0, %c0_0, %c0_1] : memref<1x128x32xf32, #tpu.memory_space<vmem>>, vector<1x128x32xf32>
    %1 = vector.shape_cast %0 : vector<1x128x32xf32> to vector<128x32xf32>
    %c0_2 = arith.constant 0 : index
    %c0_3 = arith.constant 0 : index
    %2 = vector.load %arg2[%c0_2, %c0_3] : memref<32x128xf32, #tpu.memory_space<vmem>>, vector<32x128xf32>
    %c0_4 = arith.constant 0 : index
    %c0_5 = arith.constant 0 : index
    %3 = vector.load %arg3[%c0_4, %c0_5] : memref<32x128xf32, #tpu.memory_space<vmem>>, vector<32x128xf32>
    %c0_6 = arith.constant 0 : index
    %c0_7 = arith.constant 0 : index
    %4 = vector.load %arg4[%c0_6, %c0_7] : memref<1x128xf32, #tpu.memory_space<vmem>>, vector<1x128xf32>
    %cst = arith.constant dense<0.000000e+00> : vector<128x128xf32>
    %5 = tpu.matmul %1, %2, %cst {dimension_numbers = #tpu.dot_dimension_numbers<[1], [0], [0], [1], [0, 0, 1, 1], [], []>} : vector<128x32xf32>, vector<32x128xf32>, vector<128x128xf32> -> vector<128x128xf32>
    %6 = vector.broadcast %4 : vector<1x128xf32> to vector<128x128xf32>
    %7 = arith.addf %5, %6 : vector<128x128xf32>
    %cst_8 = arith.constant 0.000000e+00 : f32
    %8 = vector.broadcast %cst_8 : f32 to vector<8x32xf32>
    %cst_9 = arith.constant 0.000000e+00 : f32
    %9 = vector.broadcast %cst_9 : f32 to vector<8x32xf32>
    %10 = vector.extract_strided_slice %7 {offsets = [0, 0], sizes = [8, 128], strides = [1, 1]} : vector<128x128xf32> to vector<8x128xf32>
    %cst_10 = arith.constant dense<0.000000e+00> : vector<8x128xf32>
    %11 = tpu.matmul %8, %3, %cst_10 {dimension_numbers = #tpu.dot_dimension_numbers<[1], [0], [0], [1], [0, 0, 1, 1], [], []>} : vector<8x32xf32>, vector<32x128xf32>, vector<8x128xf32> -> vector<8x128xf32>
    %12 = arith.addf %10, %11 : vector<8x128xf32>
    %13 = vector.extract_strided_slice %12 {offsets = [0, 0], sizes = [8, 96], strides = [1, 1]} : vector<8x128xf32> to vector<8x96xf32>
    %14 = arith.negf %13 : vector<8x96xf32>
    %15 = math.exp %14 : vector<8x96xf32>
    %cst_11 = arith.constant 1.000000e+00 : f32
    %16 = vector.broadcast %cst_11 : f32 to vector<8x96xf32>
    %17 = arith.addf %16, %15 : vector<8x96xf32>
    %18 = arith.divf %16, %17 : vector<8x96xf32>
    %19 = vector.extract_strided_slice %12 {offsets = [0, 96], sizes = [8, 32], strides = [1, 1]} : vector<8x128xf32> to vector<8x32xf32>
    %20 = math.tanh %19 : vector<8x32xf32>
    %21 = vector.extract_strided_slice %18 {offsets = [0, 0], sizes = [8, 32], strides = [1, 1]} : vector<8x96xf32> to vector<8x32xf32>
    %22 = vector.extract_strided_slice %18 {offsets = [0, 32], sizes = [8, 32], strides = [1, 1]} : vector<8x96xf32> to vector<8x32xf32>
    %23 = vector.extract_strided_slice %18 {offsets = [0, 64], sizes = [8, 32], strides = [1, 1]} : vector<8x96xf32> to vector<8x32xf32>
    %24 = arith.mulf %22, %9 : vector<8x32xf32>
    %25 = arith.mulf %21, %20 : vector<8x32xf32>
    %26 = arith.addf %24, %25 : vector<8x32xf32>
    %27 = math.tanh %26 : vector<8x32xf32>
    %28 = arith.mulf %23, %27 : vector<8x32xf32>
    %c0_12 = arith.constant 0 : index
    %c0_13 = arith.constant 0 : index
    %29 = vector.load %arg11[%c0_12, %c0_13] : memref<128x32xf32, #tpu.memory_space<vmem>>, vector<8x32xf32>
    tpu.vector_store %arg11[%c0_12, %c0_13], %28 {strides = array<i32>} : memref<128x32xf32, #tpu.memory_space<vmem>>, vector<8x32xf32>,
    %30 = vector.extract_strided_slice %7 {offsets = [8, 0], sizes = [8, 128], strides = [1, 1]} : vector<128x128xf32> to vector<8x128xf32>
    %cst_14 = arith.constant dense<0.000000e+00> : vector<8x128xf32>
    %31 = tpu.matmul %28, %3, %cst_14 {dimension_numbers = #tpu.dot_dimension_numbers<[1], [0], [0], [1], [0, 0, 1, 1], [], []>} : vector<8x32xf32>, vector<32x128xf32>, vector<8x128xf32> -> vector<8x128xf32>
    %32 = arith.addf %30, %31 : vector<8x128xf32>
    %33 = vector.extract_strided_slice %32 {offsets = [0, 0], sizes = [8, 96], strides = [1, 1]} : vector<8x128xf32> to vector<8x96xf32>
    %34 = arith.negf %33 : vector<8x96xf32>
    %35 = math.exp %34 : vector<8x96xf32>
    %cst_15 = arith.constant 1.000000e+00 : f32
    %36 = vector.broadcast %cst_15 : f32 to vector<8x96xf32>
    %37 = arith.addf %36, %35 : vector<8x96xf32>
    %38 = arith.divf %36, %37 : vector<8x96xf32>
    %39 = vector.extract_strided_slice %32 {offsets = [0, 96], sizes = [8, 32], strides = [1, 1]} : vector<8x128xf32> to vector<8x32xf32>
    %40 = math.tanh %39 : vector<8x32xf32>
    %41 = vector.extract_strided_slice %38 {offsets = [0, 0], sizes = [8, 32], strides = [1, 1]} : vector<8x96xf32> to vector<8x32xf32>
    %42 = vector.extract_strided_slice %38 {offsets = [0, 32], sizes = [8, 32], strides = [1, 1]} : vector<8x96xf32> to vector<8x32xf32>
    %43 = vector.extract_strided_slice %38 {offsets = [0, 64], sizes = [8, 32], strides = [1, 1]} : vector<8x96xf32> to vector<8x32xf32>
    %44 = arith.mulf %42, %26 : vector<8x32xf32>
    %45 = arith.mulf %41, %40 : vector<8x32xf32>
    %46 = arith.addf %44, %45 : vector<8x32xf32>
    %47 = math.tanh %46 : vector<8x32xf32>
    %48 = arith.mulf %43, %47 : vector<8x32xf32>
    %c8 = arith.constant 8 : index
    %c0_16 = arith.constant 0 : index
    %49 = vector.load %arg11[%c8, %c0_16] : memref<128x32xf32, #tpu.memory_space<vmem>>, vector<8x32xf32>
    tpu.vector_store %arg11[%c8, %c0_16], %48 {strides = array<i32>} : memref<128x32xf32, #tpu.memory_space<vmem>>, vector<8x32xf32>,
    %50 = vector.extract_strided_slice %7 {offsets = [16, 0], sizes = [8, 128], strides = [1, 1]} : vector<128x128xf32> to vector<8x128xf32>
    %cst_17 = arith.constant dense<0.000000e+00> : vector<8x128xf32>
    %51 = tpu.matmul %48, %3, %cst_17 {dimension_numbers = #tpu.dot_dimension_numbers<[1], [0], [0], [1], [0, 0, 1, 1], [], []>} : vector<8x32xf32>, vector<32x128xf32>, vector<8x128xf32> -> vector<8x128xf32>
    %52 = arith.addf %50, %51 : vector<8x128xf32>
    %53 = vector.extract_strided_slice %52 {offsets = [0, 0], sizes = [8, 96], strides = [1, 1]} : vector<8x128xf32> to vector<8x96xf32>
    %54 = arith.negf %53 : vector<8x96xf32>
    %55 = math.exp %54 : vector<8x96xf32>
    %cst_18 = arith.constant 1.000000e+00 : f32
    %56 = vector.broadcast %cst_18 : f32 to vector<8x96xf32>
    %57 = arith.addf %56, %55 : vector<8x96xf32>
    %58 = arith.divf %56, %57 : vector<8x96xf32>
    %59 = vector.extract_strided_slice %52 {offsets = [0, 96], sizes = [8, 32], strides = [1, 1]} : vector<8x128xf32> to vector<8x32xf32>
    %60 = math.tanh %59 : vector<8x32xf32>
    %61 = vector.extract_strided_slice %58 {offsets = [0, 0], sizes = [8, 32], strides = [1, 1]} : vector<8x96xf32> to vector<8x32xf32>
    %62 = vector.extract_strided_slice %58 {offsets = [0, 32], sizes = [8, 32], strides = [1, 1]} : vector<8x96xf32> to vector<8x32xf32>
    %63 = vector.extract_strided_slice %58 {offsets = [0, 64], sizes = [8, 32], strides = [1, 1]} : vector<8x96xf32> to vector<8x32xf32>
    %64 = arith.mulf %62, %46 : vector<8x32xf32>
    %65 = arith.mulf %61, %60 : vector<8x32xf32>
    %66 = arith.addf %64, %65 : vector<8x32xf32>
    %67 = math.tanh %66 : vector<8x32xf32>
    %68 = arith.mulf %63, %67 : vector<8x32xf32>
    %c16 = arith.constant 16 : index
    %c0_19 = arith.constant 0 : index
    %69 = vector.load %arg11[%c16, %c0_19] : memref<128x32xf32, #tpu.memory_space<vmem>>, vector<8x32xf32>
    tpu.vector_store %arg11[%c16, %c0_19], %68 {strides = array<i32>} : memref<128x32xf32, #tpu.memory_space<vmem>>, vector<8x32xf32>,
    %70 = vector.extract_strided_slice %7 {offsets = [24, 0], sizes = [8, 128], strides = [1, 1]} : vector<128x128xf32> to vector<8x128xf32>
    %cst_20 = arith.constant dense<0.000000e+00> : vector<8x128xf32>
    %71 = tpu.matmul %68, %3, %cst_20 {dimension_numbers = #tpu.dot_dimension_numbers<[1], [0], [0], [1], [0, 0, 1, 1], [], []>} : vector<8x32xf32>, vector<32x128xf32>, vector<8x128xf32> -> vector<8x128xf32>
    %72 = arith.addf %70, %71 : vector<8x128xf32>
    %73 = vector.extract_strided_slice %72 {offsets = [0, 0], sizes = [8, 96], strides = [1, 1]} : vector<8x128xf32> to vector<8x96xf32>
    %74 = arith.negf %73 : vector<8x96xf32>
    %75 = math.exp %74 : vector<8x96xf32>
    %cst_21 = arith.constant 1.000000e+00 : f32
    %76 = vector.broadcast %cst_21 : f32 to vector<8x96xf32>
    %77 = arith.addf %76, %75 : vector<8x96xf32>
    %78 = arith.divf %76, %77 : vector<8x96xf32>
    %79 = vector.extract_strided_slice %72 {offsets = [0, 96], sizes = [8, 32], strides = [1, 1]} : vector<8x128xf32> to vector<8x32xf32>
    %80 = math.tanh %79 : vector<8x32xf32>
    %81 = vector.extract_strided_slice %78 {offsets = [0, 0], sizes = [8, 32], strides = [1, 1]} : vector<8x96xf32> to vector<8x32xf32>
    %82 = vector.extract_strided_slice %78 {offsets = [0, 32], sizes = [8, 32], strides = [1, 1]} : vector<8x96xf32> to vector<8x32xf32>
    %83 = vector.extract_strided_slice %78 {offsets = [0, 64], sizes = [8, 32], strides = [1, 1]} : vector<8x96xf32> to vector<8x32xf32>
    %84 = arith.mulf %82, %66 : vector<8x32xf32>
    %85 = arith.mulf %81, %80 : vector<8x32xf32>
    %86 = arith.addf %84, %85 : vector<8x32xf32>
    %87 = math.tanh %86 : vector<8x32xf32>
    %88 = arith.mulf %83, %87 : vector<8x32xf32>
    %c24 = arith.constant 24 : index
    %c0_22 = arith.constant 0 : index
    %89 = vector.load %arg11[%c24, %c0_22] : memref<128x32xf32, #tpu.memory_space<vmem>>, vector<8x32xf32>
    tpu.vector_store %arg11[%c24, %c0_22], %88 {strides = array<i32>} : memref<128x32xf32, #tpu.memory_space<vmem>>, vector<8x32xf32>,
    %90 = vector.extract_strided_slice %7 {offsets = [32, 0], sizes = [8, 128], strides = [1, 1]} : vector<128x128xf32> to vector<8x128xf32>
    %cst_23 = arith.constant dense<0.000000e+00> : vector<8x128xf32>
    %91 = tpu.matmul %88, %3, %cst_23 {dimension_numbers = #tpu.dot_dimension_numbers<[1], [0], [0], [1], [0, 0, 1, 1], [], []>} : vector<8x32xf32>, vector<32x128xf32>, vector<8x128xf32> -> vector<8x128xf32>
    %92 = arith.addf %90, %91 : vector<8x128xf32>
    %93 = vector.extract_strided_slice %92 {offsets = [0, 0], sizes = [8, 96], strides = [1, 1]} : vector<8x128xf32> to vector<8x96xf32>
    %94 = arith.negf %93 : vector<8x96xf32>
    %95 = math.exp %94 : vector<8x96xf32>
    %cst_24 = arith.constant 1.000000e+00 : f32
    %96 = vector.broadcast %cst_24 : f32 to vector<8x96xf32>
    %97 = arith.addf %96, %95 : vector<8x96xf32>
    %98 = arith.divf %96, %97 : vector<8x96xf32>
    %99 = vector.extract_strided_slice %92 {offsets = [0, 96], sizes = [8, 32], strides = [1, 1]} : vector<8x128xf32> to vector<8x32xf32>
    %100 = math.tanh %99 : vector<8x32xf32>
    %101 = vector.extract_strided_slice %98 {offsets = [0, 0], sizes = [8, 32], strides = [1, 1]} : vector<8x96xf32> to vector<8x32xf32>
    %102 = vector.extract_strided_slice %98 {offsets = [0, 32], sizes = [8, 32], strides = [1, 1]} : vector<8x96xf32> to vector<8x32xf32>
    %103 = vector.extract_strided_slice %98 {offsets = [0, 64], sizes = [8, 32], strides = [1, 1]} : vector<8x96xf32> to vector<8x32xf32>
    %104 = arith.mulf %102, %86 : vector<8x32xf32>
    %105 = arith.mulf %101, %100 : vector<8x32xf32>
    %106 = arith.addf %104, %105 : vector<8x32xf32>
    %107 = math.tanh %106 : vector<8x32xf32>
    %108 = arith.mulf %103, %107 : vector<8x32xf32>
    %c32 = arith.constant 32 : index
    %c0_25 = arith.constant 0 : index
    %109 = vector.load %arg11[%c32, %c0_25] : memref<128x32xf32, #tpu.memory_space<vmem>>, vector<8x32xf32>
    tpu.vector_store %arg11[%c32, %c0_25], %108 {strides = array<i32>} : memref<128x32xf32, #tpu.memory_space<vmem>>, vector<8x32xf32>,
    %110 = vector.extract_strided_slice %7 {offsets = [40, 0], sizes = [8, 128], strides = [1, 1]} : vector<128x128xf32> to vector<8x128xf32>
    %cst_26 = arith.constant dense<0.000000e+00> : vector<8x128xf32>
    %111 = tpu.matmul %108, %3, %cst_26 {dimension_numbers = #tpu.dot_dimension_numbers<[1], [0], [0], [1], [0, 0, 1, 1], [], []>} : vector<8x32xf32>, vector<32x128xf32>, vector<8x128xf32> -> vector<8x128xf32>
    %112 = arith.addf %110, %111 : vector<8x128xf32>
    %113 = vector.extract_strided_slice %112 {offsets = [0, 0], sizes = [8, 96], strides = [1, 1]} : vector<8x128xf32> to vector<8x96xf32>
    %114 = arith.negf %113 : vector<8x96xf32>
    %115 = math.exp %114 : vector<8x96xf32>
    %cst_27 = arith.constant 1.000000e+00 : f32
    %116 = vector.broadcast %cst_27 : f32 to vector<8x96xf32>
    %117 = arith.addf %116, %115 : vector<8x96xf32>
    %118 = arith.divf %116, %117 : vector<8x96xf32>
    %119 = vector.extract_strided_slice %112 {offsets = [0, 96], sizes = [8, 32], strides = [1, 1]} : vector<8x128xf32> to vector<8x32xf32>
    %120 = math.tanh %119 : vector<8x32xf32>
    %121 = vector.extract_strided_slice %118 {offsets = [0, 0], sizes = [8, 32], strides = [1, 1]} : vector<8x96xf32> to vector<8x32xf32>
    %122 = vector.extract_strided_slice %118 {offsets = [0, 32], sizes = [8, 32], strides = [1, 1]} : vector<8x96xf32> to vector<8x32xf32>
    %123 = vector.extract_strided_slice %118 {offsets = [0, 64], sizes = [8, 32], strides = [1, 1]} : vector<8x96xf32> to vector<8x32xf32>
    %124 = arith.mulf %122, %106 : vector<8x32xf32>
    %125 = arith.mulf %121, %120 : vector<8x32xf32>
    %126 = arith.addf %124, %125 : vector<8x32xf32>
    %127 = math.tanh %126 : vector<8x32xf32>
    %128 = arith.mulf %123, %127 : vector<8x32xf32>
    %c40 = arith.constant 40 : index
    %c0_28 = arith.constant 0 : index
    %129 = vector.load %arg11[%c40, %c0_28] : memref<128x32xf32, #tpu.memory_space<vmem>>, vector<8x32xf32>
    tpu.vector_store %arg11[%c40, %c0_28], %128 {strides = array<i32>} : memref<128x32xf32, #tpu.memory_space<vmem>>, vector<8x32xf32>,
    %130 = vector.extract_strided_slice %7 {offsets = [48, 0], sizes = [8, 128], strides = [1, 1]} : vector<128x128xf32> to vector<8x128xf32>
    %cst_29 = arith.constant dense<0.000000e+00> : vector<8x128xf32>
    %131 = tpu.matmul %128, %3, %cst_29 {dimension_numbers = #tpu.dot_dimension_numbers<[1], [0], [0], [1], [0, 0, 1, 1], [], []>} : vector<8x32xf32>, vector<32x128xf32>, vector<8x128xf32> -> vector<8x128xf32>
    %132 = arith.addf %130, %131 : vector<8x128xf32>
    %133 = vector.extract_strided_slice %132 {offsets = [0, 0], sizes = [8, 96], strides = [1, 1]} : vector<8x128xf32> to vector<8x96xf32>
    %134 = arith.negf %133 : vector<8x96xf32>
    %135 = math.exp %134 : vector<8x96xf32>
    %cst_30 = arith.constant 1.000000e+00 : f32
    %136 = vector.broadcast %cst_30 : f32 to vector<8x96xf32>
    %137 = arith.addf %136, %135 : vector<8x96xf32>
    %138 = arith.divf %136, %137 : vector<8x96xf32>
    %139 = vector.extract_strided_slice %132 {offsets = [0, 96], sizes = [8, 32], strides = [1, 1]} : vector<8x128xf32> to vector<8x32xf32>
    %140 = math.tanh %139 : vector<8x32xf32>
    %141 = vector.extract_strided_slice %138 {offsets = [0, 0], sizes = [8, 32], strides = [1, 1]} : vector<8x96xf32> to vector<8x32xf32>
    %142 = vector.extract_strided_slice %138 {offsets = [0, 32], sizes = [8, 32], strides = [1, 1]} : vector<8x96xf32> to vector<8x32xf32>
    %143 = vector.extract_strided_slice %138 {offsets = [0, 64], sizes = [8, 32], strides = [1, 1]} : vector<8x96xf32> to vector<8x32xf32>
    %144 = arith.mulf %142, %126 : vector<8x32xf32>
    %145 = arith.mulf %141, %140 : vector<8x32xf32>
    %146 = arith.addf %144, %145 : vector<8x32xf32>
    %147 = math.tanh %146 : vector<8x32xf32>
    %148 = arith.mulf %143, %147 : vector<8x32xf32>
    %c48 = arith.constant 48 : index
    %c0_31 = arith.constant 0 : index
    %149 = vector.load %arg11[%c48, %c0_31] : memref<128x32xf32, #tpu.memory_space<vmem>>, vector<8x32xf32>
    tpu.vector_store %arg11[%c48, %c0_31], %148 {strides = array<i32>} : memref<128x32xf32, #tpu.memory_space<vmem>>, vector<8x32xf32>,
    %150 = vector.extract_strided_slice %7 {offsets = [56, 0], sizes = [8, 128], strides = [1, 1]} : vector<128x128xf32> to vector<8x128xf32>
    %cst_32 = arith.constant dense<0.000000e+00> : vector<8x128xf32>
    %151 = tpu.matmul %148, %3, %cst_32 {dimension_numbers = #tpu.dot_dimension_numbers<[1], [0], [0], [1], [0, 0, 1, 1], [], []>} : vector<8x32xf32>, vector<32x128xf32>, vector<8x128xf32> -> vector<8x128xf32>
    %152 = arith.addf %150, %151 : vector<8x128xf32>
    %153 = vector.extract_strided_slice %152 {offsets = [0, 0], sizes = [8, 96], strides = [1, 1]} : vector<8x128xf32> to vector<8x96xf32>
    %154 = arith.negf %153 : vector<8x96xf32>
    %155 = math.exp %154 : vector<8x96xf32>
    %cst_33 = arith.constant 1.000000e+00 : f32
    %156 = vector.broadcast %cst_33 : f32 to vector<8x96xf32>
    %157 = arith.addf %156, %155 : vector<8x96xf32>
    %158 = arith.divf %156, %157 : vector<8x96xf32>
    %159 = vector.extract_strided_slice %152 {offsets = [0, 96], sizes = [8, 32], strides = [1, 1]} : vector<8x128xf32> to vector<8x32xf32>
    %160 = math.tanh %159 : vector<8x32xf32>
    %161 = vector.extract_strided_slice %158 {offsets = [0, 0], sizes = [8, 32], strides = [1, 1]} : vector<8x96xf32> to vector<8x32xf32>
    %162 = vector.extract_strided_slice %158 {offsets = [0, 32], sizes = [8, 32], strides = [1, 1]} : vector<8x96xf32> to vector<8x32xf32>
    %163 = vector.extract_strided_slice %158 {offsets = [0, 64], sizes = [8, 32], strides = [1, 1]} : vector<8x96xf32> to vector<8x32xf32>
    %164 = arith.mulf %162, %146 : vector<8x32xf32>
    %165 = arith.mulf %161, %160 : vector<8x32xf32>
    %166 = arith.addf %164, %165 : vector<8x32xf32>
    %167 = math.tanh %166 : vector<8x32xf32>
    %168 = arith.mulf %163, %167 : vector<8x32xf32>
    %c56 = arith.constant 56 : index
    %c0_34 = arith.constant 0 : index
    %169 = vector.load %arg11[%c56, %c0_34] : memref<128x32xf32, #tpu.memory_space<vmem>>, vector<8x32xf32>
    tpu.vector_store %arg11[%c56, %c0_34], %168 {strides = array<i32>} : memref<128x32xf32, #tpu.memory_space<vmem>>, vector<8x32xf32>,
    %170 = vector.extract_strided_slice %7 {offsets = [64, 0], sizes = [8, 128], strides = [1, 1]} : vector<128x128xf32> to vector<8x128xf32>
    %cst_35 = arith.constant dense<0.000000e+00> : vector<8x128xf32>
    %171 = tpu.matmul %168, %3, %cst_35 {dimension_numbers = #tpu.dot_dimension_numbers<[1], [0], [0], [1], [0, 0, 1, 1], [], []>} : vector<8x32xf32>, vector<32x128xf32>, vector<8x128xf32> -> vector<8x128xf32>
    %172 = arith.addf %170, %171 : vector<8x128xf32>
    %173 = vector.extract_strided_slice %172 {offsets = [0, 0], sizes = [8, 96], strides = [1, 1]} : vector<8x128xf32> to vector<8x96xf32>
    %174 = arith.negf %173 : vector<8x96xf32>
    %175 = math.exp %174 : vector<8x96xf32>
    %cst_36 = arith.constant 1.000000e+00 : f32
    %176 = vector.broadcast %cst_36 : f32 to vector<8x96xf32>
    %177 = arith.addf %176, %175 : vector<8x96xf32>
    %178 = arith.divf %176, %177 : vector<8x96xf32>
    %179 = vector.extract_strided_slice %172 {offsets = [0, 96], sizes = [8, 32], strides = [1, 1]} : vector<8x128xf32> to vector<8x32xf32>
    %180 = math.tanh %179 : vector<8x32xf32>
    %181 = vector.extract_strided_slice %178 {offsets = [0, 0], sizes = [8, 32], strides = [1, 1]} : vector<8x96xf32> to vector<8x32xf32>
    %182 = vector.extract_strided_slice %178 {offsets = [0, 32], sizes = [8, 32], strides = [1, 1]} : vector<8x96xf32> to vector<8x32xf32>
    %183 = vector.extract_strided_slice %178 {offsets = [0, 64], sizes = [8, 32], strides = [1, 1]} : vector<8x96xf32> to vector<8x32xf32>
    %184 = arith.mulf %182, %166 : vector<8x32xf32>
    %185 = arith.mulf %181, %180 : vector<8x32xf32>
    %186 = arith.addf %184, %185 : vector<8x32xf32>
    %187 = math.tanh %186 : vector<8x32xf32>
    %188 = arith.mulf %183, %187 : vector<8x32xf32>
    %c64 = arith.constant 64 : index
    %c0_37 = arith.constant 0 : index
    %189 = vector.load %arg11[%c64, %c0_37] : memref<128x32xf32, #tpu.memory_space<vmem>>, vector<8x32xf32>
    tpu.vector_store %arg11[%c64, %c0_37], %188 {strides = array<i32>} : memref<128x32xf32, #tpu.memory_space<vmem>>, vector<8x32xf32>,
    %190 = vector.extract_strided_slice %7 {offsets = [72, 0], sizes = [8, 128], strides = [1, 1]} : vector<128x128xf32> to vector<8x128xf32>
    %cst_38 = arith.constant dense<0.000000e+00> : vector<8x128xf32>
    %191 = tpu.matmul %188, %3, %cst_38 {dimension_numbers = #tpu.dot_dimension_numbers<[1], [0], [0], [1], [0, 0, 1, 1], [], []>} : vector<8x32xf32>, vector<32x128xf32>, vector<8x128xf32> -> vector<8x128xf32>
    %192 = arith.addf %190, %191 : vector<8x128xf32>
    %193 = vector.extract_strided_slice %192 {offsets = [0, 0], sizes = [8, 96], strides = [1, 1]} : vector<8x128xf32> to vector<8x96xf32>
    %194 = arith.negf %193 : vector<8x96xf32>
    %195 = math.exp %194 : vector<8x96xf32>
    %cst_39 = arith.constant 1.000000e+00 : f32
    %196 = vector.broadcast %cst_39 : f32 to vector<8x96xf32>
    %197 = arith.addf %196, %195 : vector<8x96xf32>
    %198 = arith.divf %196, %197 : vector<8x96xf32>
    %199 = vector.extract_strided_slice %192 {offsets = [0, 96], sizes = [8, 32], strides = [1, 1]} : vector<8x128xf32> to vector<8x32xf32>
    %200 = math.tanh %199 : vector<8x32xf32>
    %201 = vector.extract_strided_slice %198 {offsets = [0, 0], sizes = [8, 32], strides = [1, 1]} : vector<8x96xf32> to vector<8x32xf32>
    %202 = vector.extract_strided_slice %198 {offsets = [0, 32], sizes = [8, 32], strides = [1, 1]} : vector<8x96xf32> to vector<8x32xf32>
    %203 = vector.extract_strided_slice %198 {offsets = [0, 64], sizes = [8, 32], strides = [1, 1]} : vector<8x96xf32> to vector<8x32xf32>
    %204 = arith.mulf %202, %186 : vector<8x32xf32>
    %205 = arith.mulf %201, %200 : vector<8x32xf32>
    %206 = arith.addf %204, %205 : vector<8x32xf32>
    %207 = math.tanh %206 : vector<8x32xf32>
    %208 = arith.mulf %203, %207 : vector<8x32xf32>
    %c72 = arith.constant 72 : index
    %c0_40 = arith.constant 0 : index
    %209 = vector.load %arg11[%c72, %c0_40] : memref<128x32xf32, #tpu.memory_space<vmem>>, vector<8x32xf32>
    tpu.vector_store %arg11[%c72, %c0_40], %208 {strides = array<i32>} : memref<128x32xf32, #tpu.memory_space<vmem>>, vector<8x32xf32>,
    %210 = vector.extract_strided_slice %7 {offsets = [80, 0], sizes = [8, 128], strides = [1, 1]} : vector<128x128xf32> to vector<8x128xf32>
    %cst_41 = arith.constant dense<0.000000e+00> : vector<8x128xf32>
    %211 = tpu.matmul %208, %3, %cst_41 {dimension_numbers = #tpu.dot_dimension_numbers<[1], [0], [0], [1], [0, 0, 1, 1], [], []>} : vector<8x32xf32>, vector<32x128xf32>, vector<8x128xf32> -> vector<8x128xf32>
    %212 = arith.addf %210, %211 : vector<8x128xf32>
    %213 = vector.extract_strided_slice %212 {offsets = [0, 0], sizes = [8, 96], strides = [1, 1]} : vector<8x128xf32> to vector<8x96xf32>
    %214 = arith.negf %213 : vector<8x96xf32>
    %215 = math.exp %214 : vector<8x96xf32>
    %cst_42 = arith.constant 1.000000e+00 : f32
    %216 = vector.broadcast %cst_42 : f32 to vector<8x96xf32>
    %217 = arith.addf %216, %215 : vector<8x96xf32>
    %218 = arith.divf %216, %217 : vector<8x96xf32>
    %219 = vector.extract_strided_slice %212 {offsets = [0, 96], sizes = [8, 32], strides = [1, 1]} : vector<8x128xf32> to vector<8x32xf32>
    %220 = math.tanh %219 : vector<8x32xf32>
    %221 = vector.extract_strided_slice %218 {offsets = [0, 0], sizes = [8, 32], strides = [1, 1]} : vector<8x96xf32> to vector<8x32xf32>
    %222 = vector.extract_strided_slice %218 {offsets = [0, 32], sizes = [8, 32], strides = [1, 1]} : vector<8x96xf32> to vector<8x32xf32>
    %223 = vector.extract_strided_slice %218 {offsets = [0, 64], sizes = [8, 32], strides = [1, 1]} : vector<8x96xf32> to vector<8x32xf32>
    %224 = arith.mulf %222, %206 : vector<8x32xf32>
    %225 = arith.mulf %221, %220 : vector<8x32xf32>
    %226 = arith.addf %224, %225 : vector<8x32xf32>
    %227 = math.tanh %226 : vector<8x32xf32>
    %228 = arith.mulf %223, %227 : vector<8x32xf32>
    %c80 = arith.constant 80 : index
    %c0_43 = arith.constant 0 : index
    %229 = vector.load %arg11[%c80, %c0_43] : memref<128x32xf32, #tpu.memory_space<vmem>>, vector<8x32xf32>
    tpu.vector_store %arg11[%c80, %c0_43], %228 {strides = array<i32>} : memref<128x32xf32, #tpu.memory_space<vmem>>, vector<8x32xf32>,
    %230 = vector.extract_strided_slice %7 {offsets = [88, 0], sizes = [8, 128], strides = [1, 1]} : vector<128x128xf32> to vector<8x128xf32>
    %cst_44 = arith.constant dense<0.000000e+00> : vector<8x128xf32>
    %231 = tpu.matmul %228, %3, %cst_44 {dimension_numbers = #tpu.dot_dimension_numbers<[1], [0], [0], [1], [0, 0, 1, 1], [], []>} : vector<8x32xf32>, vector<32x128xf32>, vector<8x128xf32> -> vector<8x128xf32>
    %232 = arith.addf %230, %231 : vector<8x128xf32>
    %233 = vector.extract_strided_slice %232 {offsets = [0, 0], sizes = [8, 96], strides = [1, 1]} : vector<8x128xf32> to vector<8x96xf32>
    %234 = arith.negf %233 : vector<8x96xf32>
    %235 = math.exp %234 : vector<8x96xf32>
    %cst_45 = arith.constant 1.000000e+00 : f32
    %236 = vector.broadcast %cst_45 : f32 to vector<8x96xf32>
    %237 = arith.addf %236, %235 : vector<8x96xf32>
    %238 = arith.divf %236, %237 : vector<8x96xf32>
    %239 = vector.extract_strided_slice %232 {offsets = [0, 96], sizes = [8, 32], strides = [1, 1]} : vector<8x128xf32> to vector<8x32xf32>
    %240 = math.tanh %239 : vector<8x32xf32>
    %241 = vector.extract_strided_slice %238 {offsets = [0, 0], sizes = [8, 32], strides = [1, 1]} : vector<8x96xf32> to vector<8x32xf32>
    %242 = vector.extract_strided_slice %238 {offsets = [0, 32], sizes = [8, 32], strides = [1, 1]} : vector<8x96xf32> to vector<8x32xf32>
    %243 = vector.extract_strided_slice %238 {offsets = [0, 64], sizes = [8, 32], strides = [1, 1]} : vector<8x96xf32> to vector<8x32xf32>
    %244 = arith.mulf %242, %226 : vector<8x32xf32>
    %245 = arith.mulf %241, %240 : vector<8x32xf32>
    %246 = arith.addf %244, %245 : vector<8x32xf32>
    %247 = math.tanh %246 : vector<8x32xf32>
    %248 = arith.mulf %243, %247 : vector<8x32xf32>
    %c88 = arith.constant 88 : index
    %c0_46 = arith.constant 0 : index
    %249 = vector.load %arg11[%c88, %c0_46] : memref<128x32xf32, #tpu.memory_space<vmem>>, vector<8x32xf32>
    tpu.vector_store %arg11[%c88, %c0_46], %248 {strides = array<i32>} : memref<128x32xf32, #tpu.memory_space<vmem>>, vector<8x32xf32>,
    %250 = vector.extract_strided_slice %7 {offsets = [96, 0], sizes = [8, 128], strides = [1, 1]} : vector<128x128xf32> to vector<8x128xf32>
    %cst_47 = arith.constant dense<0.000000e+00> : vector<8x128xf32>
    %251 = tpu.matmul %248, %3, %cst_47 {dimension_numbers = #tpu.dot_dimension_numbers<[1], [0], [0], [1], [0, 0, 1, 1], [], []>} : vector<8x32xf32>, vector<32x128xf32>, vector<8x128xf32> -> vector<8x128xf32>
    %252 = arith.addf %250, %251 : vector<8x128xf32>
    %253 = vector.extract_strided_slice %252 {offsets = [0, 0], sizes = [8, 96], strides = [1, 1]} : vector<8x128xf32> to vector<8x96xf32>
    %254 = arith.negf %253 : vector<8x96xf32>
    %255 = math.exp %254 : vector<8x96xf32>
    %cst_48 = arith.constant 1.000000e+00 : f32
    %256 = vector.broadcast %cst_48 : f32 to vector<8x96xf32>
    %257 = arith.addf %256, %255 : vector<8x96xf32>
    %258 = arith.divf %256, %257 : vector<8x96xf32>
    %259 = vector.extract_strided_slice %252 {offsets = [0, 96], sizes = [8, 32], strides = [1, 1]} : vector<8x128xf32> to vector<8x32xf32>
    %260 = math.tanh %259 : vector<8x32xf32>
    %261 = vector.extract_strided_slice %258 {offsets = [0, 0], sizes = [8, 32], strides = [1, 1]} : vector<8x96xf32> to vector<8x32xf32>
    %262 = vector.extract_strided_slice %258 {offsets = [0, 32], sizes = [8, 32], strides = [1, 1]} : vector<8x96xf32> to vector<8x32xf32>
    %263 = vector.extract_strided_slice %258 {offsets = [0, 64], sizes = [8, 32], strides = [1, 1]} : vector<8x96xf32> to vector<8x32xf32>
    %264 = arith.mulf %262, %246 : vector<8x32xf32>
    %265 = arith.mulf %261, %260 : vector<8x32xf32>
    %266 = arith.addf %264, %265 : vector<8x32xf32>
    %267 = math.tanh %266 : vector<8x32xf32>
    %268 = arith.mulf %263, %267 : vector<8x32xf32>
    %c96 = arith.constant 96 : index
    %c0_49 = arith.constant 0 : index
    %269 = vector.load %arg11[%c96, %c0_49] : memref<128x32xf32, #tpu.memory_space<vmem>>, vector<8x32xf32>
    tpu.vector_store %arg11[%c96, %c0_49], %268 {strides = array<i32>} : memref<128x32xf32, #tpu.memory_space<vmem>>, vector<8x32xf32>,
    %270 = vector.extract_strided_slice %7 {offsets = [104, 0], sizes = [8, 128], strides = [1, 1]} : vector<128x128xf32> to vector<8x128xf32>
    %cst_50 = arith.constant dense<0.000000e+00> : vector<8x128xf32>
    %271 = tpu.matmul %268, %3, %cst_50 {dimension_numbers = #tpu.dot_dimension_numbers<[1], [0], [0], [1], [0, 0, 1, 1], [], []>} : vector<8x32xf32>, vector<32x128xf32>, vector<8x128xf32> -> vector<8x128xf32>
    %272 = arith.addf %270, %271 : vector<8x128xf32>
    %273 = vector.extract_strided_slice %272 {offsets = [0, 0], sizes = [8, 96], strides = [1, 1]} : vector<8x128xf32> to vector<8x96xf32>
    %274 = arith.negf %273 : vector<8x96xf32>
    %275 = math.exp %274 : vector<8x96xf32>
    %cst_51 = arith.constant 1.000000e+00 : f32
    %276 = vector.broadcast %cst_51 : f32 to vector<8x96xf32>
    %277 = arith.addf %276, %275 : vector<8x96xf32>
    %278 = arith.divf %276, %277 : vector<8x96xf32>
    %279 = vector.extract_strided_slice %272 {offsets = [0, 96], sizes = [8, 32], strides = [1, 1]} : vector<8x128xf32> to vector<8x32xf32>
    %280 = math.tanh %279 : vector<8x32xf32>
    %281 = vector.extract_strided_slice %278 {offsets = [0, 0], sizes = [8, 32], strides = [1, 1]} : vector<8x96xf32> to vector<8x32xf32>
    %282 = vector.extract_strided_slice %278 {offsets = [0, 32], sizes = [8, 32], strides = [1, 1]} : vector<8x96xf32> to vector<8x32xf32>
    %283 = vector.extract_strided_slice %278 {offsets = [0, 64], sizes = [8, 32], strides = [1, 1]} : vector<8x96xf32> to vector<8x32xf32>
    %284 = arith.mulf %282, %266 : vector<8x32xf32>
    %285 = arith.mulf %281, %280 : vector<8x32xf32>
    %286 = arith.addf %284, %285 : vector<8x32xf32>
    %287 = math.tanh %286 : vector<8x32xf32>
    %288 = arith.mulf %283, %287 : vector<8x32xf32>
    %c104 = arith.constant 104 : index
    %c0_52 = arith.constant 0 : index
    %289 = vector.load %arg11[%c104, %c0_52] : memref<128x32xf32, #tpu.memory_space<vmem>>, vector<8x32xf32>
    tpu.vector_store %arg11[%c104, %c0_52], %288 {strides = array<i32>} : memref<128x32xf32, #tpu.memory_space<vmem>>, vector<8x32xf32>,
    %290 = vector.extract_strided_slice %7 {offsets = [112, 0], sizes = [8, 128], strides = [1, 1]} : vector<128x128xf32> to vector<8x128xf32>
    %cst_53 = arith.constant dense<0.000000e+00> : vector<8x128xf32>
    %291 = tpu.matmul %288, %3, %cst_53 {dimension_numbers = #tpu.dot_dimension_numbers<[1], [0], [0], [1], [0, 0, 1, 1], [], []>} : vector<8x32xf32>, vector<32x128xf32>, vector<8x128xf32> -> vector<8x128xf32>
    %292 = arith.addf %290, %291 : vector<8x128xf32>
    %293 = vector.extract_strided_slice %292 {offsets = [0, 0], sizes = [8, 96], strides = [1, 1]} : vector<8x128xf32> to vector<8x96xf32>
    %294 = arith.negf %293 : vector<8x96xf32>
    %295 = math.exp %294 : vector<8x96xf32>
    %cst_54 = arith.constant 1.000000e+00 : f32
    %296 = vector.broadcast %cst_54 : f32 to vector<8x96xf32>
    %297 = arith.addf %296, %295 : vector<8x96xf32>
    %298 = arith.divf %296, %297 : vector<8x96xf32>
    %299 = vector.extract_strided_slice %292 {offsets = [0, 96], sizes = [8, 32], strides = [1, 1]} : vector<8x128xf32> to vector<8x32xf32>
    %300 = math.tanh %299 : vector<8x32xf32>
    %301 = vector.extract_strided_slice %298 {offsets = [0, 0], sizes = [8, 32], strides = [1, 1]} : vector<8x96xf32> to vector<8x32xf32>
    %302 = vector.extract_strided_slice %298 {offsets = [0, 32], sizes = [8, 32], strides = [1, 1]} : vector<8x96xf32> to vector<8x32xf32>
    %303 = vector.extract_strided_slice %298 {offsets = [0, 64], sizes = [8, 32], strides = [1, 1]} : vector<8x96xf32> to vector<8x32xf32>
    %304 = arith.mulf %302, %286 : vector<8x32xf32>
    %305 = arith.mulf %301, %300 : vector<8x32xf32>
    %306 = arith.addf %304, %305 : vector<8x32xf32>
    %307 = math.tanh %306 : vector<8x32xf32>
    %308 = arith.mulf %303, %307 : vector<8x32xf32>
    %c112 = arith.constant 112 : index
    %c0_55 = arith.constant 0 : index
    %309 = vector.load %arg11[%c112, %c0_55] : memref<128x32xf32, #tpu.memory_space<vmem>>, vector<8x32xf32>
    tpu.vector_store %arg11[%c112, %c0_55], %308 {strides = array<i32>} : memref<128x32xf32, #tpu.memory_space<vmem>>, vector<8x32xf32>,
    %310 = vector.extract_strided_slice %7 {offsets = [120, 0], sizes = [8, 128], strides = [1, 1]} : vector<128x128xf32> to vector<8x128xf32>
    %cst_56 = arith.constant dense<0.000000e+00> : vector<8x128xf32>
    %311 = tpu.matmul %308, %3, %cst_56 {dimension_numbers = #tpu.dot_dimension_numbers<[1], [0], [0], [1], [0, 0, 1, 1], [], []>} : vector<8x32xf32>, vector<32x128xf32>, vector<8x128xf32> -> vector<8x128xf32>
    %312 = arith.addf %310, %311 : vector<8x128xf32>
    %313 = vector.extract_strided_slice %312 {offsets = [0, 0], sizes = [8, 96], strides = [1, 1]} : vector<8x128xf32> to vector<8x96xf32>
    %314 = arith.negf %313 : vector<8x96xf32>
    %315 = math.exp %314 : vector<8x96xf32>
    %cst_57 = arith.constant 1.000000e+00 : f32
    %316 = vector.broadcast %cst_57 : f32 to vector<8x96xf32>
    %317 = arith.addf %316, %315 : vector<8x96xf32>
    %318 = arith.divf %316, %317 : vector<8x96xf32>
    %319 = vector.extract_strided_slice %312 {offsets = [0, 96], sizes = [8, 32], strides = [1, 1]} : vector<8x128xf32> to vector<8x32xf32>
    %320 = math.tanh %319 : vector<8x32xf32>
    %321 = vector.extract_strided_slice %318 {offsets = [0, 0], sizes = [8, 32], strides = [1, 1]} : vector<8x96xf32> to vector<8x32xf32>
    %322 = vector.extract_strided_slice %318 {offsets = [0, 32], sizes = [8, 32], strides = [1, 1]} : vector<8x96xf32> to vector<8x32xf32>
    %323 = vector.extract_strided_slice %318 {offsets = [0, 64], sizes = [8, 32], strides = [1, 1]} : vector<8x96xf32> to vector<8x32xf32>
    %324 = arith.mulf %322, %306 : vector<8x32xf32>
    %325 = arith.mulf %321, %320 : vector<8x32xf32>
    %326 = arith.addf %324, %325 : vector<8x32xf32>
    %327 = math.tanh %326 : vector<8x32xf32>
    %328 = arith.mulf %323, %327 : vector<8x32xf32>
    %c120 = arith.constant 120 : index
    %c0_58 = arith.constant 0 : index
    %329 = vector.load %arg11[%c120, %c0_58] : memref<128x32xf32, #tpu.memory_space<vmem>>, vector<8x32xf32>
    tpu.vector_store %arg11[%c120, %c0_58], %328 {strides = array<i32>} : memref<128x32xf32, #tpu.memory_space<vmem>>, vector<8x32xf32>,
    %c0_59 = arith.constant 0 : index
    %c0_60 = arith.constant 0 : index
    %330 = vector.load %arg11[%c0_59, %c0_60] : memref<128x32xf32, #tpu.memory_space<vmem>>, vector<128x32xf32>
    %c0_61 = arith.constant 0 : index
    %c0_62 = arith.constant 0 : index
    %331 = vector.load %arg5[%c0_61, %c0_62] : memref<32x128xf32, #tpu.memory_space<vmem>>, vector<32x128xf32>
    %c0_63 = arith.constant 0 : index
    %c0_64 = arith.constant 0 : index
    %332 = vector.load %arg6[%c0_63, %c0_64] : memref<32x128xf32, #tpu.memory_space<vmem>>, vector<32x128xf32>
    %c0_65 = arith.constant 0 : index
    %c0_66 = arith.constant 0 : index
    %333 = vector.load %arg7[%c0_65, %c0_66] : memref<1x128xf32, #tpu.memory_space<vmem>>, vector<1x128xf32>
    %cst_67 = arith.constant dense<0.000000e+00> : vector<128x128xf32>
    %334 = tpu.matmul %330, %331, %cst_67 {dimension_numbers = #tpu.dot_dimension_numbers<[1], [0], [0], [1], [0, 0, 1, 1], [], []>} : vector<128x32xf32>, vector<32x128xf32>, vector<128x128xf32> -> vector<128x128xf32>
    %335 = vector.broadcast %333 : vector<1x128xf32> to vector<128x128xf32>
    %336 = arith.addf %334, %335 : vector<128x128xf32>
    %cst_68 = arith.constant 0.000000e+00 : f32
    %337 = vector.broadcast %cst_68 : f32 to vector<8x32xf32>
    %cst_69 = arith.constant 0.000000e+00 : f32
    %338 = vector.broadcast %cst_69 : f32 to vector<8x32xf32>
    %339 = vector.extract_strided_slice %336 {offsets = [0, 0], sizes = [8, 128], strides = [1, 1]} : vector<128x128xf32> to vector<8x128xf32>
    %cst_70 = arith.constant dense<0.000000e+00> : vector<8x128xf32>
    %340 = tpu.matmul %337, %332, %cst_70 {dimension_numbers = #tpu.dot_dimension_numbers<[1], [0], [0], [1], [0, 0, 1, 1], [], []>} : vector<8x32xf32>, vector<32x128xf32>, vector<8x128xf32> -> vector<8x128xf32>
    %341 = arith.addf %339, %340 : vector<8x128xf32>
    %342 = vector.extract_strided_slice %341 {offsets = [0, 0], sizes = [8, 96], strides = [1, 1]} : vector<8x128xf32> to vector<8x96xf32>
    %343 = arith.negf %342 : vector<8x96xf32>
    %344 = math.exp %343 : vector<8x96xf32>
    %cst_71 = arith.constant 1.000000e+00 : f32
    %345 = vector.broadcast %cst_71 : f32 to vector<8x96xf32>
    %346 = arith.addf %345, %344 : vector<8x96xf32>
    %347 = arith.divf %345, %346 : vector<8x96xf32>
    %348 = vector.extract_strided_slice %341 {offsets = [0, 96], sizes = [8, 32], strides = [1, 1]} : vector<8x128xf32> to vector<8x32xf32>
    %349 = math.tanh %348 : vector<8x32xf32>
    %350 = vector.extract_strided_slice %347 {offsets = [0, 0], sizes = [8, 32], strides = [1, 1]} : vector<8x96xf32> to vector<8x32xf32>
    %351 = vector.extract_strided_slice %347 {offsets = [0, 32], sizes = [8, 32], strides = [1, 1]} : vector<8x96xf32> to vector<8x32xf32>
    %352 = vector.extract_strided_slice %347 {offsets = [0, 64], sizes = [8, 32], strides = [1, 1]} : vector<8x96xf32> to vector<8x32xf32>
    %353 = arith.mulf %351, %338 : vector<8x32xf32>
    %354 = arith.mulf %350, %349 : vector<8x32xf32>
    %355 = arith.addf %353, %354 : vector<8x32xf32>
    %356 = math.tanh %355 : vector<8x32xf32>
    %357 = arith.mulf %352, %356 : vector<8x32xf32>
    %c0_72 = arith.constant 0 : index
    %c0_73 = arith.constant 0 : index
    %358 = vector.load %arg12[%c0_72, %c0_73] : memref<128x32xf32, #tpu.memory_space<vmem>>, vector<8x32xf32>
    tpu.vector_store %arg12[%c0_72, %c0_73], %357 {strides = array<i32>} : memref<128x32xf32, #tpu.memory_space<vmem>>, vector<8x32xf32>,
    %359 = vector.extract_strided_slice %336 {offsets = [8, 0], sizes = [8, 128], strides = [1, 1]} : vector<128x128xf32> to vector<8x128xf32>
    %cst_74 = arith.constant dense<0.000000e+00> : vector<8x128xf32>
    %360 = tpu.matmul %357, %332, %cst_74 {dimension_numbers = #tpu.dot_dimension_numbers<[1], [0], [0], [1], [0, 0, 1, 1], [], []>} : vector<8x32xf32>, vector<32x128xf32>, vector<8x128xf32> -> vector<8x128xf32>
    %361 = arith.addf %359, %360 : vector<8x128xf32>
    %362 = vector.extract_strided_slice %361 {offsets = [0, 0], sizes = [8, 96], strides = [1, 1]} : vector<8x128xf32> to vector<8x96xf32>
    %363 = arith.negf %362 : vector<8x96xf32>
    %364 = math.exp %363 : vector<8x96xf32>
    %cst_75 = arith.constant 1.000000e+00 : f32
    %365 = vector.broadcast %cst_75 : f32 to vector<8x96xf32>
    %366 = arith.addf %365, %364 : vector<8x96xf32>
    %367 = arith.divf %365, %366 : vector<8x96xf32>
    %368 = vector.extract_strided_slice %361 {offsets = [0, 96], sizes = [8, 32], strides = [1, 1]} : vector<8x128xf32> to vector<8x32xf32>
    %369 = math.tanh %368 : vector<8x32xf32>
    %370 = vector.extract_strided_slice %367 {offsets = [0, 0], sizes = [8, 32], strides = [1, 1]} : vector<8x96xf32> to vector<8x32xf32>
    %371 = vector.extract_strided_slice %367 {offsets = [0, 32], sizes = [8, 32], strides = [1, 1]} : vector<8x96xf32> to vector<8x32xf32>
    %372 = vector.extract_strided_slice %367 {offsets = [0, 64], sizes = [8, 32], strides = [1, 1]} : vector<8x96xf32> to vector<8x32xf32>
    %373 = arith.mulf %371, %355 : vector<8x32xf32>
    %374 = arith.mulf %370, %369 : vector<8x32xf32>
    %375 = arith.addf %373, %374 : vector<8x32xf32>
    %376 = math.tanh %375 : vector<8x32xf32>
    %377 = arith.mulf %372, %376 : vector<8x32xf32>
    %c8_76 = arith.constant 8 : index
    %c0_77 = arith.constant 0 : index
    %378 = vector.load %arg12[%c8_76, %c0_77] : memref<128x32xf32, #tpu.memory_space<vmem>>, vector<8x32xf32>
    tpu.vector_store %arg12[%c8_76, %c0_77], %377 {strides = array<i32>} : memref<128x32xf32, #tpu.memory_space<vmem>>, vector<8x32xf32>,
    %379 = vector.extract_strided_slice %336 {offsets = [16, 0], sizes = [8, 128], strides = [1, 1]} : vector<128x128xf32> to vector<8x128xf32>
    %cst_78 = arith.constant dense<0.000000e+00> : vector<8x128xf32>
    %380 = tpu.matmul %377, %332, %cst_78 {dimension_numbers = #tpu.dot_dimension_numbers<[1], [0], [0], [1], [0, 0, 1, 1], [], []>} : vector<8x32xf32>, vector<32x128xf32>, vector<8x128xf32> -> vector<8x128xf32>
    %381 = arith.addf %379, %380 : vector<8x128xf32>
    %382 = vector.extract_strided_slice %381 {offsets = [0, 0], sizes = [8, 96], strides = [1, 1]} : vector<8x128xf32> to vector<8x96xf32>
    %383 = arith.negf %382 : vector<8x96xf32>
    %384 = math.exp %383 : vector<8x96xf32>
    %cst_79 = arith.constant 1.000000e+00 : f32
    %385 = vector.broadcast %cst_79 : f32 to vector<8x96xf32>
    %386 = arith.addf %385, %384 : vector<8x96xf32>
    %387 = arith.divf %385, %386 : vector<8x96xf32>
    %388 = vector.extract_strided_slice %381 {offsets = [0, 96], sizes = [8, 32], strides = [1, 1]} : vector<8x128xf32> to vector<8x32xf32>
    %389 = math.tanh %388 : vector<8x32xf32>
    %390 = vector.extract_strided_slice %387 {offsets = [0, 0], sizes = [8, 32], strides = [1, 1]} : vector<8x96xf32> to vector<8x32xf32>
    %391 = vector.extract_strided_slice %387 {offsets = [0, 32], sizes = [8, 32], strides = [1, 1]} : vector<8x96xf32> to vector<8x32xf32>
    %392 = vector.extract_strided_slice %387 {offsets = [0, 64], sizes = [8, 32], strides = [1, 1]} : vector<8x96xf32> to vector<8x32xf32>
    %393 = arith.mulf %391, %375 : vector<8x32xf32>
    %394 = arith.mulf %390, %389 : vector<8x32xf32>
    %395 = arith.addf %393, %394 : vector<8x32xf32>
    %396 = math.tanh %395 : vector<8x32xf32>
    %397 = arith.mulf %392, %396 : vector<8x32xf32>
    %c16_80 = arith.constant 16 : index
    %c0_81 = arith.constant 0 : index
    %398 = vector.load %arg12[%c16_80, %c0_81] : memref<128x32xf32, #tpu.memory_space<vmem>>, vector<8x32xf32>
    tpu.vector_store %arg12[%c16_80, %c0_81], %397 {strides = array<i32>} : memref<128x32xf32, #tpu.memory_space<vmem>>, vector<8x32xf32>,
    %399 = vector.extract_strided_slice %336 {offsets = [24, 0], sizes = [8, 128], strides = [1, 1]} : vector<128x128xf32> to vector<8x128xf32>
    %cst_82 = arith.constant dense<0.000000e+00> : vector<8x128xf32>
    %400 = tpu.matmul %397, %332, %cst_82 {dimension_numbers = #tpu.dot_dimension_numbers<[1], [0], [0], [1], [0, 0, 1, 1], [], []>} : vector<8x32xf32>, vector<32x128xf32>, vector<8x128xf32> -> vector<8x128xf32>
    %401 = arith.addf %399, %400 : vector<8x128xf32>
    %402 = vector.extract_strided_slice %401 {offsets = [0, 0], sizes = [8, 96], strides = [1, 1]} : vector<8x128xf32> to vector<8x96xf32>
    %403 = arith.negf %402 : vector<8x96xf32>
    %404 = math.exp %403 : vector<8x96xf32>
    %cst_83 = arith.constant 1.000000e+00 : f32
    %405 = vector.broadcast %cst_83 : f32 to vector<8x96xf32>
    %406 = arith.addf %405, %404 : vector<8x96xf32>
    %407 = arith.divf %405, %406 : vector<8x96xf32>
    %408 = vector.extract_strided_slice %401 {offsets = [0, 96], sizes = [8, 32], strides = [1, 1]} : vector<8x128xf32> to vector<8x32xf32>
    %409 = math.tanh %408 : vector<8x32xf32>
    %410 = vector.extract_strided_slice %407 {offsets = [0, 0], sizes = [8, 32], strides = [1, 1]} : vector<8x96xf32> to vector<8x32xf32>
    %411 = vector.extract_strided_slice %407 {offsets = [0, 32], sizes = [8, 32], strides = [1, 1]} : vector<8x96xf32> to vector<8x32xf32>
    %412 = vector.extract_strided_slice %407 {offsets = [0, 64], sizes = [8, 32], strides = [1, 1]} : vector<8x96xf32> to vector<8x32xf32>
    %413 = arith.mulf %411, %395 : vector<8x32xf32>
    %414 = arith.mulf %410, %409 : vector<8x32xf32>
    %415 = arith.addf %413, %414 : vector<8x32xf32>
    %416 = math.tanh %415 : vector<8x32xf32>
    %417 = arith.mulf %412, %416 : vector<8x32xf32>
    %c24_84 = arith.constant 24 : index
    %c0_85 = arith.constant 0 : index
    %418 = vector.load %arg12[%c24_84, %c0_85] : memref<128x32xf32, #tpu.memory_space<vmem>>, vector<8x32xf32>
    tpu.vector_store %arg12[%c24_84, %c0_85], %417 {strides = array<i32>} : memref<128x32xf32, #tpu.memory_space<vmem>>, vector<8x32xf32>,
    %419 = vector.extract_strided_slice %336 {offsets = [32, 0], sizes = [8, 128], strides = [1, 1]} : vector<128x128xf32> to vector<8x128xf32>
    %cst_86 = arith.constant dense<0.000000e+00> : vector<8x128xf32>
    %420 = tpu.matmul %417, %332, %cst_86 {dimension_numbers = #tpu.dot_dimension_numbers<[1], [0], [0], [1], [0, 0, 1, 1], [], []>} : vector<8x32xf32>, vector<32x128xf32>, vector<8x128xf32> -> vector<8x128xf32>
    %421 = arith.addf %419, %420 : vector<8x128xf32>
    %422 = vector.extract_strided_slice %421 {offsets = [0, 0], sizes = [8, 96], strides = [1, 1]} : vector<8x128xf32> to vector<8x96xf32>
    %423 = arith.negf %422 : vector<8x96xf32>
    %424 = math.exp %423 : vector<8x96xf32>
    %cst_87 = arith.constant 1.000000e+00 : f32
    %425 = vector.broadcast %cst_87 : f32 to vector<8x96xf32>
    %426 = arith.addf %425, %424 : vector<8x96xf32>
    %427 = arith.divf %425, %426 : vector<8x96xf32>
    %428 = vector.extract_strided_slice %421 {offsets = [0, 96], sizes = [8, 32], strides = [1, 1]} : vector<8x128xf32> to vector<8x32xf32>
    %429 = math.tanh %428 : vector<8x32xf32>
    %430 = vector.extract_strided_slice %427 {offsets = [0, 0], sizes = [8, 32], strides = [1, 1]} : vector<8x96xf32> to vector<8x32xf32>
    %431 = vector.extract_strided_slice %427 {offsets = [0, 32], sizes = [8, 32], strides = [1, 1]} : vector<8x96xf32> to vector<8x32xf32>
    %432 = vector.extract_strided_slice %427 {offsets = [0, 64], sizes = [8, 32], strides = [1, 1]} : vector<8x96xf32> to vector<8x32xf32>
    %433 = arith.mulf %431, %415 : vector<8x32xf32>
    %434 = arith.mulf %430, %429 : vector<8x32xf32>
    %435 = arith.addf %433, %434 : vector<8x32xf32>
    %436 = math.tanh %435 : vector<8x32xf32>
    %437 = arith.mulf %432, %436 : vector<8x32xf32>
    %c32_88 = arith.constant 32 : index
    %c0_89 = arith.constant 0 : index
    %438 = vector.load %arg12[%c32_88, %c0_89] : memref<128x32xf32, #tpu.memory_space<vmem>>, vector<8x32xf32>
    tpu.vector_store %arg12[%c32_88, %c0_89], %437 {strides = array<i32>} : memref<128x32xf32, #tpu.memory_space<vmem>>, vector<8x32xf32>,
    %439 = vector.extract_strided_slice %336 {offsets = [40, 0], sizes = [8, 128], strides = [1, 1]} : vector<128x128xf32> to vector<8x128xf32>
    %cst_90 = arith.constant dense<0.000000e+00> : vector<8x128xf32>
    %440 = tpu.matmul %437, %332, %cst_90 {dimension_numbers = #tpu.dot_dimension_numbers<[1], [0], [0], [1], [0, 0, 1, 1], [], []>} : vector<8x32xf32>, vector<32x128xf32>, vector<8x128xf32> -> vector<8x128xf32>
    %441 = arith.addf %439, %440 : vector<8x128xf32>
    %442 = vector.extract_strided_slice %441 {offsets = [0, 0], sizes = [8, 96], strides = [1, 1]} : vector<8x128xf32> to vector<8x96xf32>
    %443 = arith.negf %442 : vector<8x96xf32>
    %444 = math.exp %443 : vector<8x96xf32>
    %cst_91 = arith.constant 1.000000e+00 : f32
    %445 = vector.broadcast %cst_91 : f32 to vector<8x96xf32>
    %446 = arith.addf %445, %444 : vector<8x96xf32>
    %447 = arith.divf %445, %446 : vector<8x96xf32>
    %448 = vector.extract_strided_slice %441 {offsets = [0, 96], sizes = [8, 32], strides = [1, 1]} : vector<8x128xf32> to vector<8x32xf32>
    %449 = math.tanh %448 : vector<8x32xf32>
    %450 = vector.extract_strided_slice %447 {offsets = [0, 0], sizes = [8, 32], strides = [1, 1]} : vector<8x96xf32> to vector<8x32xf32>
    %451 = vector.extract_strided_slice %447 {offsets = [0, 32], sizes = [8, 32], strides = [1, 1]} : vector<8x96xf32> to vector<8x32xf32>
    %452 = vector.extract_strided_slice %447 {offsets = [0, 64], sizes = [8, 32], strides = [1, 1]} : vector<8x96xf32> to vector<8x32xf32>
    %453 = arith.mulf %451, %435 : vector<8x32xf32>
    %454 = arith.mulf %450, %449 : vector<8x32xf32>
    %455 = arith.addf %453, %454 : vector<8x32xf32>
    %456 = math.tanh %455 : vector<8x32xf32>
    %457 = arith.mulf %452, %456 : vector<8x32xf32>
    %c40_92 = arith.constant 40 : index
    %c0_93 = arith.constant 0 : index
    %458 = vector.load %arg12[%c40_92, %c0_93] : memref<128x32xf32, #tpu.memory_space<vmem>>, vector<8x32xf32>
    tpu.vector_store %arg12[%c40_92, %c0_93], %457 {strides = array<i32>} : memref<128x32xf32, #tpu.memory_space<vmem>>, vector<8x32xf32>,
    %459 = vector.extract_strided_slice %336 {offsets = [48, 0], sizes = [8, 128], strides = [1, 1]} : vector<128x128xf32> to vector<8x128xf32>
    %cst_94 = arith.constant dense<0.000000e+00> : vector<8x128xf32>
    %460 = tpu.matmul %457, %332, %cst_94 {dimension_numbers = #tpu.dot_dimension_numbers<[1], [0], [0], [1], [0, 0, 1, 1], [], []>} : vector<8x32xf32>, vector<32x128xf32>, vector<8x128xf32> -> vector<8x128xf32>
    %461 = arith.addf %459, %460 : vector<8x128xf32>
    %462 = vector.extract_strided_slice %461 {offsets = [0, 0], sizes = [8, 96], strides = [1, 1]} : vector<8x128xf32> to vector<8x96xf32>
    %463 = arith.negf %462 : vector<8x96xf32>
    %464 = math.exp %463 : vector<8x96xf32>
    %cst_95 = arith.constant 1.000000e+00 : f32
    %465 = vector.broadcast %cst_95 : f32 to vector<8x96xf32>
    %466 = arith.addf %465, %464 : vector<8x96xf32>
    %467 = arith.divf %465, %466 : vector<8x96xf32>
    %468 = vector.extract_strided_slice %461 {offsets = [0, 96], sizes = [8, 32], strides = [1, 1]} : vector<8x128xf32> to vector<8x32xf32>
    %469 = math.tanh %468 : vector<8x32xf32>
    %470 = vector.extract_strided_slice %467 {offsets = [0, 0], sizes = [8, 32], strides = [1, 1]} : vector<8x96xf32> to vector<8x32xf32>
    %471 = vector.extract_strided_slice %467 {offsets = [0, 32], sizes = [8, 32], strides = [1, 1]} : vector<8x96xf32> to vector<8x32xf32>
    %472 = vector.extract_strided_slice %467 {offsets = [0, 64], sizes = [8, 32], strides = [1, 1]} : vector<8x96xf32> to vector<8x32xf32>
    %473 = arith.mulf %471, %455 : vector<8x32xf32>
    %474 = arith.mulf %470, %469 : vector<8x32xf32>
    %475 = arith.addf %473, %474 : vector<8x32xf32>
    %476 = math.tanh %475 : vector<8x32xf32>
    %477 = arith.mulf %472, %476 : vector<8x32xf32>
    %c48_96 = arith.constant 48 : index
    %c0_97 = arith.constant 0 : index
    %478 = vector.load %arg12[%c48_96, %c0_97] : memref<128x32xf32, #tpu.memory_space<vmem>>, vector<8x32xf32>
    tpu.vector_store %arg12[%c48_96, %c0_97], %477 {strides = array<i32>} : memref<128x32xf32, #tpu.memory_space<vmem>>, vector<8x32xf32>,
    %479 = vector.extract_strided_slice %336 {offsets = [56, 0], sizes = [8, 128], strides = [1, 1]} : vector<128x128xf32> to vector<8x128xf32>
    %cst_98 = arith.constant dense<0.000000e+00> : vector<8x128xf32>
    %480 = tpu.matmul %477, %332, %cst_98 {dimension_numbers = #tpu.dot_dimension_numbers<[1], [0], [0], [1], [0, 0, 1, 1], [], []>} : vector<8x32xf32>, vector<32x128xf32>, vector<8x128xf32> -> vector<8x128xf32>
    %481 = arith.addf %479, %480 : vector<8x128xf32>
    %482 = vector.extract_strided_slice %481 {offsets = [0, 0], sizes = [8, 96], strides = [1, 1]} : vector<8x128xf32> to vector<8x96xf32>
    %483 = arith.negf %482 : vector<8x96xf32>
    %484 = math.exp %483 : vector<8x96xf32>
    %cst_99 = arith.constant 1.000000e+00 : f32
    %485 = vector.broadcast %cst_99 : f32 to vector<8x96xf32>
    %486 = arith.addf %485, %484 : vector<8x96xf32>
    %487 = arith.divf %485, %486 : vector<8x96xf32>
    %488 = vector.extract_strided_slice %481 {offsets = [0, 96], sizes = [8, 32], strides = [1, 1]} : vector<8x128xf32> to vector<8x32xf32>
    %489 = math.tanh %488 : vector<8x32xf32>
    %490 = vector.extract_strided_slice %487 {offsets = [0, 0], sizes = [8, 32], strides = [1, 1]} : vector<8x96xf32> to vector<8x32xf32>
    %491 = vector.extract_strided_slice %487 {offsets = [0, 32], sizes = [8, 32], strides = [1, 1]} : vector<8x96xf32> to vector<8x32xf32>
    %492 = vector.extract_strided_slice %487 {offsets = [0, 64], sizes = [8, 32], strides = [1, 1]} : vector<8x96xf32> to vector<8x32xf32>
    %493 = arith.mulf %491, %475 : vector<8x32xf32>
    %494 = arith.mulf %490, %489 : vector<8x32xf32>
    %495 = arith.addf %493, %494 : vector<8x32xf32>
    %496 = math.tanh %495 : vector<8x32xf32>
    %497 = arith.mulf %492, %496 : vector<8x32xf32>
    %c56_100 = arith.constant 56 : index
    %c0_101 = arith.constant 0 : index
    %498 = vector.load %arg12[%c56_100, %c0_101] : memref<128x32xf32, #tpu.memory_space<vmem>>, vector<8x32xf32>
    tpu.vector_store %arg12[%c56_100, %c0_101], %497 {strides = array<i32>} : memref<128x32xf32, #tpu.memory_space<vmem>>, vector<8x32xf32>,
    %499 = vector.extract_strided_slice %336 {offsets = [64, 0], sizes = [8, 128], strides = [1, 1]} : vector<128x128xf32> to vector<8x128xf32>
    %cst_102 = arith.constant dense<0.000000e+00> : vector<8x128xf32>
    %500 = tpu.matmul %497, %332, %cst_102 {dimension_numbers = #tpu.dot_dimension_numbers<[1], [0], [0], [1], [0, 0, 1, 1], [], []>} : vector<8x32xf32>, vector<32x128xf32>, vector<8x128xf32> -> vector<8x128xf32>
    %501 = arith.addf %499, %500 : vector<8x128xf32>
    %502 = vector.extract_strided_slice %501 {offsets = [0, 0], sizes = [8, 96], strides = [1, 1]} : vector<8x128xf32> to vector<8x96xf32>
    %503 = arith.negf %502 : vector<8x96xf32>
    %504 = math.exp %503 : vector<8x96xf32>
    %cst_103 = arith.constant 1.000000e+00 : f32
    %505 = vector.broadcast %cst_103 : f32 to vector<8x96xf32>
    %506 = arith.addf %505, %504 : vector<8x96xf32>
    %507 = arith.divf %505, %506 : vector<8x96xf32>
    %508 = vector.extract_strided_slice %501 {offsets = [0, 96], sizes = [8, 32], strides = [1, 1]} : vector<8x128xf32> to vector<8x32xf32>
    %509 = math.tanh %508 : vector<8x32xf32>
    %510 = vector.extract_strided_slice %507 {offsets = [0, 0], sizes = [8, 32], strides = [1, 1]} : vector<8x96xf32> to vector<8x32xf32>
    %511 = vector.extract_strided_slice %507 {offsets = [0, 32], sizes = [8, 32], strides = [1, 1]} : vector<8x96xf32> to vector<8x32xf32>
    %512 = vector.extract_strided_slice %507 {offsets = [0, 64], sizes = [8, 32], strides = [1, 1]} : vector<8x96xf32> to vector<8x32xf32>
    %513 = arith.mulf %511, %495 : vector<8x32xf32>
    %514 = arith.mulf %510, %509 : vector<8x32xf32>
    %515 = arith.addf %513, %514 : vector<8x32xf32>
    %516 = math.tanh %515 : vector<8x32xf32>
    %517 = arith.mulf %512, %516 : vector<8x32xf32>
    %c64_104 = arith.constant 64 : index
    %c0_105 = arith.constant 0 : index
    %518 = vector.load %arg12[%c64_104, %c0_105] : memref<128x32xf32, #tpu.memory_space<vmem>>, vector<8x32xf32>
    tpu.vector_store %arg12[%c64_104, %c0_105], %517 {strides = array<i32>} : memref<128x32xf32, #tpu.memory_space<vmem>>, vector<8x32xf32>,
    %519 = vector.extract_strided_slice %336 {offsets = [72, 0], sizes = [8, 128], strides = [1, 1]} : vector<128x128xf32> to vector<8x128xf32>
    %cst_106 = arith.constant dense<0.000000e+00> : vector<8x128xf32>
    %520 = tpu.matmul %517, %332, %cst_106 {dimension_numbers = #tpu.dot_dimension_numbers<[1], [0], [0], [1], [0, 0, 1, 1], [], []>} : vector<8x32xf32>, vector<32x128xf32>, vector<8x128xf32> -> vector<8x128xf32>
    %521 = arith.addf %519, %520 : vector<8x128xf32>
    %522 = vector.extract_strided_slice %521 {offsets = [0, 0], sizes = [8, 96], strides = [1, 1]} : vector<8x128xf32> to vector<8x96xf32>
    %523 = arith.negf %522 : vector<8x96xf32>
    %524 = math.exp %523 : vector<8x96xf32>
    %cst_107 = arith.constant 1.000000e+00 : f32
    %525 = vector.broadcast %cst_107 : f32 to vector<8x96xf32>
    %526 = arith.addf %525, %524 : vector<8x96xf32>
    %527 = arith.divf %525, %526 : vector<8x96xf32>
    %528 = vector.extract_strided_slice %521 {offsets = [0, 96], sizes = [8, 32], strides = [1, 1]} : vector<8x128xf32> to vector<8x32xf32>
    %529 = math.tanh %528 : vector<8x32xf32>
    %530 = vector.extract_strided_slice %527 {offsets = [0, 0], sizes = [8, 32], strides = [1, 1]} : vector<8x96xf32> to vector<8x32xf32>
    %531 = vector.extract_strided_slice %527 {offsets = [0, 32], sizes = [8, 32], strides = [1, 1]} : vector<8x96xf32> to vector<8x32xf32>
    %532 = vector.extract_strided_slice %527 {offsets = [0, 64], sizes = [8, 32], strides = [1, 1]} : vector<8x96xf32> to vector<8x32xf32>
    %533 = arith.mulf %531, %515 : vector<8x32xf32>
    %534 = arith.mulf %530, %529 : vector<8x32xf32>
    %535 = arith.addf %533, %534 : vector<8x32xf32>
    %536 = math.tanh %535 : vector<8x32xf32>
    %537 = arith.mulf %532, %536 : vector<8x32xf32>
    %c72_108 = arith.constant 72 : index
    %c0_109 = arith.constant 0 : index
    %538 = vector.load %arg12[%c72_108, %c0_109] : memref<128x32xf32, #tpu.memory_space<vmem>>, vector<8x32xf32>
    tpu.vector_store %arg12[%c72_108, %c0_109], %537 {strides = array<i32>} : memref<128x32xf32, #tpu.memory_space<vmem>>, vector<8x32xf32>,
    %539 = vector.extract_strided_slice %336 {offsets = [80, 0], sizes = [8, 128], strides = [1, 1]} : vector<128x128xf32> to vector<8x128xf32>
    %cst_110 = arith.constant dense<0.000000e+00> : vector<8x128xf32>
    %540 = tpu.matmul %537, %332, %cst_110 {dimension_numbers = #tpu.dot_dimension_numbers<[1], [0], [0], [1], [0, 0, 1, 1], [], []>} : vector<8x32xf32>, vector<32x128xf32>, vector<8x128xf32> -> vector<8x128xf32>
    %541 = arith.addf %539, %540 : vector<8x128xf32>
    %542 = vector.extract_strided_slice %541 {offsets = [0, 0], sizes = [8, 96], strides = [1, 1]} : vector<8x128xf32> to vector<8x96xf32>
    %543 = arith.negf %542 : vector<8x96xf32>
    %544 = math.exp %543 : vector<8x96xf32>
    %cst_111 = arith.constant 1.000000e+00 : f32
    %545 = vector.broadcast %cst_111 : f32 to vector<8x96xf32>
    %546 = arith.addf %545, %544 : vector<8x96xf32>
    %547 = arith.divf %545, %546 : vector<8x96xf32>
    %548 = vector.extract_strided_slice %541 {offsets = [0, 96], sizes = [8, 32], strides = [1, 1]} : vector<8x128xf32> to vector<8x32xf32>
    %549 = math.tanh %548 : vector<8x32xf32>
    %550 = vector.extract_strided_slice %547 {offsets = [0, 0], sizes = [8, 32], strides = [1, 1]} : vector<8x96xf32> to vector<8x32xf32>
    %551 = vector.extract_strided_slice %547 {offsets = [0, 32], sizes = [8, 32], strides = [1, 1]} : vector<8x96xf32> to vector<8x32xf32>
    %552 = vector.extract_strided_slice %547 {offsets = [0, 64], sizes = [8, 32], strides = [1, 1]} : vector<8x96xf32> to vector<8x32xf32>
    %553 = arith.mulf %551, %535 : vector<8x32xf32>
    %554 = arith.mulf %550, %549 : vector<8x32xf32>
    %555 = arith.addf %553, %554 : vector<8x32xf32>
    %556 = math.tanh %555 : vector<8x32xf32>
    %557 = arith.mulf %552, %556 : vector<8x32xf32>
    %c80_112 = arith.constant 80 : index
    %c0_113 = arith.constant 0 : index
    %558 = vector.load %arg12[%c80_112, %c0_113] : memref<128x32xf32, #tpu.memory_space<vmem>>, vector<8x32xf32>
    tpu.vector_store %arg12[%c80_112, %c0_113], %557 {strides = array<i32>} : memref<128x32xf32, #tpu.memory_space<vmem>>, vector<8x32xf32>,
    %559 = vector.extract_strided_slice %336 {offsets = [88, 0], sizes = [8, 128], strides = [1, 1]} : vector<128x128xf32> to vector<8x128xf32>
    %cst_114 = arith.constant dense<0.000000e+00> : vector<8x128xf32>
    %560 = tpu.matmul %557, %332, %cst_114 {dimension_numbers = #tpu.dot_dimension_numbers<[1], [0], [0], [1], [0, 0, 1, 1], [], []>} : vector<8x32xf32>, vector<32x128xf32>, vector<8x128xf32> -> vector<8x128xf32>
    %561 = arith.addf %559, %560 : vector<8x128xf32>
    %562 = vector.extract_strided_slice %561 {offsets = [0, 0], sizes = [8, 96], strides = [1, 1]} : vector<8x128xf32> to vector<8x96xf32>
    %563 = arith.negf %562 : vector<8x96xf32>
    %564 = math.exp %563 : vector<8x96xf32>
    %cst_115 = arith.constant 1.000000e+00 : f32
    %565 = vector.broadcast %cst_115 : f32 to vector<8x96xf32>
    %566 = arith.addf %565, %564 : vector<8x96xf32>
    %567 = arith.divf %565, %566 : vector<8x96xf32>
    %568 = vector.extract_strided_slice %561 {offsets = [0, 96], sizes = [8, 32], strides = [1, 1]} : vector<8x128xf32> to vector<8x32xf32>
    %569 = math.tanh %568 : vector<8x32xf32>
    %570 = vector.extract_strided_slice %567 {offsets = [0, 0], sizes = [8, 32], strides = [1, 1]} : vector<8x96xf32> to vector<8x32xf32>
    %571 = vector.extract_strided_slice %567 {offsets = [0, 32], sizes = [8, 32], strides = [1, 1]} : vector<8x96xf32> to vector<8x32xf32>
    %572 = vector.extract_strided_slice %567 {offsets = [0, 64], sizes = [8, 32], strides = [1, 1]} : vector<8x96xf32> to vector<8x32xf32>
    %573 = arith.mulf %571, %555 : vector<8x32xf32>
    %574 = arith.mulf %570, %569 : vector<8x32xf32>
    %575 = arith.addf %573, %574 : vector<8x32xf32>
    %576 = math.tanh %575 : vector<8x32xf32>
    %577 = arith.mulf %572, %576 : vector<8x32xf32>
    %c88_116 = arith.constant 88 : index
    %c0_117 = arith.constant 0 : index
    %578 = vector.load %arg12[%c88_116, %c0_117] : memref<128x32xf32, #tpu.memory_space<vmem>>, vector<8x32xf32>
    tpu.vector_store %arg12[%c88_116, %c0_117], %577 {strides = array<i32>} : memref<128x32xf32, #tpu.memory_space<vmem>>, vector<8x32xf32>,
    %579 = vector.extract_strided_slice %336 {offsets = [96, 0], sizes = [8, 128], strides = [1, 1]} : vector<128x128xf32> to vector<8x128xf32>
    %cst_118 = arith.constant dense<0.000000e+00> : vector<8x128xf32>
    %580 = tpu.matmul %577, %332, %cst_118 {dimension_numbers = #tpu.dot_dimension_numbers<[1], [0], [0], [1], [0, 0, 1, 1], [], []>} : vector<8x32xf32>, vector<32x128xf32>, vector<8x128xf32> -> vector<8x128xf32>
    %581 = arith.addf %579, %580 : vector<8x128xf32>
    %582 = vector.extract_strided_slice %581 {offsets = [0, 0], sizes = [8, 96], strides = [1, 1]} : vector<8x128xf32> to vector<8x96xf32>
    %583 = arith.negf %582 : vector<8x96xf32>
    %584 = math.exp %583 : vector<8x96xf32>
    %cst_119 = arith.constant 1.000000e+00 : f32
    %585 = vector.broadcast %cst_119 : f32 to vector<8x96xf32>
    %586 = arith.addf %585, %584 : vector<8x96xf32>
    %587 = arith.divf %585, %586 : vector<8x96xf32>
    %588 = vector.extract_strided_slice %581 {offsets = [0, 96], sizes = [8, 32], strides = [1, 1]} : vector<8x128xf32> to vector<8x32xf32>
    %589 = math.tanh %588 : vector<8x32xf32>
    %590 = vector.extract_strided_slice %587 {offsets = [0, 0], sizes = [8, 32], strides = [1, 1]} : vector<8x96xf32> to vector<8x32xf32>
    %591 = vector.extract_strided_slice %587 {offsets = [0, 32], sizes = [8, 32], strides = [1, 1]} : vector<8x96xf32> to vector<8x32xf32>
    %592 = vector.extract_strided_slice %587 {offsets = [0, 64], sizes = [8, 32], strides = [1, 1]} : vector<8x96xf32> to vector<8x32xf32>
    %593 = arith.mulf %591, %575 : vector<8x32xf32>
    %594 = arith.mulf %590, %589 : vector<8x32xf32>
    %595 = arith.addf %593, %594 : vector<8x32xf32>
    %596 = math.tanh %595 : vector<8x32xf32>
    %597 = arith.mulf %592, %596 : vector<8x32xf32>
    %c96_120 = arith.constant 96 : index
    %c0_121 = arith.constant 0 : index
    %598 = vector.load %arg12[%c96_120, %c0_121] : memref<128x32xf32, #tpu.memory_space<vmem>>, vector<8x32xf32>
    tpu.vector_store %arg12[%c96_120, %c0_121], %597 {strides = array<i32>} : memref<128x32xf32, #tpu.memory_space<vmem>>, vector<8x32xf32>,
    %599 = vector.extract_strided_slice %336 {offsets = [104, 0], sizes = [8, 128], strides = [1, 1]} : vector<128x128xf32> to vector<8x128xf32>
    %cst_122 = arith.constant dense<0.000000e+00> : vector<8x128xf32>
    %600 = tpu.matmul %597, %332, %cst_122 {dimension_numbers = #tpu.dot_dimension_numbers<[1], [0], [0], [1], [0, 0, 1, 1], [], []>} : vector<8x32xf32>, vector<32x128xf32>, vector<8x128xf32> -> vector<8x128xf32>
    %601 = arith.addf %599, %600 : vector<8x128xf32>
    %602 = vector.extract_strided_slice %601 {offsets = [0, 0], sizes = [8, 96], strides = [1, 1]} : vector<8x128xf32> to vector<8x96xf32>
    %603 = arith.negf %602 : vector<8x96xf32>
    %604 = math.exp %603 : vector<8x96xf32>
    %cst_123 = arith.constant 1.000000e+00 : f32
    %605 = vector.broadcast %cst_123 : f32 to vector<8x96xf32>
    %606 = arith.addf %605, %604 : vector<8x96xf32>
    %607 = arith.divf %605, %606 : vector<8x96xf32>
    %608 = vector.extract_strided_slice %601 {offsets = [0, 96], sizes = [8, 32], strides = [1, 1]} : vector<8x128xf32> to vector<8x32xf32>
    %609 = math.tanh %608 : vector<8x32xf32>
    %610 = vector.extract_strided_slice %607 {offsets = [0, 0], sizes = [8, 32], strides = [1, 1]} : vector<8x96xf32> to vector<8x32xf32>
    %611 = vector.extract_strided_slice %607 {offsets = [0, 32], sizes = [8, 32], strides = [1, 1]} : vector<8x96xf32> to vector<8x32xf32>
    %612 = vector.extract_strided_slice %607 {offsets = [0, 64], sizes = [8, 32], strides = [1, 1]} : vector<8x96xf32> to vector<8x32xf32>
    %613 = arith.mulf %611, %595 : vector<8x32xf32>
    %614 = arith.mulf %610, %609 : vector<8x32xf32>
    %615 = arith.addf %613, %614 : vector<8x32xf32>
    %616 = math.tanh %615 : vector<8x32xf32>
    %617 = arith.mulf %612, %616 : vector<8x32xf32>
    %c104_124 = arith.constant 104 : index
    %c0_125 = arith.constant 0 : index
    %618 = vector.load %arg12[%c104_124, %c0_125] : memref<128x32xf32, #tpu.memory_space<vmem>>, vector<8x32xf32>
    tpu.vector_store %arg12[%c104_124, %c0_125], %617 {strides = array<i32>} : memref<128x32xf32, #tpu.memory_space<vmem>>, vector<8x32xf32>,
    %619 = vector.extract_strided_slice %336 {offsets = [112, 0], sizes = [8, 128], strides = [1, 1]} : vector<128x128xf32> to vector<8x128xf32>
    %cst_126 = arith.constant dense<0.000000e+00> : vector<8x128xf32>
    %620 = tpu.matmul %617, %332, %cst_126 {dimension_numbers = #tpu.dot_dimension_numbers<[1], [0], [0], [1], [0, 0, 1, 1], [], []>} : vector<8x32xf32>, vector<32x128xf32>, vector<8x128xf32> -> vector<8x128xf32>
    %621 = arith.addf %619, %620 : vector<8x128xf32>
    %622 = vector.extract_strided_slice %621 {offsets = [0, 0], sizes = [8, 96], strides = [1, 1]} : vector<8x128xf32> to vector<8x96xf32>
    %623 = arith.negf %622 : vector<8x96xf32>
    %624 = math.exp %623 : vector<8x96xf32>
    %cst_127 = arith.constant 1.000000e+00 : f32
    %625 = vector.broadcast %cst_127 : f32 to vector<8x96xf32>
    %626 = arith.addf %625, %624 : vector<8x96xf32>
    %627 = arith.divf %625, %626 : vector<8x96xf32>
    %628 = vector.extract_strided_slice %621 {offsets = [0, 96], sizes = [8, 32], strides = [1, 1]} : vector<8x128xf32> to vector<8x32xf32>
    %629 = math.tanh %628 : vector<8x32xf32>
    %630 = vector.extract_strided_slice %627 {offsets = [0, 0], sizes = [8, 32], strides = [1, 1]} : vector<8x96xf32> to vector<8x32xf32>
    %631 = vector.extract_strided_slice %627 {offsets = [0, 32], sizes = [8, 32], strides = [1, 1]} : vector<8x96xf32> to vector<8x32xf32>
    %632 = vector.extract_strided_slice %627 {offsets = [0, 64], sizes = [8, 32], strides = [1, 1]} : vector<8x96xf32> to vector<8x32xf32>
    %633 = arith.mulf %631, %615 : vector<8x32xf32>
    %634 = arith.mulf %630, %629 : vector<8x32xf32>
    %635 = arith.addf %633, %634 : vector<8x32xf32>
    %636 = math.tanh %635 : vector<8x32xf32>
    %637 = arith.mulf %632, %636 : vector<8x32xf32>
    %c112_128 = arith.constant 112 : index
    %c0_129 = arith.constant 0 : index
    %638 = vector.load %arg12[%c112_128, %c0_129] : memref<128x32xf32, #tpu.memory_space<vmem>>, vector<8x32xf32>
    tpu.vector_store %arg12[%c112_128, %c0_129], %637 {strides = array<i32>} : memref<128x32xf32, #tpu.memory_space<vmem>>, vector<8x32xf32>,
    %639 = vector.extract_strided_slice %336 {offsets = [120, 0], sizes = [8, 128], strides = [1, 1]} : vector<128x128xf32> to vector<8x128xf32>
    %cst_130 = arith.constant dense<0.000000e+00> : vector<8x128xf32>
    %640 = tpu.matmul %637, %332, %cst_130 {dimension_numbers = #tpu.dot_dimension_numbers<[1], [0], [0], [1], [0, 0, 1, 1], [], []>} : vector<8x32xf32>, vector<32x128xf32>, vector<8x128xf32> -> vector<8x128xf32>
    %641 = arith.addf %639, %640 : vector<8x128xf32>
    %642 = vector.extract_strided_slice %641 {offsets = [0, 0], sizes = [8, 96], strides = [1, 1]} : vector<8x128xf32> to vector<8x96xf32>
    %643 = arith.negf %642 : vector<8x96xf32>
    %644 = math.exp %643 : vector<8x96xf32>
    %cst_131 = arith.constant 1.000000e+00 : f32
    %645 = vector.broadcast %cst_131 : f32 to vector<8x96xf32>
    %646 = arith.addf %645, %644 : vector<8x96xf32>
    %647 = arith.divf %645, %646 : vector<8x96xf32>
    %648 = vector.extract_strided_slice %641 {offsets = [0, 96], sizes = [8, 32], strides = [1, 1]} : vector<8x128xf32> to vector<8x32xf32>
    %649 = math.tanh %648 : vector<8x32xf32>
    %650 = vector.extract_strided_slice %647 {offsets = [0, 0], sizes = [8, 32], strides = [1, 1]} : vector<8x96xf32> to vector<8x32xf32>
    %651 = vector.extract_strided_slice %647 {offsets = [0, 32], sizes = [8, 32], strides = [1, 1]} : vector<8x96xf32> to vector<8x32xf32>
    %652 = vector.extract_strided_slice %647 {offsets = [0, 64], sizes = [8, 32], strides = [1, 1]} : vector<8x96xf32> to vector<8x32xf32>
    %653 = arith.mulf %651, %635 : vector<8x32xf32>
    %654 = arith.mulf %650, %649 : vector<8x32xf32>
    %655 = arith.addf %653, %654 : vector<8x32xf32>
    %656 = math.tanh %655 : vector<8x32xf32>
    %657 = arith.mulf %652, %656 : vector<8x32xf32>
    %c120_132 = arith.constant 120 : index
    %c0_133 = arith.constant 0 : index
    %658 = vector.load %arg12[%c120_132, %c0_133] : memref<128x32xf32, #tpu.memory_space<vmem>>, vector<8x32xf32>
    tpu.vector_store %arg12[%c120_132, %c0_133], %657 {strides = array<i32>} : memref<128x32xf32, #tpu.memory_space<vmem>>, vector<8x32xf32>,
    %c0_134 = arith.constant 0 : index
    %c0_135 = arith.constant 0 : index
    %659 = vector.load %arg12[%c0_134, %c0_135] : memref<128x32xf32, #tpu.memory_space<vmem>>, vector<128x32xf32>
    %c0_136 = arith.constant 0 : index
    %c0_137 = arith.constant 0 : index
    %660 = vector.load %arg8[%c0_136, %c0_137] : memref<32x128xf32, #tpu.memory_space<vmem>>, vector<32x128xf32>
    %cst_138 = arith.constant dense<0.000000e+00> : vector<128x128xf32>
    %661 = tpu.matmul %659, %660, %cst_138 {dimension_numbers = #tpu.dot_dimension_numbers<[1], [0], [0], [1], [0, 0, 1, 1], [], []>} : vector<128x32xf32>, vector<32x128xf32>, vector<128x128xf32> -> vector<128x128xf32>
    %c0_139 = arith.constant 0 : index
    %c0_140 = arith.constant 0 : index
    %662 = vector.load %arg9[%c0_139, %c0_140] : memref<1x128xf32, #tpu.memory_space<vmem>>, vector<1x128xf32>
    %663 = vector.broadcast %662 : vector<1x128xf32> to vector<128x128xf32>
    %664 = arith.addf %661, %663 : vector<128x128xf32>
    %cst_141 = arith.constant dense<0xFF800000> : vector<128xf32>
    %665 = vector.multi_reduction <maximumf>, %664, %cst_141 [1] : vector<128x128xf32> to vector<128xf32>
    %666 = vector.shape_cast %665 : vector<128xf32> to vector<128x1xf32>
    %667 = vector.broadcast %666 : vector<128x1xf32> to vector<128x128xf32>
    %668 = arith.subf %664, %667 : vector<128x128xf32>
    %669 = math.exp %668 : vector<128x128xf32>
    %cst_142 = arith.constant dense<0.000000e+00> : vector<128xf32>
    %670 = vector.multi_reduction <add>, %669, %cst_142 [1] : vector<128x128xf32> to vector<128xf32>
    %671 = vector.shape_cast %670 : vector<128xf32> to vector<128x1xf32>
    %672 = math.log %671 : vector<128x1xf32>
    %673 = arith.addf %666, %672 : vector<128x1xf32>
    %674 = vector.broadcast %673 : vector<128x1xf32> to vector<128x128xf32>
    %675 = arith.subf %664, %674 : vector<128x128xf32>
    %c0_143 = arith.constant 0 : index
    %c0_144 = arith.constant 0 : index
    %c0_145 = arith.constant 0 : index
    %676 = vector.load %arg10[%c0_143, %c0_144, %c0_145] : memref<1x128x128xf32, #tpu.memory_space<vmem>>, vector<1x128x128xf32>
    %677 = vector.shape_cast %676 : vector<1x128x128xf32> to vector<128x128xf32>
    %678 = vector.shape_cast %675 : vector<128x128xf32> to vector<1x128x128xf32>
    tpu.vector_store %arg10[%c0_143, %c0_144, %c0_145], %678 {strides = array<i32>} : memref<1x128x128xf32, #tpu.memory_space<vmem>>, vector<1x128x128xf32>,
    return
  }
  func.func @transform_0(%arg0: i32) -> (i32, i32, i32) {
    %c0_i32 = arith.constant 0 : i32
    %c0_i32_0 = arith.constant 0 : i32
    %c0_i32_1 = arith.constant 0 : i32
    return %arg0, %c0_i32, %c0_i32_0 : i32, i32, i32
  }
  func.func @transform_1(%arg0: i32) -> (i32, i32) {
    %c0_i32 = arith.constant 0 : i32
    %c0_i32_0 = arith.constant 0 : i32
    %c0_i32_1 = arith.constant 0 : i32
    return %c0_i32, %c0_i32_0 : i32, i32
  }
  func.func @transform_2(%arg0: i32) -> (i32, i32) {
    %c0_i32 = arith.constant 0 : i32
    %c0_i32_0 = arith.constant 0 : i32
    %c0_i32_1 = arith.constant 0 : i32
    return %c0_i32, %c0_i32_0 : i32, i32
  }
  func.func @transform_3(%arg0: i32) -> (i32, i32) {
    %c0_i32 = arith.constant 0 : i32
    %c0_i32_0 = arith.constant 0 : i32
    %c0_i32_1 = arith.constant 0 : i32
    return %c0_i32, %c0_i32_0 : i32, i32
  }
  func.func @transform_4(%arg0: i32) -> (i32, i32) {
    %c0_i32 = arith.constant 0 : i32
    %c0_i32_0 = arith.constant 0 : i32
    %c0_i32_1 = arith.constant 0 : i32
    return %c0_i32, %c0_i32_0 : i32, i32
  }
  func.func @transform_5(%arg0: i32) -> (i32, i32) {
    %c0_i32 = arith.constant 0 : i32
    %c0_i32_0 = arith.constant 0 : i32
    %c0_i32_1 = arith.constant 0 : i32
    return %c0_i32, %c0_i32_0 : i32, i32
  }
  func.func @transform_6(%arg0: i32) -> (i32, i32) {
    %c0_i32 = arith.constant 0 : i32
    %c0_i32_0 = arith.constant 0 : i32
    %c0_i32_1 = arith.constant 0 : i32
    return %c0_i32, %c0_i32_0 : i32, i32
  }
  func.func @transform_7(%arg0: i32) -> (i32, i32) {
    %c0_i32 = arith.constant 0 : i32
    %c0_i32_0 = arith.constant 0 : i32
    %c0_i32_1 = arith.constant 0 : i32
    return %c0_i32, %c0_i32_0 : i32, i32
  }
  func.func @transform_8(%arg0: i32) -> (i32, i32) {
    %c0_i32 = arith.constant 0 : i32
    %c0_i32_0 = arith.constant 0 : i32
    %c0_i32_1 = arith.constant 0 : i32
    return %c0_i32, %c0_i32_0 : i32, i32
  }
  func.func @transform_9(%arg0: i32) -> (i32, i32, i32) {
    %c0_i32 = arith.constant 0 : i32
    %c0_i32_0 = arith.constant 0 : i32
    %c0_i32_1 = arith.constant 0 : i32
    return %arg0, %c0_i32, %c0_i32_0 : i32, i32, i32
  }
}

</mosaic_0001>

<llo_original>
// kernel: token_predictor_forward.1
$region0: #{token_predictor_forward.1}
  #allocation0 [shape = 'u32[]', space=smem, size = 0x4, offset = 0x4, fixed_abs, tag = 'smem constant byte address 0x4 - core index']
  #allocation1 [shape = 'u32[72,128]{1,0:T(1,128)}', space=vmem, size = 0x9000, scoped, tag = 'internal scratch']
  #allocation2 [shape = 'f32[128,32]{1,0:T(8,128)}', space=vmem, size = 0x10000, scoped, tag = 'scratch operand']
  #allocation3 [shape = 'f32[128,32]{1,0:T(8,128)}', space=vmem, size = 0x10000, scoped, tag = 'scratch operand']
  %s0 = inlined_call_operand.vmem [shape: f32[2,128,32], index: 0, kind: input, shape index: {}]
  %s1 = inlined_call_operand.vmem [shape: f32[32,128], index: 1, kind: input, shape index: {}]
  %s2 = inlined_call_operand.vmem [shape: f32[32,128], index: 2, kind: input, shape index: {}]
  %s3 = inlined_call_operand.vmem [shape: f32[1,128], index: 3, kind: input, shape index: {}]
  %s4 = inlined_call_operand.vmem [shape: f32[32,128], index: 4, kind: input, shape index: {}]
  %s5 = inlined_call_operand.vmem [shape: f32[32,128], index: 5, kind: input, shape index: {}]
  %s6 = inlined_call_operand.vmem [shape: f32[1,128], index: 6, kind: input, shape index: {}]
  %s7 = inlined_call_operand.vmem [shape: f32[32,128], index: 7, kind: input, shape index: {}]
  %s8 = inlined_call_operand.vmem [shape: f32[1,128], index: 8, kind: input, shape index: {}]
  %s9 = inlined_call_operand.vmem [shape: f32[2,128,128], index: 9, kind: output, shape index: {}]
  %s10 = sld [smem:[#allocation0]]
  $region69: #{token_predictor_forward.1} parent=0
    _
  %s12 = ssub.s32 1, %s10
  %s13 = scalar_select 0, %s12, %s10
  loop: start=0, step=1, limit=4
  $region2: #{token_predictor_forward.1} parent=0 // loop_pre_header
    _
  $region3: #{token_predictor_forward.1} parent=0 // loop_header
    %s15 = sphi 0, %s19
    %p16 = scmp.ge.s32.totalorder %s15, 4
    %s25 = sphi 0, %s27
    %s28 = sphi 0, %s25
    %s29 = sphi 0, %s28
    %s45 = sphi 0, %s29
    %s49 = sphi 0, %s49
    %s51 = sphi 0, %s49
    %s52 = sphi 0, %s51
    %s66 = sphi 0, %s52
    %s70 = sphi 0, %s70
    %s72 = sphi 0, %s70
    %s73 = sphi 0, %s72
    %s87 = sphi 0, %s73
    %s91 = sphi 0, %s91
    %s93 = sphi 0, %s91
    %s94 = sphi 0, %s93
    %s108 = sphi 0, %s94
    %s112 = sphi 0, %s112
    %s114 = sphi 0, %s112
    %s115 = sphi 0, %s114
    %s129 = sphi 0, %s115
    %s133 = sphi 0, %s133
    %s135 = sphi 0, %s133
    %s136 = sphi 0, %s135
    %s150 = sphi 0, %s136
    %s154 = sphi 0, %s154
    %s156 = sphi 0, %s154
    %s157 = sphi 0, %s156
    %s171 = sphi 0, %s157
    %s175 = sphi 0, %s175
    %s177 = sphi 0, %s175
    %s178 = sphi 0, %s177
    %s192 = sphi 0, %s178
    %s196 = sphi 0, %s196
    %s198 = sphi 0, %s196
    %s199 = sphi 0, %s198
    %s213 = sphi 0, %s199
    %s219 = sphi 0, %s221
    %s222 = sphi 0, %s219
    %s223 = sphi 0, %s222
    %s239 = sphi 0, %s223
  $region4: #{token_predictor_forward.1} parent=0 // loop_header_branch
    %18 = sbr.rel (%p16) target = $region8
  $region5: #{token_predictor_forward.1} parent=0 // loop_body
    %s20 = ssub.s32 %s15, 1
    %s21 = ssub.s32 %s15, 2
    %s22 = sadd.s32 %s15, 1
    %s23 = ssub.s32 %s15, %s22
    %p24 = scmp.eq.s32.totalorder %s23, 0
    %s26 = sadd.s32 %s25, 1
    %s27 = scalar_select %p24, %s25, %s26
    %p30 = pneg %p24
    %p31 = scmp.eq.s32.totalorder %s15, 1
    %p32 = por %p30, %p31
    %p33 = scmp.ne.s32.totalorder %s25, %s28
    %p34 = scmp.eq.s32.totalorder %s15, 0
    %p35 = por %p33, %p34
    %p36 = scmp.ne.s32.totalorder %s25, %s28
    %p37 = scmp.eq.s32.totalorder %s20, 1
    %p38 = por %p36, %p37
    %p39 = scmp.ne.s32.totalorder %s28, %s29
    %p40 = scmp.eq.s32.totalorder %s20, 0
    %p41 = por %p39, %p40
    %p42 = scmp.ne.s32.totalorder %s28, %s29
    %p43 = scmp.eq.s32.totalorder %s21, 1
    %p44 = por %p42, %p43
    %p46 = scmp.ne.s32.totalorder %s29, %s45
    %p47 = scmp.eq.s32.totalorder %s21, 0
    %p48 = por %p46, %p47
    %s50 = sadd.s32 %s49, 1
    %p53 = scmp.eq.s32.totalorder %s15, 1
    %p54 = scmp.ne.s32.totalorder %s49, %s51
    %p55 = scmp.eq.s32.totalorder %s15, 0
    %p56 = por %p54, %p55
    %p57 = scmp.ne.s32.totalorder %s49, %s51
    %p58 = scmp.eq.s32.totalorder %s20, 1
    %p59 = por %p57, %p58
    %p60 = scmp.ne.s32.totalorder %s51, %s52
    %p61 = scmp.eq.s32.totalorder %s20, 0
    %p62 = por %p60, %p61
    %p63 = scmp.ne.s32.totalorder %s51, %s52
    %p64 = scmp.eq.s32.totalorder %s21, 1
    %p65 = por %p63, %p64
    %p67 = scmp.ne.s32.totalorder %s52, %s66
    %p68 = scmp.eq.s32.totalorder %s21, 0
    %p69 = por %p67, %p68
    %s71 = sadd.s32 %s70, 1
    %p74 = scmp.eq.s32.totalorder %s15, 1
    %p75 = scmp.ne.s32.totalorder %s70, %s72
    %p76 = scmp.eq.s32.totalorder %s15, 0
    %p77 = por %p75, %p76
    %p78 = scmp.ne.s32.totalorder %s70, %s72
    %p79 = scmp.eq.s32.totalorder %s20, 1
    %p80 = por %p78, %p79
    %p81 = scmp.ne.s32.totalorder %s72, %s73
    %p82 = scmp.eq.s32.totalorder %s20, 0
    %p83 = por %p81, %p82
    %p84 = scmp.ne.s32.totalorder %s72, %s73
    %p85 = scmp.eq.s32.totalorder %s21, 1
    %p86 = por %p84, %p85
    %p88 = scmp.ne.s32.totalorder %s73, %s87
    %p89 = scmp.eq.s32.totalorder %s21, 0
    %p90 = por %p88, %p89
    %s92 = sadd.s32 %s91, 1
    %p95 = scmp.eq.s32.totalorder %s15, 1
    %p96 = scmp.ne.s32.totalorder %s91, %s93
    %p97 = scmp.eq.s32.totalorder %s15, 0
    %p98 = por %p96, %p97
    %p99 = scmp.ne.s32.totalorder %s91, %s93
    %p100 = scmp.eq.s32.totalorder %s20, 1
    %p101 = por %p99, %p100
    %p102 = scmp.ne.s32.totalorder %s93, %s94
    %p103 = scmp.eq.s32.totalorder %s20, 0
    %p104 = por %p102, %p103
    %p105 = scmp.ne.s32.totalorder %s93, %s94
    %p106 = scmp.eq.s32.totalorder %s21, 1
    %p107 = por %p105, %p106
    %p109 = scmp.ne.s32.totalorder %s94, %s108
    %p110 = scmp.eq.s32.totalorder %s21, 0
    %p111 = por %p109, %p110
    %s113 = sadd.s32 %s112, 1
    %p116 = scmp.eq.s32.totalorder %s15, 1
    %p117 = scmp.ne.s32.totalorder %s112, %s114
    %p118 = scmp.eq.s32.totalorder %s15, 0
    %p119 = por %p117, %p118
    %p120 = scmp.ne.s32.totalorder %s112, %s114
    %p121 = scmp.eq.s32.totalorder %s20, 1
    %p122 = por %p120, %p121
    %p123 = scmp.ne.s32.totalorder %s114, %s115
    %p124 = scmp.eq.s32.totalorder %s20, 0
    %p125 = por %p123, %p124
    %p126 = scmp.ne.s32.totalorder %s114, %s115
    %p127 = scmp.eq.s32.totalorder %s21, 1
    %p128 = por %p126, %p127
    %p130 = scmp.ne.s32.totalorder %s115, %s129
    %p131 = scmp.eq.s32.totalorder %s21, 0
    %p132 = por %p130, %p131
    %s134 = sadd.s32 %s133, 1
    %p137 = scmp.eq.s32.totalorder %s15, 1
    %p138 = scmp.ne.s32.totalorder %s133, %s135
    %p139 = scmp.eq.s32.totalorder %s15, 0
    %p140 = por %p138, %p139
    %p141 = scmp.ne.s32.totalorder %s133, %s135
    %p142 = scmp.eq.s32.totalorder %s20, 1
    %p143 = por %p141, %p142
    %p144 = scmp.ne.s32.totalorder %s135, %s136
    %p145 = scmp.eq.s32.totalorder %s20, 0
    %p146 = por %p144, %p145
    %p147 = scmp.ne.s32.totalorder %s135, %s136
    %p148 = scmp.eq.s32.totalorder %s21, 1
    %p149 = por %p147, %p148
    %p151 = scmp.ne.s32.totalorder %s136, %s150
    %p152 = scmp.eq.s32.totalorder %s21, 0
    %p153 = por %p151, %p152
    %s155 = sadd.s32 %s154, 1
    %p158 = scmp.eq.s32.totalorder %s15, 1
    %p159 = scmp.ne.s32.totalorder %s154, %s156
    %p160 = scmp.eq.s32.totalorder %s15, 0
    %p161 = por %p159, %p160
    %p162 = scmp.ne.s32.totalorder %s154, %s156
    %p163 = scmp.eq.s32.totalorder %s20, 1
    %p164 = por %p162, %p163
    %p165 = scmp.ne.s32.totalorder %s156, %s157
    %p166 = scmp.eq.s32.totalorder %s20, 0
    %p167 = por %p165, %p166
    %p168 = scmp.ne.s32.totalorder %s156, %s157
    %p169 = scmp.eq.s32.totalorder %s21, 1
    %p170 = por %p168, %p169
    %p172 = scmp.ne.s32.totalorder %s157, %s171
    %p173 = scmp.eq.s32.totalorder %s21, 0
    %p174 = por %p172, %p173
    %s176 = sadd.s32 %s175, 1
    %p179 = scmp.eq.s32.totalorder %s15, 1
    %p180 = scmp.ne.s32.totalorder %s175, %s177
    %p181 = scmp.eq.s32.totalorder %s15, 0
    %p182 = por %p180, %p181
    %p183 = scmp.ne.s32.totalorder %s175, %s177
    %p184 = scmp.eq.s32.totalorder %s20, 1
    %p185 = por %p183, %p184
    %p186 = scmp.ne.s32.totalorder %s177, %s178
    %p187 = scmp.eq.s32.totalorder %s20, 0
    %p188 = por %p186, %p187
    %p189 = scmp.ne.s32.totalorder %s177, %s178
    %p190 = scmp.eq.s32.totalorder %s21, 1
    %p191 = por %p189, %p190
    %p193 = scmp.ne.s32.totalorder %s178, %s192
    %p194 = scmp.eq.s32.totalorder %s21, 0
    %p195 = por %p193, %p194
    %s197 = sadd.s32 %s196, 1
    %p200 = scmp.eq.s32.totalorder %s15, 1
    %p201 = scmp.ne.s32.totalorder %s196, %s198
    %p202 = scmp.eq.s32.totalorder %s15, 0
    %p203 = por %p201, %p202
    %p204 = scmp.ne.s32.totalorder %s196, %s198
    %p205 = scmp.eq.s32.totalorder %s20, 1
    %p206 = por %p204, %p205
    %p207 = scmp.ne.s32.totalorder %s198, %s199
    %p208 = scmp.eq.s32.totalorder %s20, 0
    %p209 = por %p207, %p208
    %p210 = scmp.ne.s32.totalorder %s198, %s199
    %p211 = scmp.eq.s32.totalorder %s21, 1
    %p212 = por %p210, %p211
    %p214 = scmp.ne.s32.totalorder %s199, %s213
    %p215 = scmp.eq.s32.totalorder %s21, 0
    %p216 = por %p214, %p215
    %s217 = ssub.s32 %s15, %s22
    %p218 = scmp.eq.s32.totalorder %s217, 0
    %s220 = sadd.s32 %s219, 1
    %s221 = scalar_select %p218, %s219, %s220
    %p224 = pneg %p218
    %p225 = scmp.eq.s32.totalorder %s15, 1
    %p226 = por %p224, %p225
    %p227 = scmp.ne.s32.totalorder %s219, %s222
    %p228 = scmp.eq.s32.totalorder %s15, 0
    %p229 = por %p227, %p228
    %p230 = scmp.ne.s32.totalorder %s219, %s222
    %p231 = scmp.eq.s32.totalorder %s20, 1
    %p232 = por %p230, %p231
    %p233 = scmp.ne.s32.totalorder %s222, %s223
    %p234 = scmp.eq.s32.totalorder %s20, 0
    %p235 = por %p233, %p234
    %p236 = scmp.ne.s32.totalorder %s222, %s223
    %p237 = scmp.eq.s32.totalorder %s21, 1
    %p238 = por %p236, %p237
    %p240 = scmp.ne.s32.totalorder %s223, %s239
    %p241 = scmp.eq.s32.totalorder %s21, 0
    %p242 = por %p240, %p241
    %p243 = scmp.le.s32.totalorder 1, %s15
    %p244 = scmp.lt.s32.totalorder %s15, 3
    %p245 = pnand %p243, %p244
    %p246 = pneg %p245
    // Predicated region
    $region9: #{token_predictor_forward.1} parent=5 // pred_check
      _
    $region10: #{token_predictor_forward.1} parent=5 // pred_check_branch
      %248 = sbr.rel (%p245) target = $region12
    $region11: #{token_predictor_forward.1} parent=5 // pred_region
      %s249 = ssub.s32 %s15, 1
      // Predicated region
      $region13: #{token_predictor_forward.1} parent=11 // pred_check
        %p250 = pneg %p62
      $region14: #{token_predictor_forward.1} parent=11 // pred_check_branch
        %252 = sbr.rel (%p250) target = $region16
      $region15: #{token_predictor_forward.1} parent=11 // pred_region
        _
      $region16: #{token_predictor_forward.1} parent=11 // pred_fallthru
        _
      // Predicated region
      $region17: #{token_predictor_forward.1} parent=11 // pred_check
        %p253 = pneg %p83
      $region18: #{token_predictor_forward.1} parent=11 // pred_check_branch
        %255 = sbr.rel (%p253) target = $region20
      $region19: #{token_predictor_forward.1} parent=11 // pred_region
        _
      $region20: #{token_predictor_forward.1} parent=11 // pred_fallthru
        _
      // Predicated region
      $region21: #{token_predictor_forward.1} parent=11 // pred_check
        %p256 = pneg %p104
      $region22: #{token_predictor_forward.1} parent=11 // pred_check_branch
        %258 = sbr.rel (%p256) target = $region24
      $region23: #{token_predictor_forward.1} parent=11 // pred_region
        _
      $region24: #{token_predictor_forward.1} parent=11 // pred_fallthru
        _
      // Predicated region
      $region25: #{token_predictor_forward.1} parent=11 // pred_check
        %p259 = pneg %p125
      $region26: #{token_predictor_forward.1} parent=11 // pred_check_branch
        %261 = sbr.rel (%p259) target = $region28
      $region27: #{token_predictor_forward.1} parent=11 // pred_region
        _
      $region28: #{token_predictor_forward.1} parent=11 // pred_fallthru
        _
      // Predicated region
      $region29: #{token_predictor_forward.1} parent=11 // pred_check
        %p262 = pneg %p146
      $region30: #{token_predictor_forward.1} parent=11 // pred_check_branch
        %264 = sbr.rel (%p262) target = $region32
      $region31: #{token_predictor_forward.1} parent=11 // pred_region
        _
      $region32: #{token_predictor_forward.1} parent=11 // pred_fallthru
        _
      // Predicated region
      $region33: #{token_predictor_forward.1} parent=11 // pred_check
        %p265 = pneg %p167
      $region34: #{token_predictor_forward.1} parent=11 // pred_check_branch
        %267 = sbr.rel (%p265) target = $region36
      $region35: #{token_predictor_forward.1} parent=11 // pred_region
        _
      $region36: #{token_predictor_forward.1} parent=11 // pred_fallthru
        _
      // Predicated region
      $region37: #{token_predictor_forward.1} parent=11 // pred_check
        %p268 = pneg %p188
      $region38: #{token_predictor_forward.1} parent=11 // pred_check_branch
        %270 = sbr.rel (%p268) target = $region40
      $region39: #{token_predictor_forward.1} parent=11 // pred_region
        _
      $region40: #{token_predictor_forward.1} parent=11 // pred_fallthru
        _
      // Predicated region
      $region41: #{token_predictor_forward.1} parent=11 // pred_check
        %p271 = pneg %p209
      $region42: #{token_predictor_forward.1} parent=11 // pred_check_branch
        %273 = sbr.rel (%p271) target = $region44
      $region43: #{token_predictor_forward.1} parent=11 // pred_region
        _
      $region44: #{token_predictor_forward.1} parent=11 // pred_fallthru
        _
    $region12: #{token_predictor_forward.1} parent=5 // pred_fallthru
      _
    %p274 = scmp.lt.s32.totalorder %s15, 2
    // Predicated region
    $region45: #{token_predictor_forward.1} parent=5 // pred_check
      %p275 = pneg %p274
    $region46: #{token_predictor_forward.1} parent=5 // pred_check_branch
      %277 = sbr.rel (%p275) target = $region48
    $region47: #{token_predictor_forward.1} parent=5 // pred_region
      // Predicated region
      $region49: #{token_predictor_forward.1} parent=47 // pred_check
        %p278 = pneg %p35
      $region50: #{token_predictor_forward.1} parent=47 // pred_check_branch
        %280 = sbr.rel (%p278) target = $region52
      $region51: #{token_predictor_forward.1} parent=47 // pred_region
        %p281 = scmp.lt.s32.totalorder %s15, 1
        %s282 = scalar_select %p281, %s15, 1
        %s283 = smul.addr %s282, 16
        %s284 = smul.addr %s283, 8
        %s285 = scalar_lea.vmem %s0, %s284
      $region52: #{token_predictor_forward.1} parent=47 // pred_fallthru
        _
    $region48: #{token_predictor_forward.1} parent=5 // pred_fallthru
      _
    %p286 = scmp.le.s32.totalorder 1, %s15
    %p287 = scmp.lt.s32.totalorder %s15, 3
    %p288 = pnand %p286, %p287
    %p289 = pneg %p288
    // Predicated region
    $region53: #{token_predictor_forward.1} parent=5 // pred_check
      _
    $region54: #{token_predictor_forward.1} parent=5 // pred_check_branch
      %291 = sbr.rel (%p288) target = $region56
    $region55: #{token_predictor_forward.1} parent=5 // pred_region
      %s292 = ssub.s32 %s15, 1
      %p293 = scmp.lt.s32.totalorder %s20, 1
      %s294 = scalar_select %p293, %s20, 1
      %s295 = smul.addr %s294, 16
      %s296 = smul.addr %s295, 8
      %s297 = scalar_lea.vmem %s0, %s296
      %p298 = pneg %p41
      %p299 = pneg %p38
      %p300 = pneg %p62
      %p301 = pneg %p59
      %p302 = pneg %p83
      %p303 = pneg %p80
      %p304 = pneg %p104
      %p305 = pneg %p101
      %p306 = pneg %p125
      %p307 = pneg %p122
      %p308 = pneg %p146
      %p309 = pneg %p143
      %p310 = pneg %p167
      %p311 = pneg %p164
      %p312 = pneg %p188
      %p313 = pneg %p185
      %p314 = pneg %p209
      %p315 = pneg %p206
      %p316 = pneg %p235
      %p317 = pneg %p232
      %p318 = scmp.lt.s32.totalorder %s20, 1
      %s319 = scalar_select %p318, %s20, 1
      %s320 = smul.addr %s319, 16
      %s321 = smul.addr %s320, 8
      %s322 = scalar_lea.vmem %s9, %s321
      %p323 = scmp.lt.s32.totalorder %s20, 1
      %s324 = scalar_select %p323, %s20, 1
      %s325 = smul.addr %s324, 16
      %s326 = smul.addr %s325, 8
      %s327 = scalar_lea.vmem %s0, %s326
      %p328 = scmp.lt.s32.totalorder %s20, 1
      %s329 = scalar_select %p328, %s20, 1
      %s330 = smul.addr %s329, 16
      %s331 = smul.addr %s330, 8
      %s332 = scalar_lea.vmem %s9, %s331
      %v333 = vld [vmem:[%s327] sm:$0xff]
      %v334 = vld [vmem:[%s327 + $0x8] sm:$0xff]
      %v335 = vld [vmem:[%s327 + $0x10] sm:$0xff]
      %v336 = vld [vmem:[%s327 + $0x18] sm:$0xff]
      %v337 = vld [vmem:[%s327 + $0x20] sm:$0xff]
      %v338 = vld [vmem:[%s327 + $0x28] sm:$0xff]
      %v339 = vld [vmem:[%s327 + $0x30] sm:$0xff]
      %v340 = vld [vmem:[%s327 + $0x38] sm:$0xff]
      %v341 = vld [vmem:[%s327 + $0x40] sm:$0xff]
      %v342 = vld [vmem:[%s327 + $0x48] sm:$0xff]
      %v343 = vld [vmem:[%s327 + $0x50] sm:$0xff]
      %v344 = vld [vmem:[%s327 + $0x58] sm:$0xff]
      %v345 = vld [vmem:[%s327 + $0x60] sm:$0xff]
      %v346 = vld [vmem:[%s327 + $0x68] sm:$0xff]
      %v347 = vld [vmem:[%s327 + $0x70] sm:$0xff]
      %v348 = vld [vmem:[%s327 + $0x78] sm:$0xff]
      %v349 = vld [vmem:[%s1] sm:$0xff]
      %v350 = vld [vmem:[%s1 + $0x8] sm:$0xff]
      %v351 = vld [vmem:[%s1 + $0x10] sm:$0xff]
      %v352 = vld [vmem:[%s1 + $0x18] sm:$0xff]
      %v353 = vld [vmem:[%s2] sm:$0xff]
      %v354 = vld [vmem:[%s2 + $0x8] sm:$0xff]
      %v355 = vld [vmem:[%s2 + $0x10] sm:$0xff]
      %v356 = vld [vmem:[%s2 + $0x18] sm:$0xff]
      %v357 = vld [vmem:[%s3] sm:$0x1]
      %v359 = vperm.slane %v357, 0
      %vm361 = vcmask 261120
      %v363 = vsel %vm361, %v333, 0
      %v366 = vsel %vm361, %v334, 0
      %v369 = vsel %vm361, %v335, 0
      %v372 = vsel %vm361, %v336, 0
      %v375 = vsel %vm361, %v337, 0
      %v378 = vsel %vm361, %v338, 0
      %v381 = vsel %vm361, %v339, 0
      %v384 = vsel %vm361, %v340, 0
      %v387 = vsel %vm361, %v341, 0
      %v390 = vsel %vm361, %v342, 0
      %v393 = vsel %vm361, %v343, 0
      %v396 = vsel %vm361, %v344, 0
      %v399 = vsel %vm361, %v345, 0
      %v402 = vsel %vm361, %v346, 0
      %v405 = vsel %vm361, %v347, 0
      %v408 = vsel %vm361, %v348, 0
      %410 = vmatpush.msra.mxu0 0.0
      %411 = vmatpush.msra.mxu0 0.0
      %412 = vmatpush.msra.mxu0 0.0
      %413 = vmatpush.msra.mxu0 0.0
      %414 = vmatpush.msra.mxu0 0.0
      %415 = vmatpush.msra.mxu0 0.0
      %416 = vmatpush.msra.mxu0 0.0
      %417 = vmatpush.msra.mxu0 0.0
      %418 = vmatpush.msra.mxu0 0.0
      %419 = vmatpush.msra.mxu0 0.0
      %420 = vmatpush.msra.mxu0 0.0
      %421 = vmatpush.msra.mxu0 0.0
      %422 = vmatpush.msra.mxu0 %v352
      %423 = vmatpush.msra.mxu0 %v351
      %424 = vmatpush.msra.mxu0 %v350
      %425 = vmatpush.msra.mxu0 %v349
      %426 = vmatmul.f32.gmra.mxu0 %v363
      %v427 = vpop.f32.mrf.mxu0
      %v428 = vadd.f32 %v359, %v427
      %429 = vmatmul.f32.gmra.mxu0 %v366
      %v430 = vpop.f32.mrf.mxu0
      %v431 = vadd.f32 %v359, %v430
      %432 = vmatmul.f32.gmra.mxu0 %v369
      %v433 = vpop.f32.mrf.mxu0
      %v434 = vadd.f32 %v359, %v433
      %435 = vmatmul.f32.gmra.mxu0 %v372
      %v436 = vpop.f32.mrf.mxu0
      %v437 = vadd.f32 %v359, %v436
      %438 = vmatmul.f32.gmra.mxu0 %v375
      %v439 = vpop.f32.mrf.mxu0
      %v440 = vadd.f32 %v359, %v439
      %441 = vmatmul.f32.gmra.mxu0 %v378
      %v442 = vpop.f32.mrf.mxu0
      %v443 = vadd.f32 %v359, %v442
      %444 = vmatmul.f32.gmra.mxu0 %v381
      %v445 = vpop.f32.mrf.mxu0
      %v446 = vadd.f32 %v359, %v445
      %447 = vmatmul.f32.gmra.mxu0 %v384
      %v448 = vpop.f32.mrf.mxu0
      %v449 = vadd.f32 %v359, %v448
      %450 = vmatmul.f32.gmra.mxu0 %v387
      %v451 = vpop.f32.mrf.mxu0
      %v452 = vadd.f32 %v359, %v451
      %453 = vmatmul.f32.gmra.mxu0 %v390
      %v454 = vpop.f32.mrf.mxu0
      %v455 = vadd.f32 %v359, %v454
      %456 = vmatmul.f32.gmra.mxu0 %v393
      %v457 = vpop.f32.mrf.mxu0
      %v458 = vadd.f32 %v359, %v457
      %459 = vmatmul.f32.gmra.mxu0 %v396
      %v460 = vpop.f32.mrf.mxu0
      %v461 = vadd.f32 %v359, %v460
      %462 = vmatmul.f32.gmra.mxu0 %v399
      %v463 = vpop.f32.mrf.mxu0
      %v464 = vadd.f32 %v359, %v463
      %465 = vmatmul.f32.gmra.mxu0 %v402
      %v466 = vpop.f32.mrf.mxu0
      %v467 = vadd.f32 %v359, %v466
      %468 = vmatmul.f32.gmra.mxu0 %v405
      %v469 = vpop.f32.mrf.mxu0
      %v470 = vadd.f32 %v359, %v469
      %471 = vmatmul.f32.gmra.mxu0 %v408
      %v472 = vpop.f32.mrf.mxu0
      %v473 = vadd.f32 %v359, %v472
      %474 = vdwg.mxu0
      %v476 = vsel %vm361, 0.0, 0
      %478 = vmatpush.msra.mxu0 0.0
      %479 = vmatpush.msra.mxu0 0.0
      %480 = vmatpush.msra.mxu0 0.0
      %481 = vmatpush.msra.mxu0 0.0
      %482 = vmatpush.msra.mxu0 0.0
      %483 = vmatpush.msra.mxu0 0.0
      %484 = vmatpush.msra.mxu0 0.0
      %485 = vmatpush.msra.mxu0 0.0
      %486 = vmatpush.msra.mxu0 0.0
      %487 = vmatpush.msra.mxu0 0.0
      %488 = vmatpush.msra.mxu0 0.0
      %489 = vmatpush.msra.mxu0 0.0
      %490 = vmatpush.msra.mxu0 %v356
      %491 = vmatpush.msra.mxu0 %v355
      %492 = vmatpush.msra.mxu0 %v354
      %493 = vmatpush.msra.mxu0 %v353
      %494 = vmatmul.f32.gmra.mxu0 %v476
      %v495 = vpop.f32.mrf.mxu0
      %v496 = vadd.f32 0.0, %v495
      %497 = vdwg.mxu0
      %v498 = vadd.f32 %v428, %v496
      %v499 = vxor.u32 %v498, 2147483648
      %v500 = vmul.f32 %v499, 1.442695
      %v501 = vpow.pop %v500
      %v502 = vadd.f32 %v501, 1.0
      %v503 = vrcp.pop %v502
      %v504 = vmul.f32 %v502, %v503
      %v505 = vsub.f32 1.0, %v504
      %v506 = vmul.f32 %v503, %v505
      %v507 = vadd.f32 %v503, %v506
      %vm508 = vweird.f32 %v502
      %vm509 = vweird.f32 %v503
      %vm510 = vmor %vm508, %vm509
      %v511 = vsel %vm510, %v503, %v507
      %v512 = vand.u32 2147483647, %v502
      %vm513 = vcmp.eq.f32.partialorder %v512, 8.507059e+37
      %v514 = vand.u32 %v502, 2147483648
      %v515 = vor.u32 1.1754944e-38, %v514
      %v516 = vsel %vm513, %v515, %v511
      %v517 = vmul.f32 1.0, %v516
      %v518 = vtanh.pop %v498
      %v519 = vmul.f32 %v517, 0.0
      %521 = vrot.lane.b32.xlu0 %v518, 32
      %v522 = vpop.permute.xlu0 %521
      %v524 = vmul.f32 %v517, %v522
      %526 = vrot.lane.b32.xlu0 %v524, 32
      %v527 = vpop.permute.xlu0 %526
      %v529 = vadd.f32 %v519, %v527
      %v530 = vtanh.pop %v529
      %532 = vrot.lane.b32.xlu0 %v530, 32
      %v533 = vpop.permute.xlu0 %532
      %v535 = vmul.f32 %v517, %v533
      %537 = vrot.lane.b32.xlu0 %v535, 64
      %v538 = vpop.permute.xlu0 %537
      %540 = vst.msk [vmem:[#allocation2] sm:$0xff] %vm361, %v538
      %v541 = vsel %vm361, %v538, 0
      %543 = vmatpush.msra.mxu0 0.0
      %544 = vmatpush.msra.mxu0 0.0
      %545 = vmatpush.msra.mxu0 0.0
      %546 = vmatpush.msra.mxu0 0.0
      %547 = vmatpush.msra.mxu0 0.0
      %548 = vmatpush.msra.mxu0 0.0
      %549 = vmatpush.msra.mxu0 0.0
      %550 = vmatpush.msra.mxu0 0.0
      %551 = vmatpush.msra.mxu0 0.0
      %552 = vmatpush.msra.mxu0 0.0
      %553 = vmatpush.msra.mxu0 0.0
      %554 = vmatpush.msra.mxu0 0.0
      %555 = vmatpush.msra.mxu0 %v356
      %556 = vmatpush.msra.mxu0 %v355
      %557 = vmatpush.msra.mxu0 %v354
      %558 = vmatpush.msra.mxu0 %v353
      %559 = vmatmul.f32.gmra.mxu0 %v541
      %v560 = vpop.f32.mrf.mxu0
      %v561 = vadd.f32 0.0, %v560
      %562 = vdwg.mxu0
      %v563 = vadd.f32 %v431, %v561
      %v564 = vxor.u32 %v563, 2147483648
      %v565 = vmul.f32 %v564, 1.442695
      %v566 = vpow.pop %v565
      %v567 = vadd.f32 %v566, 1.0
      %v568 = vrcp.pop %v567
      %v569 = vmul.f32 %v567, %v568
      %v570 = vsub.f32 1.0, %v569
      %v571 = vmul.f32 %v568, %v570
      %v572 = vadd.f32 %v568, %v571
      %vm573 = vweird.f32 %v567
      %vm574 = vweird.f32 %v568
      %vm575 = vmor %vm573, %vm574
      %v576 = vsel %vm575, %v568, %v572
      %v577 = vand.u32 2147483647, %v567
      %vm578 = vcmp.eq.f32.partialorder %v577, 8.507059e+37
      %v579 = vand.u32 %v567, 2147483648
      %v580 = vor.u32 1.1754944e-38, %v579
      %v581 = vsel %vm578, %v580, %v576
      %v582 = vmul.f32 1.0, %v581
      %v583 = vtanh.pop %v563
      %v584 = vmul.f32 %v582, %v529
      %586 = vrot.lane.b32.xlu0 %v583, 32
      %v587 = vpop.permute.xlu0 %586
      %v589 = vmul.f32 %v582, %v587
      %591 = vrot.lane.b32.xlu0 %v589, 32
      %v592 = vpop.permute.xlu0 %591
      %v594 = vadd.f32 %v584, %v592
      %v595 = vtanh.pop %v594
      %597 = vrot.lane.b32.xlu0 %v595, 32
      %v598 = vpop.permute.xlu0 %597
      %v600 = vmul.f32 %v582, %v598
      %602 = vrot.lane.b32.xlu0 %v600, 64
      %v603 = vpop.permute.xlu0 %602
      %605 = vst.msk [vmem:[#allocation2 + $0x8] sm:$0xff] %vm361, %v603
      %v606 = vsel %vm361, %v603, 0
      %608 = vmatpush.msra.mxu0 0.0
      %609 = vmatpush.msra.mxu0 0.0
      %610 = vmatpush.msra.mxu0 0.0
      %611 = vmatpush.msra.mxu0 0.0
      %612 = vmatpush.msra.mxu0 0.0
      %613 = vmatpush.msra.mxu0 0.0
      %614 = vmatpush.msra.mxu0 0.0
      %615 = vmatpush.msra.mxu0 0.0
      %616 = vmatpush.msra.mxu0 0.0
      %617 = vmatpush.msra.mxu0 0.0
      %618 = vmatpush.msra.mxu0 0.0
      %619 = vmatpush.msra.mxu0 0.0
      %620 = vmatpush.msra.mxu0 %v356
      %621 = vmatpush.msra.mxu0 %v355
      %622 = vmatpush.msra.mxu0 %v354
      %623 = vmatpush.msra.mxu0 %v353
      %624 = vmatmul.f32.gmra.mxu0 %v606
      %v625 = vpop.f32.mrf.mxu0
      %v626 = vadd.f32 0.0, %v625
      %627 = vdwg.mxu0
      %v628 = vadd.f32 %v434, %v626
      %v629 = vxor.u32 %v628, 2147483648
      %v630 = vmul.f32 %v629, 1.442695
      %v631 = vpow.pop %v630
      %v632 = vadd.f32 %v631, 1.0
      %v633 = vrcp.pop %v632
      %v634 = vmul.f32 %v632, %v633
      %v635 = vsub.f32 1.0, %v634
      %v636 = vmul.f32 %v633, %v635
      %v637 = vadd.f32 %v633, %v636
      %vm638 = vweird.f32 %v632
      %vm639 = vweird.f32 %v633
      %vm640 = vmor %vm638, %vm639
      %v641 = vsel %vm640, %v633, %v637
      %v642 = vand.u32 2147483647, %v632
      %vm643 = vcmp.eq.f32.partialorder %v642, 8.507059e+37
      %v644 = vand.u32 %v632, 2147483648
      %v645 = vor.u32 1.1754944e-38, %v644
      %v646 = vsel %vm643, %v645, %v641
      %v647 = vmul.f32 1.0, %v646
      %v648 = vtanh.pop %v628
      %v649 = vmul.f32 %v647, %v594
      %651 = vrot.lane.b32.xlu0 %v648, 32
      %v652 = vpop.permute.xlu0 %651
      %v654 = vmul.f32 %v647, %v652
      %656 = vrot.lane.b32.xlu0 %v654, 32
      %v657 = vpop.permute.xlu0 %656
      %v659 = vadd.f32 %v649, %v657
      %v660 = vtanh.pop %v659
      %662 = vrot.lane.b32.xlu0 %v660, 32
      %v663 = vpop.permute.xlu0 %662
      %v665 = vmul.f32 %v647, %v663
      %667 = vrot.lane.b32.xlu0 %v665, 64
      %v668 = vpop.permute.xlu0 %667
      %670 = vst.msk [vmem:[#allocation2 + $0x10] sm:$0xff] %vm361, %v668
      %v671 = vsel %vm361, %v668, 0
      %673 = vmatpush.msra.mxu0 0.0
      %674 = vmatpush.msra.mxu0 0.0
      %675 = vmatpush.msra.mxu0 0.0
      %676 = vmatpush.msra.mxu0 0.0
      %677 = vmatpush.msra.mxu0 0.0
      %678 = vmatpush.msra.mxu0 0.0
      %679 = vmatpush.msra.mxu0 0.0
      %680 = vmatpush.msra.mxu0 0.0
      %681 = vmatpush.msra.mxu0 0.0
      %682 = vmatpush.msra.mxu0 0.0
      %683 = vmatpush.msra.mxu0 0.0
      %684 = vmatpush.msra.mxu0 0.0
      %685 = vmatpush.msra.mxu0 %v356
      %686 = vmatpush.msra.mxu0 %v355
      %687 = vmatpush.msra.mxu0 %v354
      %688 = vmatpush.msra.mxu0 %v353
      %689 = vmatmul.f32.gmra.mxu0 %v671
      %v690 = vpop.f32.mrf.mxu0
      %v691 = vadd.f32 0.0, %v690
      %692 = vdwg.mxu0
      %v693 = vadd.f32 %v437, %v691
      %v694 = vxor.u32 %v693, 2147483648
      %v695 = vmul.f32 %v694, 1.442695
      %v696 = vpow.pop %v695
      %v697 = vadd.f32 %v696, 1.0
      %v698 = vrcp.pop %v697
      %v699 = vmul.f32 %v697, %v698
      %v700 = vsub.f32 1.0, %v699
      %v701 = vmul.f32 %v698, %v700
      %v702 = vadd.f32 %v698, %v701
      %vm703 = vweird.f32 %v697
      %vm704 = vweird.f32 %v698
      %vm705 = vmor %vm703, %vm704
      %v706 = vsel %vm705, %v698, %v702
      %v707 = vand.u32 2147483647, %v697
      %vm708 = vcmp.eq.f32.partialorder %v707, 8.507059e+37
      %v709 = vand.u32 %v697, 2147483648
      %v710 = vor.u32 1.1754944e-38, %v709
      %v711 = vsel %vm708, %v710, %v706
      %v712 = vmul.f32 1.0, %v711
      %v713 = vtanh.pop %v693
      %v714 = vmul.f32 %v712, %v659
      %716 = vrot.lane.b32.xlu0 %v713, 32
      %v717 = vpop.permute.xlu0 %716
      %v719 = vmul.f32 %v712, %v717
      %721 = vrot.lane.b32.xlu0 %v719, 32
      %v722 = vpop.permute.xlu0 %721
      %v724 = vadd.f32 %v714, %v722
      %v725 = vtanh.pop %v724
      %727 = vrot.lane.b32.xlu0 %v725, 32
      %v728 = vpop.permute.xlu0 %727
      %v730 = vmul.f32 %v712, %v728
      %732 = vrot.lane.b32.xlu0 %v730, 64
      %v733 = vpop.permute.xlu0 %732
      %735 = vst.msk [vmem:[#allocation2 + $0x18] sm:$0xff] %vm361, %v733
      %v736 = vsel %vm361, %v733, 0
      %738 = vmatpush.msra.mxu0 0.0
      %739 = vmatpush.msra.mxu0 0.0
      %740 = vmatpush.msra.mxu0 0.0
      %741 = vmatpush.msra.mxu0 0.0
      %742 = vmatpush.msra.mxu0 0.0
      %743 = vmatpush.msra.mxu0 0.0
      %744 = vmatpush.msra.mxu0 0.0
      %745 = vmatpush.msra.mxu0 0.0
      %746 = vmatpush.msra.mxu0 0.0
      %747 = vmatpush.msra.mxu0 0.0
      %748 = vmatpush.msra.mxu0 0.0
      %749 = vmatpush.msra.mxu0 0.0
      %750 = vmatpush.msra.mxu0 %v356
      %751 = vmatpush.msra.mxu0 %v355
      %752 = vmatpush.msra.mxu0 %v354
      %753 = vmatpush.msra.mxu0 %v353
      %754 = vmatmul.f32.gmra.mxu0 %v736
      %v755 = vpop.f32.mrf.mxu0
      %v756 = vadd.f32 0.0, %v755
      %757 = vdwg.mxu0
      %v758 = vadd.f32 %v440, %v756
      %v759 = vxor.u32 %v758, 2147483648
      %v760 = vmul.f32 %v759, 1.442695
      %v761 = vpow.pop %v760
      %v762 = vadd.f32 %v761, 1.0
      %v763 = vrcp.pop %v762
      %v764 = vmul.f32 %v762, %v763
      %v765 = vsub.f32 1.0, %v764
      %v766 = vmul.f32 %v763, %v765
      %v767 = vadd.f32 %v763, %v766
      %vm768 = vweird.f32 %v762
      %vm769 = vweird.f32 %v763
      %vm770 = vmor %vm768, %vm769
      %v771 = vsel %vm770, %v763, %v767
      %v772 = vand.u32 2147483647, %v762
      %vm773 = vcmp.eq.f32.partialorder %v772, 8.507059e+37
      %v774 = vand.u32 %v762, 2147483648
      %v775 = vor.u32 1.1754944e-38, %v774
      %v776 = vsel %vm773, %v775, %v771
      %v777 = vmul.f32 1.0, %v776
      %v778 = vtanh.pop %v758
      %v779 = vmul.f32 %v777, %v724
      %781 = vrot.lane.b32.xlu0 %v778, 32
      %v782 = vpop.permute.xlu0 %781
      %v784 = vmul.f32 %v777, %v782
      %786 = vrot.lane.b32.xlu0 %v784, 32
      %v787 = vpop.permute.xlu0 %786
      %v789 = vadd.f32 %v779, %v787
      %v790 = vtanh.pop %v789
      %792 = vrot.lane.b32.xlu0 %v790, 32
      %v793 = vpop.permute.xlu0 %792
      %v795 = vmul.f32 %v777, %v793
      %797 = vrot.lane.b32.xlu0 %v795, 64
      %v798 = vpop.permute.xlu0 %797
      %800 = vst.msk [vmem:[#allocation2 + $0x20] sm:$0xff] %vm361, %v798
      %v801 = vsel %vm361, %v798, 0
      %803 = vmatpush.msra.mxu0 0.0
      %804 = vmatpush.msra.mxu0 0.0
      %805 = vmatpush.msra.mxu0 0.0
      %806 = vmatpush.msra.mxu0 0.0
      %807 = vmatpush.msra.mxu0 0.0
      %808 = vmatpush.msra.mxu0 0.0
      %809 = vmatpush.msra.mxu0 0.0
      %810 = vmatpush.msra.mxu0 0.0
      %811 = vmatpush.msra.mxu0 0.0
      %812 = vmatpush.msra.mxu0 0.0
      %813 = vmatpush.msra.mxu0 0.0
      %814 = vmatpush.msra.mxu0 0.0
      %815 = vmatpush.msra.mxu0 %v356
      %816 = vmatpush.msra.mxu0 %v355
      %817 = vmatpush.msra.mxu0 %v354
      %818 = vmatpush.msra.mxu0 %v353
      %819 = vmatmul.f32.gmra.mxu0 %v801
      %v820 = vpop.f32.mrf.mxu0
      %v821 = vadd.f32 0.0, %v820
      %822 = vdwg.mxu0
      %v823 = vadd.f32 %v443, %v821
      %v824 = vxor.u32 %v823, 2147483648
      %v825 = vmul.f32 %v824, 1.442695
      %v826 = vpow.pop %v825
      %v827 = vadd.f32 %v826, 1.0
      %v828 = vrcp.pop %v827
      %v829 = vmul.f32 %v827, %v828
      %v830 = vsub.f32 1.0, %v829
      %v831 = vmul.f32 %v828, %v830
      %v832 = vadd.f32 %v828, %v831
      %vm833 = vweird.f32 %v827
      %vm834 = vweird.f32 %v828
      %vm835 = vmor %vm833, %vm834
      %v836 = vsel %vm835, %v828, %v832
      %v837 = vand.u32 2147483647, %v827
      %vm838 = vcmp.eq.f32.partialorder %v837, 8.507059e+37
      %v839 = vand.u32 %v827, 2147483648
      %v840 = vor.u32 1.1754944e-38, %v839
      %v841 = vsel %vm838, %v840, %v836
      %v842 = vmul.f32 1.0, %v841
      %v843 = vtanh.pop %v823
      %v844 = vmul.f32 %v842, %v789
      %846 = vrot.lane.b32.xlu0 %v843, 32
      %v847 = vpop.permute.xlu0 %846
      %v849 = vmul.f32 %v842, %v847
      %851 = vrot.lane.b32.xlu0 %v849, 32
      %v852 = vpop.permute.xlu0 %851
      %v854 = vadd.f32 %v844, %v852
      %v855 = vtanh.pop %v854
      %857 = vrot.lane.b32.xlu0 %v855, 32
      %v858 = vpop.permute.xlu0 %857
      %v860 = vmul.f32 %v842, %v858
      %862 = vrot.lane.b32.xlu0 %v860, 64
      %v863 = vpop.permute.xlu0 %862
      %865 = vst.msk [vmem:[#allocation2 + $0x28] sm:$0xff] %vm361, %v863
      %v866 = vsel %vm361, %v863, 0
      %868 = vmatpush.msra.mxu0 0.0
      %869 = vmatpush.msra.mxu0 0.0
      %870 = vmatpush.msra.mxu0 0.0
      %871 = vmatpush.msra.mxu0 0.0
      %872 = vmatpush.msra.mxu0 0.0
      %873 = vmatpush.msra.mxu0 0.0
      %874 = vmatpush.msra.mxu0 0.0
      %875 = vmatpush.msra.mxu0 0.0
      %876 = vmatpush.msra.mxu0 0.0
      %877 = vmatpush.msra.mxu0 0.0
      %878 = vmatpush.msra.mxu0 0.0
      %879 = vmatpush.msra.mxu0 0.0
      %880 = vmatpush.msra.mxu0 %v356
      %881 = vmatpush.msra.mxu0 %v355
      %882 = vmatpush.msra.mxu0 %v354
      %883 = vmatpush.msra.mxu0 %v353
      %884 = vmatmul.f32.gmra.mxu0 %v866
      %v885 = vpop.f32.mrf.mxu0
      %v886 = vadd.f32 0.0, %v885
      %887 = vdwg.mxu0
      %v888 = vadd.f32 %v446, %v886
      %v889 = vxor.u32 %v888, 2147483648
      %v890 = vmul.f32 %v889, 1.442695
      %v891 = vpow.pop %v890
      %v892 = vadd.f32 %v891, 1.0
      %v893 = vrcp.pop %v892
      %v894 = vmul.f32 %v892, %v893
      %v895 = vsub.f32 1.0, %v894
      %v896 = vmul.f32 %v893, %v895
      %v897 = vadd.f32 %v893, %v896
      %vm898 = vweird.f32 %v892
      %vm899 = vweird.f32 %v893
      %vm900 = vmor %vm898, %vm899
      %v901 = vsel %vm900, %v893, %v897
      %v902 = vand.u32 2147483647, %v892
      %vm903 = vcmp.eq.f32.partialorder %v902, 8.507059e+37
      %v904 = vand.u32 %v892, 2147483648
      %v905 = vor.u32 1.1754944e-38, %v904
      %v906 = vsel %vm903, %v905, %v901
      %v907 = vmul.f32 1.0, %v906
      %v908 = vtanh.pop %v888
      %v909 = vmul.f32 %v907, %v854
      %911 = vrot.lane.b32.xlu0 %v908, 32
      %v912 = vpop.permute.xlu0 %911
      %v914 = vmul.f32 %v907, %v912
      %916 = vrot.lane.b32.xlu0 %v914, 32
      %v917 = vpop.permute.xlu0 %916
      %v919 = vadd.f32 %v909, %v917
      %v920 = vtanh.pop %v919
      %922 = vrot.lane.b32.xlu0 %v920, 32
      %v923 = vpop.permute.xlu0 %922
      %v925 = vmul.f32 %v907, %v923
      %927 = vrot.lane.b32.xlu0 %v925, 64
      %v928 = vpop.permute.xlu0 %927
      %930 = vst.msk [vmem:[#allocation2 + $0x30] sm:$0xff] %vm361, %v928
      %v931 = vsel %vm361, %v928, 0
      %933 = vmatpush.msra.mxu0 0.0
      %934 = vmatpush.msra.mxu0 0.0
      %935 = vmatpush.msra.mxu0 0.0
      %936 = vmatpush.msra.mxu0 0.0
      %937 = vmatpush.msra.mxu0 0.0
      %938 = vmatpush.msra.mxu0 0.0
      %939 = vmatpush.msra.mxu0 0.0
      %940 = vmatpush.msra.mxu0 0.0
      %941 = vmatpush.msra.mxu0 0.0
      %942 = vmatpush.msra.mxu0 0.0
      %943 = vmatpush.msra.mxu0 0.0
      %944 = vmatpush.msra.mxu0 0.0
      %945 = vmatpush.msra.mxu0 %v356
      %946 = vmatpush.msra.mxu0 %v355
      %947 = vmatpush.msra.mxu0 %v354
      %948 = vmatpush.msra.mxu0 %v353
      %949 = vmatmul.f32.gmra.mxu0 %v931
      %v950 = vpop.f32.mrf.mxu0
      %v951 = vadd.f32 0.0, %v950
      %952 = vdwg.mxu0
      %v953 = vadd.f32 %v449, %v951
      %v954 = vxor.u32 %v953, 2147483648
      %v955 = vmul.f32 %v954, 1.442695
      %v956 = vpow.pop %v955
      %v957 = vadd.f32 %v956, 1.0
      %v958 = vrcp.pop %v957
      %v959 = vmul.f32 %v957, %v958
      %v960 = vsub.f32 1.0, %v959
      %v961 = vmul.f32 %v958, %v960
      %v962 = vadd.f32 %v958, %v961
      %vm963 = vweird.f32 %v957
      %vm964 = vweird.f32 %v958
      %vm965 = vmor %vm963, %vm964
      %v966 = vsel %vm965, %v958, %v962
      %v967 = vand.u32 2147483647, %v957
      %vm968 = vcmp.eq.f32.partialorder %v967, 8.507059e+37
      %v969 = vand.u32 %v957, 2147483648
      %v970 = vor.u32 1.1754944e-38, %v969
      %v971 = vsel %vm968, %v970, %v966
      %v972 = vmul.f32 1.0, %v971
      %v973 = vtanh.pop %v953
      %v974 = vmul.f32 %v972, %v919
      %976 = vrot.lane.b32.xlu0 %v973, 32
      %v977 = vpop.permute.xlu0 %976
      %v979 = vmul.f32 %v972, %v977
      %981 = vrot.lane.b32.xlu0 %v979, 32
      %v982 = vpop.permute.xlu0 %981
      %v984 = vadd.f32 %v974, %v982
      %v985 = vtanh.pop %v984
      %987 = vrot.lane.b32.xlu0 %v985, 32
      %v988 = vpop.permute.xlu0 %987
      %v990 = vmul.f32 %v972, %v988
      %992 = vrot.lane.b32.xlu0 %v990, 64
      %v993 = vpop.permute.xlu0 %992
      %995 = vst.msk [vmem:[#allocation2 + $0x38] sm:$0xff] %vm361, %v993
      %v996 = vsel %vm361, %v993, 0
      %998 = vmatpush.msra.mxu0 0.0
      %999 = vmatpush.msra.mxu0 0.0
      %1000 = vmatpush.msra.mxu0 0.0
      %1001 = vmatpush.msra.mxu0 0.0
      %1002 = vmatpush.msra.mxu0 0.0
      %1003 = vmatpush.msra.mxu0 0.0
      %1004 = vmatpush.msra.mxu0 0.0
      %1005 = vmatpush.msra.mxu0 0.0
      %1006 = vmatpush.msra.mxu0 0.0
      %1007 = vmatpush.msra.mxu0 0.0
      %1008 = vmatpush.msra.mxu0 0.0
      %1009 = vmatpush.msra.mxu0 0.0
      %1010 = vmatpush.msra.mxu0 %v356
      %1011 = vmatpush.msra.mxu0 %v355
      %1012 = vmatpush.msra.mxu0 %v354
      %1013 = vmatpush.msra.mxu0 %v353
      %1014 = vmatmul.f32.gmra.mxu0 %v996
      %v1015 = vpop.f32.mrf.mxu0
      %v1016 = vadd.f32 0.0, %v1015
      %1017 = vdwg.mxu0
      %v1018 = vadd.f32 %v452, %v1016
      %v1019 = vxor.u32 %v1018, 2147483648
      %v1020 = vmul.f32 %v1019, 1.442695
      %v1021 = vpow.pop %v1020
      %v1022 = vadd.f32 %v1021, 1.0
      %v1023 = vrcp.pop %v1022
      %v1024 = vmul.f32 %v1022, %v1023
      %v1025 = vsub.f32 1.0, %v1024
      %v1026 = vmul.f32 %v1023, %v1025
      %v1027 = vadd.f32 %v1023, %v1026
      %vm1028 = vweird.f32 %v1022
      %vm1029 = vweird.f32 %v1023
      %vm1030 = vmor %vm1028, %vm1029
      %v1031 = vsel %vm1030, %v1023, %v1027
      %v1032 = vand.u32 2147483647, %v1022
      %vm1033 = vcmp.eq.f32.partialorder %v1032, 8.507059e+37
      %v1034 = vand.u32 %v1022, 2147483648
      %v1035 = vor.u32 1.1754944e-38, %v1034
      %v1036 = vsel %vm1033, %v1035, %v1031
      %v1037 = vmul.f32 1.0, %v1036
      %v1038 = vtanh.pop %v1018
      %v1039 = vmul.f32 %v1037, %v984
      %1041 = vrot.lane.b32.xlu0 %v1038, 32
      %v1042 = vpop.permute.xlu0 %1041
      %v1044 = vmul.f32 %v1037, %v1042
      %1046 = vrot.lane.b32.xlu0 %v1044, 32
      %v1047 = vpop.permute.xlu0 %1046
      %v1049 = vadd.f32 %v1039, %v1047
      %v1050 = vtanh.pop %v1049
      %1052 = vrot.lane.b32.xlu0 %v1050, 32
      %v1053 = vpop.permute.xlu0 %1052
      %v1055 = vmul.f32 %v1037, %v1053
      %1057 = vrot.lane.b32.xlu0 %v1055, 64
      %v1058 = vpop.permute.xlu0 %1057
      %1060 = vst.msk [vmem:[#allocation2 + $0x40] sm:$0xff] %vm361, %v1058
      %v1061 = vsel %vm361, %v1058, 0
      %1063 = vmatpush.msra.mxu0 0.0
      %1064 = vmatpush.msra.mxu0 0.0
      %1065 = vmatpush.msra.mxu0 0.0
      %1066 = vmatpush.msra.mxu0 0.0
      %1067 = vmatpush.msra.mxu0 0.0
      %1068 = vmatpush.msra.mxu0 0.0
      %1069 = vmatpush.msra.mxu0 0.0
      %1070 = vmatpush.msra.mxu0 0.0
      %1071 = vmatpush.msra.mxu0 0.0
      %1072 = vmatpush.msra.mxu0 0.0
      %1073 = vmatpush.msra.mxu0 0.0
      %1074 = vmatpush.msra.mxu0 0.0
      %1075 = vmatpush.msra.mxu0 %v356
      %1076 = vmatpush.msra.mxu0 %v355
      %1077 = vmatpush.msra.mxu0 %v354
      %1078 = vmatpush.msra.mxu0 %v353
      %1079 = vmatmul.f32.gmra.mxu0 %v1061
      %v1080 = vpop.f32.mrf.mxu0
      %v1081 = vadd.f32 0.0, %v1080
      %1082 = vdwg.mxu0
      %v1083 = vadd.f32 %v455, %v1081
      %v1084 = vxor.u32 %v1083, 2147483648
      %v1085 = vmul.f32 %v1084, 1.442695
      %v1086 = vpow.pop %v1085
      %v1087 = vadd.f32 %v1086, 1.0
      %v1088 = vrcp.pop %v1087
      %v1089 = vmul.f32 %v1087, %v1088
      %v1090 = vsub.f32 1.0, %v1089
      %v1091 = vmul.f32 %v1088, %v1090
      %v1092 = vadd.f32 %v1088, %v1091
      %vm1093 = vweird.f32 %v1087
      %vm1094 = vweird.f32 %v1088
      %vm1095 = vmor %vm1093, %vm1094
      %v1096 = vsel %vm1095, %v1088, %v1092
      %v1097 = vand.u32 2147483647, %v1087
      %vm1098 = vcmp.eq.f32.partialorder %v1097, 8.507059e+37
      %v1099 = vand.u32 %v1087, 2147483648
      %v1100 = vor.u32 1.1754944e-38, %v1099
      %v1101 = vsel %vm1098, %v1100, %v1096
      %v1102 = vmul.f32 1.0, %v1101
      %v1103 = vtanh.pop %v1083
      %v1104 = vmul.f32 %v1102, %v1049
      %1106 = vrot.lane.b32.xlu0 %v1103, 32
      %v1107 = vpop.permute.xlu0 %1106
      %v1109 = vmul.f32 %v1102, %v1107
      %1111 = vrot.lane.b32.xlu0 %v1109, 32
      %v1112 = vpop.permute.xlu0 %1111
      %v1114 = vadd.f32 %v1104, %v1112
      %v1115 = vtanh.pop %v1114
      %1117 = vrot.lane.b32.xlu0 %v1115, 32
      %v1118 = vpop.permute.xlu0 %1117
      %v1120 = vmul.f32 %v1102, %v1118
      %1122 = vrot.lane.b32.xlu0 %v1120, 64
      %v1123 = vpop.permute.xlu0 %1122
      %1125 = vst.msk [vmem:[#allocation2 + $0x48] sm:$0xff] %vm361, %v1123
      %v1126 = vsel %vm361, %v1123, 0
      %1128 = vmatpush.msra.mxu0 0.0
      %1129 = vmatpush.msra.mxu0 0.0
      %1130 = vmatpush.msra.mxu0 0.0
      %1131 = vmatpush.msra.mxu0 0.0
      %1132 = vmatpush.msra.mxu0 0.0
      %1133 = vmatpush.msra.mxu0 0.0
      %1134 = vmatpush.msra.mxu0 0.0
      %1135 = vmatpush.msra.mxu0 0.0
      %1136 = vmatpush.msra.mxu0 0.0
      %1137 = vmatpush.msra.mxu0 0.0
      %1138 = vmatpush.msra.mxu0 0.0
      %1139 = vmatpush.msra.mxu0 0.0
      %1140 = vmatpush.msra.mxu0 %v356
      %1141 = vmatpush.msra.mxu0 %v355
      %1142 = vmatpush.msra.mxu0 %v354
      %1143 = vmatpush.msra.mxu0 %v353
      %1144 = vmatmul.f32.gmra.mxu0 %v1126
      %v1145 = vpop.f32.mrf.mxu0
      %v1146 = vadd.f32 0.0, %v1145
      %1147 = vdwg.mxu0
      %v1148 = vadd.f32 %v458, %v1146
      %v1149 = vxor.u32 %v1148, 2147483648
      %v1150 = vmul.f32 %v1149, 1.442695
      %v1151 = vpow.pop %v1150
      %v1152 = vadd.f32 %v1151, 1.0
      %v1153 = vrcp.pop %v1152
      %v1154 = vmul.f32 %v1152, %v1153
      %v1155 = vsub.f32 1.0, %v1154
      %v1156 = vmul.f32 %v1153, %v1155
      %v1157 = vadd.f32 %v1153, %v1156
      %vm1158 = vweird.f32 %v1152
      %vm1159 = vweird.f32 %v1153
      %vm1160 = vmor %vm1158, %vm1159
      %v1161 = vsel %vm1160, %v1153, %v1157
      %v1162 = vand.u32 2147483647, %v1152
      %vm1163 = vcmp.eq.f32.partialorder %v1162, 8.507059e+37
      %v1164 = vand.u32 %v1152, 2147483648
      %v1165 = vor.u32 1.1754944e-38, %v1164
      %v1166 = vsel %vm1163, %v1165, %v1161
      %v1167 = vmul.f32 1.0, %v1166
      %v1168 = vtanh.pop %v1148
      %v1169 = vmul.f32 %v1167, %v1114
      %1171 = vrot.lane.b32.xlu0 %v1168, 32
      %v1172 = vpop.permute.xlu0 %1171
      %v1174 = vmul.f32 %v1167, %v1172
      %1176 = vrot.lane.b32.xlu0 %v1174, 32
      %v1177 = vpop.permute.xlu0 %1176
      %v1179 = vadd.f32 %v1169, %v1177
      %v1180 = vtanh.pop %v1179
      %1182 = vrot.lane.b32.xlu0 %v1180, 32
      %v1183 = vpop.permute.xlu0 %1182
      %v1185 = vmul.f32 %v1167, %v1183
      %1187 = vrot.lane.b32.xlu0 %v1185, 64
      %v1188 = vpop.permute.xlu0 %1187
      %1190 = vst.msk [vmem:[#allocation2 + $0x50] sm:$0xff] %vm361, %v1188
      %v1191 = vsel %vm361, %v1188, 0
      %1193 = vmatpush.msra.mxu0 0.0
      %1194 = vmatpush.msra.mxu0 0.0
      %1195 = vmatpush.msra.mxu0 0.0
      %1196 = vmatpush.msra.mxu0 0.0
      %1197 = vmatpush.msra.mxu0 0.0
      %1198 = vmatpush.msra.mxu0 0.0
      %1199 = vmatpush.msra.mxu0 0.0
      %1200 = vmatpush.msra.mxu0 0.0
      %1201 = vmatpush.msra.mxu0 0.0
      %1202 = vmatpush.msra.mxu0 0.0
      %1203 = vmatpush.msra.mxu0 0.0
      %1204 = vmatpush.msra.mxu0 0.0
      %1205 = vmatpush.msra.mxu0 %v356
      %1206 = vmatpush.msra.mxu0 %v355
      %1207 = vmatpush.msra.mxu0 %v354
      %1208 = vmatpush.msra.mxu0 %v353
      %1209 = vmatmul.f32.gmra.mxu0 %v1191
      %v1210 = vpop.f32.mrf.mxu0
      %v1211 = vadd.f32 0.0, %v1210
      %1212 = vdwg.mxu0
      %v1213 = vadd.f32 %v461, %v1211
      %v1214 = vxor.u32 %v1213, 2147483648
      %v1215 = vmul.f32 %v1214, 1.442695
      %v1216 = vpow.pop %v1215
      %v1217 = vadd.f32 %v1216, 1.0
      %v1218 = vrcp.pop %v1217
      %v1219 = vmul.f32 %v1217, %v1218
      %v1220 = vsub.f32 1.0, %v1219
      %v1221 = vmul.f32 %v1218, %v1220
      %v1222 = vadd.f32 %v1218, %v1221
      %vm1223 = vweird.f32 %v1217
      %vm1224 = vweird.f32 %v1218
      %vm1225 = vmor %vm1223, %vm1224
      %v1226 = vsel %vm1225, %v1218, %v1222
      %v1227 = vand.u32 2147483647, %v1217
      %vm1228 = vcmp.eq.f32.partialorder %v1227, 8.507059e+37
      %v1229 = vand.u32 %v1217, 2147483648
      %v1230 = vor.u32 1.1754944e-38, %v1229
      %v1231 = vsel %vm1228, %v1230, %v1226
      %v1232 = vmul.f32 1.0, %v1231
      %v1233 = vtanh.pop %v1213
      %v1234 = vmul.f32 %v1232, %v1179
      %1236 = vrot.lane.b32.xlu0 %v1233, 32
      %v1237 = vpop.permute.xlu0 %1236
      %v1239 = vmul.f32 %v1232, %v1237
      %1241 = vrot.lane.b32.xlu0 %v1239, 32
      %v1242 = vpop.permute.xlu0 %1241
      %v1244 = vadd.f32 %v1234, %v1242
      %v1245 = vtanh.pop %v1244
      %1247 = vrot.lane.b32.xlu0 %v1245, 32
      %v1248 = vpop.permute.xlu0 %1247
      %v1250 = vmul.f32 %v1232, %v1248
      %1252 = vrot.lane.b32.xlu0 %v1250, 64
      %v1253 = vpop.permute.xlu0 %1252
      %1255 = vst.msk [vmem:[#allocation2 + $0x58] sm:$0xff] %vm361, %v1253
      %v1256 = vsel %vm361, %v1253, 0
      %1258 = vmatpush.msra.mxu0 0.0
      %1259 = vmatpush.msra.mxu0 0.0
      %1260 = vmatpush.msra.mxu0 0.0
      %1261 = vmatpush.msra.mxu0 0.0
      %1262 = vmatpush.msra.mxu0 0.0
      %1263 = vmatpush.msra.mxu0 0.0
      %1264 = vmatpush.msra.mxu0 0.0
      %1265 = vmatpush.msra.mxu0 0.0
      %1266 = vmatpush.msra.mxu0 0.0
      %1267 = vmatpush.msra.mxu0 0.0
      %1268 = vmatpush.msra.mxu0 0.0
      %1269 = vmatpush.msra.mxu0 0.0
      %1270 = vmatpush.msra.mxu0 %v356
      %1271 = vmatpush.msra.mxu0 %v355
      %1272 = vmatpush.msra.mxu0 %v354
      %1273 = vmatpush.msra.mxu0 %v353
      %1274 = vmatmul.f32.gmra.mxu0 %v1256
      %v1275 = vpop.f32.mrf.mxu0
      %v1276 = vadd.f32 0.0, %v1275
      %1277 = vdwg.mxu0
      %v1278 = vadd.f32 %v464, %v1276
      %v1279 = vxor.u32 %v1278, 2147483648
      %v1280 = vmul.f32 %v1279, 1.442695
      %v1281 = vpow.pop %v1280
      %v1282 = vadd.f32 %v1281, 1.0
      %v1283 = vrcp.pop %v1282
      %v1284 = vmul.f32 %v1282, %v1283
      %v1285 = vsub.f32 1.0, %v1284
      %v1286 = vmul.f32 %v1283, %v1285
      %v1287 = vadd.f32 %v1283, %v1286
      %vm1288 = vweird.f32 %v1282
      %vm1289 = vweird.f32 %v1283
      %vm1290 = vmor %vm1288, %vm1289
      %v1291 = vsel %vm1290, %v1283, %v1287
      %v1292 = vand.u32 2147483647, %v1282
      %vm1293 = vcmp.eq.f32.partialorder %v1292, 8.507059e+37
      %v1294 = vand.u32 %v1282, 2147483648
      %v1295 = vor.u32 1.1754944e-38, %v1294
      %v1296 = vsel %vm1293, %v1295, %v1291
      %v1297 = vmul.f32 1.0, %v1296
      %v1298 = vtanh.pop %v1278
      %v1299 = vmul.f32 %v1297, %v1244
      %1301 = vrot.lane.b32.xlu0 %v1298, 32
      %v1302 = vpop.permute.xlu0 %1301
      %v1304 = vmul.f32 %v1297, %v1302
      %1306 = vrot.lane.b32.xlu0 %v1304, 32
      %v1307 = vpop.permute.xlu0 %1306
      %v1309 = vadd.f32 %v1299, %v1307
      %v1310 = vtanh.pop %v1309
      %1312 = vrot.lane.b32.xlu0 %v1310, 32
      %v1313 = vpop.permute.xlu0 %1312
      %v1315 = vmul.f32 %v1297, %v1313
      %1317 = vrot.lane.b32.xlu0 %v1315, 64
      %v1318 = vpop.permute.xlu0 %1317
      %1320 = vst.msk [vmem:[#allocation2 + $0x60] sm:$0xff] %vm361, %v1318
      %v1321 = vsel %vm361, %v1318, 0
      %1323 = vmatpush.msra.mxu0 0.0
      %1324 = vmatpush.msra.mxu0 0.0
      %1325 = vmatpush.msra.mxu0 0.0
      %1326 = vmatpush.msra.mxu0 0.0
      %1327 = vmatpush.msra.mxu0 0.0
      %1328 = vmatpush.msra.mxu0 0.0
      %1329 = vmatpush.msra.mxu0 0.0
      %1330 = vmatpush.msra.mxu0 0.0
      %1331 = vmatpush.msra.mxu0 0.0
      %1332 = vmatpush.msra.mxu0 0.0
      %1333 = vmatpush.msra.mxu0 0.0
      %1334 = vmatpush.msra.mxu0 0.0
      %1335 = vmatpush.msra.mxu0 %v356
      %1336 = vmatpush.msra.mxu0 %v355
      %1337 = vmatpush.msra.mxu0 %v354
      %1338 = vmatpush.msra.mxu0 %v353
      %1339 = vmatmul.f32.gmra.mxu0 %v1321
      %v1340 = vpop.f32.mrf.mxu0
      %v1341 = vadd.f32 0.0, %v1340
      %1342 = vdwg.mxu0
      %v1343 = vadd.f32 %v467, %v1341
      %v1344 = vxor.u32 %v1343, 2147483648
      %v1345 = vmul.f32 %v1344, 1.442695
      %v1346 = vpow.pop %v1345
      %v1347 = vadd.f32 %v1346, 1.0
      %v1348 = vrcp.pop %v1347
      %v1349 = vmul.f32 %v1347, %v1348
      %v1350 = vsub.f32 1.0, %v1349
      %v1351 = vmul.f32 %v1348, %v1350
      %v1352 = vadd.f32 %v1348, %v1351
      %vm1353 = vweird.f32 %v1347
      %vm1354 = vweird.f32 %v1348
      %vm1355 = vmor %vm1353, %vm1354
      %v1356 = vsel %vm1355, %v1348, %v1352
      %v1357 = vand.u32 2147483647, %v1347
      %vm1358 = vcmp.eq.f32.partialorder %v1357, 8.507059e+37
      %v1359 = vand.u32 %v1347, 2147483648
      %v1360 = vor.u32 1.1754944e-38, %v1359
      %v1361 = vsel %vm1358, %v1360, %v1356
      %v1362 = vmul.f32 1.0, %v1361
      %v1363 = vtanh.pop %v1343
      %v1364 = vmul.f32 %v1362, %v1309
      %1366 = vrot.lane.b32.xlu0 %v1363, 32
      %v1367 = vpop.permute.xlu0 %1366
      %v1369 = vmul.f32 %v1362, %v1367
      %1371 = vrot.lane.b32.xlu0 %v1369, 32
      %v1372 = vpop.permute.xlu0 %1371
      %v1374 = vadd.f32 %v1364, %v1372
      %v1375 = vtanh.pop %v1374
      %1377 = vrot.lane.b32.xlu0 %v1375, 32
      %v1378 = vpop.permute.xlu0 %1377
      %v1380 = vmul.f32 %v1362, %v1378
      %1382 = vrot.lane.b32.xlu0 %v1380, 64
      %v1383 = vpop.permute.xlu0 %1382
      %1385 = vst.msk [vmem:[#allocation2 + $0x68] sm:$0xff] %vm361, %v1383
      %v1386 = vsel %vm361, %v1383, 0
      %1388 = vmatpush.msra.mxu0 0.0
      %1389 = vmatpush.msra.mxu0 0.0
      %1390 = vmatpush.msra.mxu0 0.0
      %1391 = vmatpush.msra.mxu0 0.0
      %1392 = vmatpush.msra.mxu0 0.0
      %1393 = vmatpush.msra.mxu0 0.0
      %1394 = vmatpush.msra.mxu0 0.0
      %1395 = vmatpush.msra.mxu0 0.0
      %1396 = vmatpush.msra.mxu0 0.0
      %1397 = vmatpush.msra.mxu0 0.0
      %1398 = vmatpush.msra.mxu0 0.0
      %1399 = vmatpush.msra.mxu0 0.0
      %1400 = vmatpush.msra.mxu0 %v356
      %1401 = vmatpush.msra.mxu0 %v355
      %1402 = vmatpush.msra.mxu0 %v354
      %1403 = vmatpush.msra.mxu0 %v353
      %1404 = vmatmul.f32.gmra.mxu0 %v1386
      %v1405 = vpop.f32.mrf.mxu0
      %v1406 = vadd.f32 0.0, %v1405
      %1407 = vdwg.mxu0
      %v1408 = vadd.f32 %v470, %v1406
      %v1409 = vxor.u32 %v1408, 2147483648
      %v1410 = vmul.f32 %v1409, 1.442695
      %v1411 = vpow.pop %v1410
      %v1412 = vadd.f32 %v1411, 1.0
      %v1413 = vrcp.pop %v1412
      %v1414 = vmul.f32 %v1412, %v1413
      %v1415 = vsub.f32 1.0, %v1414
      %v1416 = vmul.f32 %v1413, %v1415
      %v1417 = vadd.f32 %v1413, %v1416
      %vm1418 = vweird.f32 %v1412
      %vm1419 = vweird.f32 %v1413
      %vm1420 = vmor %vm1418, %vm1419
      %v1421 = vsel %vm1420, %v1413, %v1417
      %v1422 = vand.u32 2147483647, %v1412
      %vm1423 = vcmp.eq.f32.partialorder %v1422, 8.507059e+37
      %v1424 = vand.u32 %v1412, 2147483648
      %v1425 = vor.u32 1.1754944e-38, %v1424
      %v1426 = vsel %vm1423, %v1425, %v1421
      %v1427 = vmul.f32 1.0, %v1426
      %v1428 = vtanh.pop %v1408
      %v1429 = vmul.f32 %v1427, %v1374
      %1431 = vrot.lane.b32.xlu0 %v1428, 32
      %v1432 = vpop.permute.xlu0 %1431
      %v1434 = vmul.f32 %v1427, %v1432
      %1436 = vrot.lane.b32.xlu0 %v1434, 32
      %v1437 = vpop.permute.xlu0 %1436
      %v1439 = vadd.f32 %v1429, %v1437
      %v1440 = vtanh.pop %v1439
      %1442 = vrot.lane.b32.xlu0 %v1440, 32
      %v1443 = vpop.permute.xlu0 %1442
      %v1445 = vmul.f32 %v1427, %v1443
      %1447 = vrot.lane.b32.xlu0 %v1445, 64
      %v1448 = vpop.permute.xlu0 %1447
      %1450 = vst.msk [vmem:[#allocation2 + $0x70] sm:$0xff] %vm361, %v1448
      %v1451 = vsel %vm361, %v1448, 0
      %1453 = vmatpush.msra.mxu0 0.0
      %1454 = vmatpush.msra.mxu0 0.0
      %1455 = vmatpush.msra.mxu0 0.0
      %1456 = vmatpush.msra.mxu0 0.0
      %1457 = vmatpush.msra.mxu0 0.0
      %1458 = vmatpush.msra.mxu0 0.0
      %1459 = vmatpush.msra.mxu0 0.0
      %1460 = vmatpush.msra.mxu0 0.0
      %1461 = vmatpush.msra.mxu0 0.0
      %1462 = vmatpush.msra.mxu0 0.0
      %1463 = vmatpush.msra.mxu0 0.0
      %1464 = vmatpush.msra.mxu0 0.0
      %1465 = vmatpush.msra.mxu0 %v356
      %1466 = vmatpush.msra.mxu0 %v355
      %1467 = vmatpush.msra.mxu0 %v354
      %1468 = vmatpush.msra.mxu0 %v353
      %1469 = vmatmul.f32.gmra.mxu0 %v1451
      %v1470 = vpop.f32.mrf.mxu0
      %v1471 = vadd.f32 0.0, %v1470
      %1472 = vdwg.mxu0
      %v1473 = vadd.f32 %v473, %v1471
      %v1474 = vxor.u32 %v1473, 2147483648
      %v1475 = vmul.f32 %v1474, 1.442695
      %v1476 = vpow.pop %v1475
      %v1477 = vadd.f32 %v1476, 1.0
      %v1478 = vrcp.pop %v1477
      %v1479 = vmul.f32 %v1477, %v1478
      %v1480 = vsub.f32 1.0, %v1479
      %v1481 = vmul.f32 %v1478, %v1480
      %v1482 = vadd.f32 %v1478, %v1481
      %vm1483 = vweird.f32 %v1477
      %vm1484 = vweird.f32 %v1478
      %vm1485 = vmor %vm1483, %vm1484
      %v1486 = vsel %vm1485, %v1478, %v1482
      %v1487 = vand.u32 2147483647, %v1477
      %vm1488 = vcmp.eq.f32.partialorder %v1487, 8.507059e+37
      %v1489 = vand.u32 %v1477, 2147483648
      %v1490 = vor.u32 1.1754944e-38, %v1489
      %v1491 = vsel %vm1488, %v1490, %v1486
      %v1492 = vmul.f32 1.0, %v1491
      %v1493 = vtanh.pop %v1473
      %v1494 = vmul.f32 %v1492, %v1439
      %1496 = vrot.lane.b32.xlu0 %v1493, 32
      %v1497 = vpop.permute.xlu0 %1496
      %v1499 = vmul.f32 %v1492, %v1497
      %1501 = vrot.lane.b32.xlu0 %v1499, 32
      %v1502 = vpop.permute.xlu0 %1501
      %v1504 = vadd.f32 %v1494, %v1502
      %v1505 = vtanh.pop %v1504
      %1507 = vrot.lane.b32.xlu0 %v1505, 32
      %v1508 = vpop.permute.xlu0 %1507
      %v1510 = vmul.f32 %v1492, %v1508
      %1512 = vrot.lane.b32.xlu0 %v1510, 64
      %v1513 = vpop.permute.xlu0 %1512
      %1515 = vst.msk [vmem:[#allocation2 + $0x78] sm:$0xff] %vm361, %v1513
      %v1516 = vld [vmem:[#allocation2] sm:$0xff]
      %v1517 = vld [vmem:[#allocation2 + $0x8] sm:$0xff]
      %v1518 = vld [vmem:[#allocation2 + $0x10] sm:$0xff]
      %v1519 = vld [vmem:[#allocation2 + $0x18] sm:$0xff]
      %v1520 = vld [vmem:[#allocation2 + $0x20] sm:$0xff]
      %v1521 = vld [vmem:[#allocation2 + $0x28] sm:$0xff]
      %v1522 = vld [vmem:[#allocation2 + $0x30] sm:$0xff]
      %v1523 = vld [vmem:[#allocation2 + $0x38] sm:$0xff]
      %v1524 = vld [vmem:[#allocation2 + $0x40] sm:$0xff]
      %v1525 = vld [vmem:[#allocation2 + $0x48] sm:$0xff]
      %v1526 = vld [vmem:[#allocation2 + $0x50] sm:$0xff]
      %v1527 = vld [vmem:[#allocation2 + $0x58] sm:$0xff]
      %v1528 = vld [vmem:[#allocation2 + $0x60] sm:$0xff]
      %v1529 = vld [vmem:[#allocation2 + $0x68] sm:$0xff]
      %v1530 = vld [vmem:[#allocation2 + $0x70] sm:$0xff]
      %v1531 = vld [vmem:[#allocation2 + $0x78] sm:$0xff]
      %v1532 = vld [vmem:[%s4] sm:$0xff]
      %v1533 = vld [vmem:[%s4 + $0x8] sm:$0xff]
      %v1534 = vld [vmem:[%s4 + $0x10] sm:$0xff]
      %v1535 = vld [vmem:[%s4 + $0x18] sm:$0xff]
      %v1536 = vld [vmem:[%s5] sm:$0xff]
      %v1537 = vld [vmem:[%s5 + $0x8] sm:$0xff]
      %v1538 = vld [vmem:[%s5 + $0x10] sm:$0xff]
      %v1539 = vld [vmem:[%s5 + $0x18] sm:$0xff]
      %v1540 = vld [vmem:[%s6] sm:$0x1]
      %v1542 = vperm.slane %v1540, 0
      %v1545 = vsel %vm361, %v1516, 0
      %v1548 = vsel %vm361, %v1517, 0
      %v1551 = vsel %vm361, %v1518, 0
      %v1554 = vsel %vm361, %v1519, 0
      %v1557 = vsel %vm361, %v1520, 0
      %v1560 = vsel %vm361, %v1521, 0
      %v1563 = vsel %vm361, %v1522, 0
      %v1566 = vsel %vm361, %v1523, 0
      %v1569 = vsel %vm361, %v1524, 0
      %v1572 = vsel %vm361, %v1525, 0
      %v1575 = vsel %vm361, %v1526, 0
      %v1578 = vsel %vm361, %v1527, 0
      %v1581 = vsel %vm361, %v1528, 0
      %v1584 = vsel %vm361, %v1529, 0
      %v1587 = vsel %vm361, %v1530, 0
      %v1590 = vsel %vm361, %v1531, 0
      %1592 = vmatpush.msra.mxu0 0.0
      %1593 = vmatpush.msra.mxu0 0.0
      %1594 = vmatpush.msra.mxu0 0.0
      %1595 = vmatpush.msra.mxu0 0.0
      %1596 = vmatpush.msra.mxu0 0.0
      %1597 = vmatpush.msra.mxu0 0.0
      %1598 = vmatpush.msra.mxu0 0.0
      %1599 = vmatpush.msra.mxu0 0.0
      %1600 = vmatpush.msra.mxu0 0.0
      %1601 = vmatpush.msra.mxu0 0.0
      %1602 = vmatpush.msra.mxu0 0.0
      %1603 = vmatpush.msra.mxu0 0.0
      %1604 = vmatpush.msra.mxu0 %v1535
      %1605 = vmatpush.msra.mxu0 %v1534
      %1606 = vmatpush.msra.mxu0 %v1533
      %1607 = vmatpush.msra.mxu0 %v1532
      %1608 = vmatmul.f32.gmra.mxu0 %v1545
      %v1609 = vpop.f32.mrf.mxu0
      %v1610 = vadd.f32 %v1542, %v1609
      %1611 = vmatmul.f32.gmra.mxu0 %v1548
      %v1612 = vpop.f32.mrf.mxu0
      %v1613 = vadd.f32 %v1542, %v1612
      %1614 = vmatmul.f32.gmra.mxu0 %v1551
      %v1615 = vpop.f32.mrf.mxu0
      %v1616 = vadd.f32 %v1542, %v1615
      %1617 = vmatmul.f32.gmra.mxu0 %v1554
      %v1618 = vpop.f32.mrf.mxu0
      %v1619 = vadd.f32 %v1542, %v1618
      %1620 = vmatmul.f32.gmra.mxu0 %v1557
      %v1621 = vpop.f32.mrf.mxu0
      %v1622 = vadd.f32 %v1542, %v1621
      %1623 = vmatmul.f32.gmra.mxu0 %v1560
      %v1624 = vpop.f32.mrf.mxu0
      %v1625 = vadd.f32 %v1542, %v1624
      %1626 = vmatmul.f32.gmra.mxu0 %v1563
      %v1627 = vpop.f32.mrf.mxu0
      %v1628 = vadd.f32 %v1542, %v1627
      %1629 = vmatmul.f32.gmra.mxu0 %v1566
      %v1630 = vpop.f32.mrf.mxu0
      %v1631 = vadd.f32 %v1542, %v1630
      %1632 = vmatmul.f32.gmra.mxu0 %v1569
      %v1633 = vpop.f32.mrf.mxu0
      %v1634 = vadd.f32 %v1542, %v1633
      %1635 = vmatmul.f32.gmra.mxu0 %v1572
      %v1636 = vpop.f32.mrf.mxu0
      %v1637 = vadd.f32 %v1542, %v1636
      %1638 = vmatmul.f32.gmra.mxu0 %v1575
      %v1639 = vpop.f32.mrf.mxu0
      %v1640 = vadd.f32 %v1542, %v1639
      %1641 = vmatmul.f32.gmra.mxu0 %v1578
      %v1642 = vpop.f32.mrf.mxu0
      %v1643 = vadd.f32 %v1542, %v1642
      %1644 = vmatmul.f32.gmra.mxu0 %v1581
      %v1645 = vpop.f32.mrf.mxu0
      %v1646 = vadd.f32 %v1542, %v1645
      %1647 = vmatmul.f32.gmra.mxu0 %v1584
      %v1648 = vpop.f32.mrf.mxu0
      %v1649 = vadd.f32 %v1542, %v1648
      %1650 = vmatmul.f32.gmra.mxu0 %v1587
      %v1651 = vpop.f32.mrf.mxu0
      %v1652 = vadd.f32 %v1542, %v1651
      %1653 = vmatmul.f32.gmra.mxu0 %v1590
      %v1654 = vpop.f32.mrf.mxu0
      %v1655 = vadd.f32 %v1542, %v1654
      %1656 = vdwg.mxu0
      %1657 = vmatpush.msra.mxu0 0.0
      %1658 = vmatpush.msra.mxu0 0.0
      %1659 = vmatpush.msra.mxu0 0.0
      %1660 = vmatpush.msra.mxu0 0.0
      %1661 = vmatpush.msra.mxu0 0.0
      %1662 = vmatpush.msra.mxu0 0.0
      %1663 = vmatpush.msra.mxu0 0.0
      %1664 = vmatpush.msra.mxu0 0.0
      %1665 = vmatpush.msra.mxu0 0.0
      %1666 = vmatpush.msra.mxu0 0.0
      %1667 = vmatpush.msra.mxu0 0.0
      %1668 = vmatpush.msra.mxu0 0.0
      %1669 = vmatpush.msra.mxu0 %v1539
      %1670 = vmatpush.msra.mxu0 %v1538
      %1671 = vmatpush.msra.mxu0 %v1537
      %1672 = vmatpush.msra.mxu0 %v1536
      %1673 = vmatmul.f32.gmra.mxu0 %v476
      %v1674 = vpop.f32.mrf.mxu0
      %v1675 = vadd.f32 0.0, %v1674
      %1676 = vdwg.mxu0
      %v1677 = vadd.f32 %v1610, %v1675
      %v1678 = vxor.u32 %v1677, 2147483648
      %v1679 = vmul.f32 %v1678, 1.442695
      %v1680 = vpow.pop %v1679
      %v1681 = vadd.f32 %v1680, 1.0
      %v1682 = vrcp.pop %v1681
      %v1683 = vmul.f32 %v1681, %v1682
      %v1684 = vsub.f32 1.0, %v1683
      %v1685 = vmul.f32 %v1682, %v1684
      %v1686 = vadd.f32 %v1682, %v1685
      %vm1687 = vweird.f32 %v1681
      %vm1688 = vweird.f32 %v1682
      %vm1689 = vmor %vm1687, %vm1688
      %v1690 = vsel %vm1689, %v1682, %v1686
      %v1691 = vand.u32 2147483647, %v1681
      %vm1692 = vcmp.eq.f32.partialorder %v1691, 8.507059e+37
      %v1693 = vand.u32 %v1681, 2147483648
      %v1694 = vor.u32 1.1754944e-38, %v1693
      %v1695 = vsel %vm1692, %v1694, %v1690
      %v1696 = vmul.f32 1.0, %v1695
      %v1697 = vtanh.pop %v1677
      %v1698 = vmul.f32 %v1696, 0.0
      %1700 = vrot.lane.b32.xlu0 %v1697, 32
      %v1701 = vpop.permute.xlu0 %1700
      %v1703 = vmul.f32 %v1696, %v1701
      %1705 = vrot.lane.b32.xlu0 %v1703, 32
      %v1706 = vpop.permute.xlu0 %1705
      %v1708 = vadd.f32 %v1698, %v1706
      %v1709 = vtanh.pop %v1708
      %1711 = vrot.lane.b32.xlu0 %v1709, 32
      %v1712 = vpop.permute.xlu0 %1711
      %v1714 = vmul.f32 %v1696, %v1712
      %1716 = vrot.lane.b32.xlu0 %v1714, 64
      %v1717 = vpop.permute.xlu0 %1716
      %1719 = vst.msk [vmem:[#allocation3] sm:$0xff] %vm361, %v1717
      %v1720 = vsel %vm361, %v1717, 0
      %1722 = vmatpush.msra.mxu0 0.0
      %1723 = vmatpush.msra.mxu0 0.0
      %1724 = vmatpush.msra.mxu0 0.0
      %1725 = vmatpush.msra.mxu0 0.0
      %1726 = vmatpush.msra.mxu0 0.0
      %1727 = vmatpush.msra.mxu0 0.0
      %1728 = vmatpush.msra.mxu0 0.0
      %1729 = vmatpush.msra.mxu0 0.0
      %1730 = vmatpush.msra.mxu0 0.0
      %1731 = vmatpush.msra.mxu0 0.0
      %1732 = vmatpush.msra.mxu0 0.0
      %1733 = vmatpush.msra.mxu0 0.0
      %1734 = vmatpush.msra.mxu0 %v1539
      %1735 = vmatpush.msra.mxu0 %v1538
      %1736 = vmatpush.msra.mxu0 %v1537
      %1737 = vmatpush.msra.mxu0 %v1536
      %1738 = vmatmul.f32.gmra.mxu0 %v1720
      %v1739 = vpop.f32.mrf.mxu0
      %v1740 = vadd.f32 0.0, %v1739
      %1741 = vdwg.mxu0
      %v1742 = vadd.f32 %v1613, %v1740
      %v1743 = vxor.u32 %v1742, 2147483648
      %v1744 = vmul.f32 %v1743, 1.442695
      %v1745 = vpow.pop %v1744
      %v1746 = vadd.f32 %v1745, 1.0
      %v1747 = vrcp.pop %v1746
      %v1748 = vmul.f32 %v1746, %v1747
      %v1749 = vsub.f32 1.0, %v1748
      %v1750 = vmul.f32 %v1747, %v1749
      %v1751 = vadd.f32 %v1747, %v1750
      %vm1752 = vweird.f32 %v1746
      %vm1753 = vweird.f32 %v1747
      %vm1754 = vmor %vm1752, %vm1753
      %v1755 = vsel %vm1754, %v1747, %v1751
      %v1756 = vand.u32 2147483647, %v1746
      %vm1757 = vcmp.eq.f32.partialorder %v1756, 8.507059e+37
      %v1758 = vand.u32 %v1746, 2147483648
      %v1759 = vor.u32 1.1754944e-38, %v1758
      %v1760 = vsel %vm1757, %v1759, %v1755
      %v1761 = vmul.f32 1.0, %v1760
      %v1762 = vtanh.pop %v1742
      %v1763 = vmul.f32 %v1761, %v1708
      %1765 = vrot.lane.b32.xlu0 %v1762, 32
      %v1766 = vpop.permute.xlu0 %1765
      %v1768 = vmul.f32 %v1761, %v1766
      %1770 = vrot.lane.b32.xlu0 %v1768, 32
      %v1771 = vpop.permute.xlu0 %1770
      %v1773 = vadd.f32 %v1763, %v1771
      %v1774 = vtanh.pop %v1773
      %1776 = vrot.lane.b32.xlu0 %v1774, 32
      %v1777 = vpop.permute.xlu0 %1776
      %v1779 = vmul.f32 %v1761, %v1777
      %1781 = vrot.lane.b32.xlu0 %v1779, 64
      %v1782 = vpop.permute.xlu0 %1781
      %1784 = vst.msk [vmem:[#allocation3 + $0x8] sm:$0xff] %vm361, %v1782
      %v1785 = vsel %vm361, %v1782, 0
      %1787 = vmatpush.msra.mxu0 0.0
      %1788 = vmatpush.msra.mxu0 0.0
      %1789 = vmatpush.msra.mxu0 0.0
      %1790 = vmatpush.msra.mxu0 0.0
      %1791 = vmatpush.msra.mxu0 0.0
      %1792 = vmatpush.msra.mxu0 0.0
      %1793 = vmatpush.msra.mxu0 0.0
      %1794 = vmatpush.msra.mxu0 0.0
      %1795 = vmatpush.msra.mxu0 0.0
      %1796 = vmatpush.msra.mxu0 0.0
      %1797 = vmatpush.msra.mxu0 0.0
      %1798 = vmatpush.msra.mxu0 0.0
      %1799 = vmatpush.msra.mxu0 %v1539
      %1800 = vmatpush.msra.mxu0 %v1538
      %1801 = vmatpush.msra.mxu0 %v1537
      %1802 = vmatpush.msra.mxu0 %v1536
      %1803 = vmatmul.f32.gmra.mxu0 %v1785
      %v1804 = vpop.f32.mrf.mxu0
      %v1805 = vadd.f32 0.0, %v1804
      %1806 = vdwg.mxu0
      %v1807 = vadd.f32 %v1616, %v1805
      %v1808 = vxor.u32 %v1807, 2147483648
      %v1809 = vmul.f32 %v1808, 1.442695
      %v1810 = vpow.pop %v1809
      %v1811 = vadd.f32 %v1810, 1.0
      %v1812 = vrcp.pop %v1811
      %v1813 = vmul.f32 %v1811, %v1812
      %v1814 = vsub.f32 1.0, %v1813
      %v1815 = vmul.f32 %v1812, %v1814
      %v1816 = vadd.f32 %v1812, %v1815
      %vm1817 = vweird.f32 %v1811
      %vm1818 = vweird.f32 %v1812
      %vm1819 = vmor %vm1817, %vm1818
      %v1820 = vsel %vm1819, %v1812, %v1816
      %v1821 = vand.u32 2147483647, %v1811
      %vm1822 = vcmp.eq.f32.partialorder %v1821, 8.507059e+37
      %v1823 = vand.u32 %v1811, 2147483648
      %v1824 = vor.u32 1.1754944e-38, %v1823
      %v1825 = vsel %vm1822, %v1824, %v1820
      %v1826 = vmul.f32 1.0, %v1825
      %v1827 = vtanh.pop %v1807
      %v1828 = vmul.f32 %v1826, %v1773
      %1830 = vrot.lane.b32.xlu0 %v1827, 32
      %v1831 = vpop.permute.xlu0 %1830
      %v1833 = vmul.f32 %v1826, %v1831
      %1835 = vrot.lane.b32.xlu0 %v1833, 32
      %v1836 = vpop.permute.xlu0 %1835
      %v1838 = vadd.f32 %v1828, %v1836
      %v1839 = vtanh.pop %v1838
      %1841 = vrot.lane.b32.xlu0 %v1839, 32
      %v1842 = vpop.permute.xlu0 %1841
      %v1844 = vmul.f32 %v1826, %v1842
      %1846 = vrot.lane.b32.xlu0 %v1844, 64
      %v1847 = vpop.permute.xlu0 %1846
      %1849 = vst.msk [vmem:[#allocation3 + $0x10] sm:$0xff] %vm361, %v1847
      %v1850 = vsel %vm361, %v1847, 0
      %1852 = vmatpush.msra.mxu0 0.0
      %1853 = vmatpush.msra.mxu0 0.0
      %1854 = vmatpush.msra.mxu0 0.0
      %1855 = vmatpush.msra.mxu0 0.0
      %1856 = vmatpush.msra.mxu0 0.0
      %1857 = vmatpush.msra.mxu0 0.0
      %1858 = vmatpush.msra.mxu0 0.0
      %1859 = vmatpush.msra.mxu0 0.0
      %1860 = vmatpush.msra.mxu0 0.0
      %1861 = vmatpush.msra.mxu0 0.0
      %1862 = vmatpush.msra.mxu0 0.0
      %1863 = vmatpush.msra.mxu0 0.0
      %1864 = vmatpush.msra.mxu0 %v1539
      %1865 = vmatpush.msra.mxu0 %v1538
      %1866 = vmatpush.msra.mxu0 %v1537
      %1867 = vmatpush.msra.mxu0 %v1536
      %1868 = vmatmul.f32.gmra.mxu0 %v1850
      %v1869 = vpop.f32.mrf.mxu0
      %v1870 = vadd.f32 0.0, %v1869
      %1871 = vdwg.mxu0
      %v1872 = vadd.f32 %v1619, %v1870
      %v1873 = vxor.u32 %v1872, 2147483648
      %v1874 = vmul.f32 %v1873, 1.442695
      %v1875 = vpow.pop %v1874
      %v1876 = vadd.f32 %v1875, 1.0
      %v1877 = vrcp.pop %v1876
      %v1878 = vmul.f32 %v1876, %v1877
      %v1879 = vsub.f32 1.0, %v1878
      %v1880 = vmul.f32 %v1877, %v1879
      %v1881 = vadd.f32 %v1877, %v1880
      %vm1882 = vweird.f32 %v1876
      %vm1883 = vweird.f32 %v1877
      %vm1884 = vmor %vm1882, %vm1883
      %v1885 = vsel %vm1884, %v1877, %v1881
      %v1886 = vand.u32 2147483647, %v1876
      %vm1887 = vcmp.eq.f32.partialorder %v1886, 8.507059e+37
      %v1888 = vand.u32 %v1876, 2147483648
      %v1889 = vor.u32 1.1754944e-38, %v1888
      %v1890 = vsel %vm1887, %v1889, %v1885
      %v1891 = vmul.f32 1.0, %v1890
      %v1892 = vtanh.pop %v1872
      %v1893 = vmul.f32 %v1891, %v1838
      %1895 = vrot.lane.b32.xlu0 %v1892, 32
      %v1896 = vpop.permute.xlu0 %1895
      %v1898 = vmul.f32 %v1891, %v1896
      %1900 = vrot.lane.b32.xlu0 %v1898, 32
      %v1901 = vpop.permute.xlu0 %1900
      %v1903 = vadd.f32 %v1893, %v1901
      %v1904 = vtanh.pop %v1903
      %1906 = vrot.lane.b32.xlu0 %v1904, 32
      %v1907 = vpop.permute.xlu0 %1906
      %v1909 = vmul.f32 %v1891, %v1907
      %1911 = vrot.lane.b32.xlu0 %v1909, 64
      %v1912 = vpop.permute.xlu0 %1911
      %1914 = vst.msk [vmem:[#allocation3 + $0x18] sm:$0xff] %vm361, %v1912
      %v1915 = vsel %vm361, %v1912, 0
      %1917 = vmatpush.msra.mxu0 0.0
      %1918 = vmatpush.msra.mxu0 0.0
      %1919 = vmatpush.msra.mxu0 0.0
      %1920 = vmatpush.msra.mxu0 0.0
      %1921 = vmatpush.msra.mxu0 0.0
      %1922 = vmatpush.msra.mxu0 0.0
      %1923 = vmatpush.msra.mxu0 0.0
      %1924 = vmatpush.msra.mxu0 0.0
      %1925 = vmatpush.msra.mxu0 0.0
      %1926 = vmatpush.msra.mxu0 0.0
      %1927 = vmatpush.msra.mxu0 0.0
      %1928 = vmatpush.msra.mxu0 0.0
      %1929 = vmatpush.msra.mxu0 %v1539
      %1930 = vmatpush.msra.mxu0 %v1538
      %1931 = vmatpush.msra.mxu0 %v1537
      %1932 = vmatpush.msra.mxu0 %v1536
      %1933 = vmatmul.f32.gmra.mxu0 %v1915
      %v1934 = vpop.f32.mrf.mxu0
      %v1935 = vadd.f32 0.0, %v1934
      %1936 = vdwg.mxu0
      %v1937 = vadd.f32 %v1622, %v1935
      %v1938 = vxor.u32 %v1937, 2147483648
      %v1939 = vmul.f32 %v1938, 1.442695
      %v1940 = vpow.pop %v1939
      %v1941 = vadd.f32 %v1940, 1.0
      %v1942 = vrcp.pop %v1941
      %v1943 = vmul.f32 %v1941, %v1942
      %v1944 = vsub.f32 1.0, %v1943
      %v1945 = vmul.f32 %v1942, %v1944
      %v1946 = vadd.f32 %v1942, %v1945
      %vm1947 = vweird.f32 %v1941
      %vm1948 = vweird.f32 %v1942
      %vm1949 = vmor %vm1947, %vm1948
      %v1950 = vsel %vm1949, %v1942, %v1946
      %v1951 = vand.u32 2147483647, %v1941
      %vm1952 = vcmp.eq.f32.partialorder %v1951, 8.507059e+37
      %v1953 = vand.u32 %v1941, 2147483648
      %v1954 = vor.u32 1.1754944e-38, %v1953
      %v1955 = vsel %vm1952, %v1954, %v1950
      %v1956 = vmul.f32 1.0, %v1955
      %v1957 = vtanh.pop %v1937
      %v1958 = vmul.f32 %v1956, %v1903
      %1960 = vrot.lane.b32.xlu0 %v1957, 32
      %v1961 = vpop.permute.xlu0 %1960
      %v1963 = vmul.f32 %v1956, %v1961
      %1965 = vrot.lane.b32.xlu0 %v1963, 32
      %v1966 = vpop.permute.xlu0 %1965
      %v1968 = vadd.f32 %v1958, %v1966
      %v1969 = vtanh.pop %v1968
      %1971 = vrot.lane.b32.xlu0 %v1969, 32
      %v1972 = vpop.permute.xlu0 %1971
      %v1974 = vmul.f32 %v1956, %v1972
      %1976 = vrot.lane.b32.xlu0 %v1974, 64
      %v1977 = vpop.permute.xlu0 %1976
      %1979 = vst.msk [vmem:[#allocation3 + $0x20] sm:$0xff] %vm361, %v1977
      %v1980 = vsel %vm361, %v1977, 0
      %1982 = vmatpush.msra.mxu0 0.0
      %1983 = vmatpush.msra.mxu0 0.0
      %1984 = vmatpush.msra.mxu0 0.0
      %1985 = vmatpush.msra.mxu0 0.0
      %1986 = vmatpush.msra.mxu0 0.0
      %1987 = vmatpush.msra.mxu0 0.0
      %1988 = vmatpush.msra.mxu0 0.0
      %1989 = vmatpush.msra.mxu0 0.0
      %1990 = vmatpush.msra.mxu0 0.0
      %1991 = vmatpush.msra.mxu0 0.0
      %1992 = vmatpush.msra.mxu0 0.0
      %1993 = vmatpush.msra.mxu0 0.0
      %1994 = vmatpush.msra.mxu0 %v1539
      %1995 = vmatpush.msra.mxu0 %v1538
      %1996 = vmatpush.msra.mxu0 %v1537
      %1997 = vmatpush.msra.mxu0 %v1536
      %1998 = vmatmul.f32.gmra.mxu0 %v1980
      %v1999 = vpop.f32.mrf.mxu0
      %v2000 = vadd.f32 0.0, %v1999
      %2001 = vdwg.mxu0
      %v2002 = vadd.f32 %v1625, %v2000
      %v2003 = vxor.u32 %v2002, 2147483648
      %v2004 = vmul.f32 %v2003, 1.442695
      %v2005 = vpow.pop %v2004
      %v2006 = vadd.f32 %v2005, 1.0
      %v2007 = vrcp.pop %v2006
      %v2008 = vmul.f32 %v2006, %v2007
      %v2009 = vsub.f32 1.0, %v2008
      %v2010 = vmul.f32 %v2007, %v2009
      %v2011 = vadd.f32 %v2007, %v2010
      %vm2012 = vweird.f32 %v2006
      %vm2013 = vweird.f32 %v2007
      %vm2014 = vmor %vm2012, %vm2013
      %v2015 = vsel %vm2014, %v2007, %v2011
      %v2016 = vand.u32 2147483647, %v2006
      %vm2017 = vcmp.eq.f32.partialorder %v2016, 8.507059e+37
      %v2018 = vand.u32 %v2006, 2147483648
      %v2019 = vor.u32 1.1754944e-38, %v2018
      %v2020 = vsel %vm2017, %v2019, %v2015
      %v2021 = vmul.f32 1.0, %v2020
      %v2022 = vtanh.pop %v2002
      %v2023 = vmul.f32 %v2021, %v1968
      %2025 = vrot.lane.b32.xlu0 %v2022, 32
      %v2026 = vpop.permute.xlu0 %2025
      %v2028 = vmul.f32 %v2021, %v2026
      %2030 = vrot.lane.b32.xlu0 %v2028, 32
      %v2031 = vpop.permute.xlu0 %2030
      %v2033 = vadd.f32 %v2023, %v2031
      %v2034 = vtanh.pop %v2033
      %2036 = vrot.lane.b32.xlu0 %v2034, 32
      %v2037 = vpop.permute.xlu0 %2036
      %v2039 = vmul.f32 %v2021, %v2037
      %2041 = vrot.lane.b32.xlu0 %v2039, 64
      %v2042 = vpop.permute.xlu0 %2041
      %2044 = vst.msk [vmem:[#allocation3 + $0x28] sm:$0xff] %vm361, %v2042
      %v2045 = vsel %vm361, %v2042, 0
      %2047 = vmatpush.msra.mxu0 0.0
      %2048 = vmatpush.msra.mxu0 0.0
      %2049 = vmatpush.msra.mxu0 0.0
      %2050 = vmatpush.msra.mxu0 0.0
      %2051 = vmatpush.msra.mxu0 0.0
      %2052 = vmatpush.msra.mxu0 0.0
      %2053 = vmatpush.msra.mxu0 0.0
      %2054 = vmatpush.msra.mxu0 0.0
      %2055 = vmatpush.msra.mxu0 0.0
      %2056 = vmatpush.msra.mxu0 0.0
      %2057 = vmatpush.msra.mxu0 0.0
      %2058 = vmatpush.msra.mxu0 0.0
      %2059 = vmatpush.msra.mxu0 %v1539
      %2060 = vmatpush.msra.mxu0 %v1538
      %2061 = vmatpush.msra.mxu0 %v1537
      %2062 = vmatpush.msra.mxu0 %v1536
      %2063 = vmatmul.f32.gmra.mxu0 %v2045
      %v2064 = vpop.f32.mrf.mxu0
      %v2065 = vadd.f32 0.0, %v2064
      %2066 = vdwg.mxu0
      %v2067 = vadd.f32 %v1628, %v2065
      %v2068 = vxor.u32 %v2067, 2147483648
      %v2069 = vmul.f32 %v2068, 1.442695
      %v2070 = vpow.pop %v2069
      %v2071 = vadd.f32 %v2070, 1.0
      %v2072 = vrcp.pop %v2071
      %v2073 = vmul.f32 %v2071, %v2072
      %v2074 = vsub.f32 1.0, %v2073
      %v2075 = vmul.f32 %v2072, %v2074
      %v2076 = vadd.f32 %v2072, %v2075
      %vm2077 = vweird.f32 %v2071
      %vm2078 = vweird.f32 %v2072
      %vm2079 = vmor %vm2077, %vm2078
      %v2080 = vsel %vm2079, %v2072, %v2076
      %v2081 = vand.u32 2147483647, %v2071
      %vm2082 = vcmp.eq.f32.partialorder %v2081, 8.507059e+37
      %v2083 = vand.u32 %v2071, 2147483648
      %v2084 = vor.u32 1.1754944e-38, %v2083
      %v2085 = vsel %vm2082, %v2084, %v2080
      %v2086 = vmul.f32 1.0, %v2085
      %v2087 = vtanh.pop %v2067
      %v2088 = vmul.f32 %v2086, %v2033
      %2090 = vrot.lane.b32.xlu0 %v2087, 32
      %v2091 = vpop.permute.xlu0 %2090
      %v2093 = vmul.f32 %v2086, %v2091
      %2095 = vrot.lane.b32.xlu0 %v2093, 32
      %v2096 = vpop.permute.xlu0 %2095
      %v2098 = vadd.f32 %v2088, %v2096
      %v2099 = vtanh.pop %v2098
      %2101 = vrot.lane.b32.xlu0 %v2099, 32
      %v2102 = vpop.permute.xlu0 %2101
      %v2104 = vmul.f32 %v2086, %v2102
      %2106 = vrot.lane.b32.xlu0 %v2104, 64
      %v2107 = vpop.permute.xlu0 %2106
      %2109 = vst.msk [vmem:[#allocation3 + $0x30] sm:$0xff] %vm361, %v2107
      %v2110 = vsel %vm361, %v2107, 0
      %2112 = vmatpush.msra.mxu0 0.0
      %2113 = vmatpush.msra.mxu0 0.0
      %2114 = vmatpush.msra.mxu0 0.0
      %2115 = vmatpush.msra.mxu0 0.0
      %2116 = vmatpush.msra.mxu0 0.0
      %2117 = vmatpush.msra.mxu0 0.0
      %2118 = vmatpush.msra.mxu0 0.0
      %2119 = vmatpush.msra.mxu0 0.0
      %2120 = vmatpush.msra.mxu0 0.0
      %2121 = vmatpush.msra.mxu0 0.0
      %2122 = vmatpush.msra.mxu0 0.0
      %2123 = vmatpush.msra.mxu0 0.0
      %2124 = vmatpush.msra.mxu0 %v1539
      %2125 = vmatpush.msra.mxu0 %v1538
      %2126 = vmatpush.msra.mxu0 %v1537
      %2127 = vmatpush.msra.mxu0 %v1536
      %2128 = vmatmul.f32.gmra.mxu0 %v2110
      %v2129 = vpop.f32.mrf.mxu0
      %v2130 = vadd.f32 0.0, %v2129
      %2131 = vdwg.mxu0
      %v2132 = vadd.f32 %v1631, %v2130
      %v2133 = vxor.u32 %v2132, 2147483648
      %v2134 = vmul.f32 %v2133, 1.442695
      %v2135 = vpow.pop %v2134
      %v2136 = vadd.f32 %v2135, 1.0
      %v2137 = vrcp.pop %v2136
      %v2138 = vmul.f32 %v2136, %v2137
      %v2139 = vsub.f32 1.0, %v2138
      %v2140 = vmul.f32 %v2137, %v2139
      %v2141 = vadd.f32 %v2137, %v2140
      %vm2142 = vweird.f32 %v2136
      %vm2143 = vweird.f32 %v2137
      %vm2144 = vmor %vm2142, %vm2143
      %v2145 = vsel %vm2144, %v2137, %v2141
      %v2146 = vand.u32 2147483647, %v2136
      %vm2147 = vcmp.eq.f32.partialorder %v2146, 8.507059e+37
      %v2148 = vand.u32 %v2136, 2147483648
      %v2149 = vor.u32 1.1754944e-38, %v2148
      %v2150 = vsel %vm2147, %v2149, %v2145
      %v2151 = vmul.f32 1.0, %v2150
      %v2152 = vtanh.pop %v2132
      %v2153 = vmul.f32 %v2151, %v2098
      %2155 = vrot.lane.b32.xlu0 %v2152, 32
      %v2156 = vpop.permute.xlu0 %2155
      %v2158 = vmul.f32 %v2151, %v2156
      %2160 = vrot.lane.b32.xlu0 %v2158, 32
      %v2161 = vpop.permute.xlu0 %2160
      %v2163 = vadd.f32 %v2153, %v2161
      %v2164 = vtanh.pop %v2163
      %2166 = vrot.lane.b32.xlu0 %v2164, 32
      %v2167 = vpop.permute.xlu0 %2166
      %v2169 = vmul.f32 %v2151, %v2167
      %2171 = vrot.lane.b32.xlu0 %v2169, 64
      %v2172 = vpop.permute.xlu0 %2171
      %2174 = vst.msk [vmem:[#allocation3 + $0x38] sm:$0xff] %vm361, %v2172
      %v2175 = vsel %vm361, %v2172, 0
      %2177 = vmatpush.msra.mxu0 0.0
      %2178 = vmatpush.msra.mxu0 0.0
      %2179 = vmatpush.msra.mxu0 0.0
      %2180 = vmatpush.msra.mxu0 0.0
      %2181 = vmatpush.msra.mxu0 0.0
      %2182 = vmatpush.msra.mxu0 0.0
      %2183 = vmatpush.msra.mxu0 0.0
      %2184 = vmatpush.msra.mxu0 0.0
      %2185 = vmatpush.msra.mxu0 0.0
      %2186 = vmatpush.msra.mxu0 0.0
      %2187 = vmatpush.msra.mxu0 0.0
      %2188 = vmatpush.msra.mxu0 0.0
      %2189 = vmatpush.msra.mxu0 %v1539
      %2190 = vmatpush.msra.mxu0 %v1538
      %2191 = vmatpush.msra.mxu0 %v1537
      %2192 = vmatpush.msra.mxu0 %v1536
      %2193 = vmatmul.f32.gmra.mxu0 %v2175
      %v2194 = vpop.f32.mrf.mxu0
      %v2195 = vadd.f32 0.0, %v2194
      %2196 = vdwg.mxu0
      %v2197 = vadd.f32 %v1634, %v2195
      %v2198 = vxor.u32 %v2197, 2147483648
      %v2199 = vmul.f32 %v2198, 1.442695
      %v2200 = vpow.pop %v2199
      %v2201 = vadd.f32 %v2200, 1.0
      %v2202 = vrcp.pop %v2201
      %v2203 = vmul.f32 %v2201, %v2202
      %v2204 = vsub.f32 1.0, %v2203
      %v2205 = vmul.f32 %v2202, %v2204
      %v2206 = vadd.f32 %v2202, %v2205
      %vm2207 = vweird.f32 %v2201
      %vm2208 = vweird.f32 %v2202
      %vm2209 = vmor %vm2207, %vm2208
      %v2210 = vsel %vm2209, %v2202, %v2206
      %v2211 = vand.u32 2147483647, %v2201
      %vm2212 = vcmp.eq.f32.partialorder %v2211, 8.507059e+37
      %v2213 = vand.u32 %v2201, 2147483648
      %v2214 = vor.u32 1.1754944e-38, %v2213
      %v2215 = vsel %vm2212, %v2214, %v2210
      %v2216 = vmul.f32 1.0, %v2215
      %v2217 = vtanh.pop %v2197
      %v2218 = vmul.f32 %v2216, %v2163
      %2220 = vrot.lane.b32.xlu0 %v2217, 32
      %v2221 = vpop.permute.xlu0 %2220
      %v2223 = vmul.f32 %v2216, %v2221
      %2225 = vrot.lane.b32.xlu0 %v2223, 32
      %v2226 = vpop.permute.xlu0 %2225
      %v2228 = vadd.f32 %v2218, %v2226
      %v2229 = vtanh.pop %v2228
      %2231 = vrot.lane.b32.xlu0 %v2229, 32
      %v2232 = vpop.permute.xlu0 %2231
      %v2234 = vmul.f32 %v2216, %v2232
      %2236 = vrot.lane.b32.xlu0 %v2234, 64
      %v2237 = vpop.permute.xlu0 %2236
      %2239 = vst.msk [vmem:[#allocation3 + $0x40] sm:$0xff] %vm361, %v2237
      %v2240 = vsel %vm361, %v2237, 0
      %2242 = vmatpush.msra.mxu0 0.0
      %2243 = vmatpush.msra.mxu0 0.0
      %2244 = vmatpush.msra.mxu0 0.0
      %2245 = vmatpush.msra.mxu0 0.0
      %2246 = vmatpush.msra.mxu0 0.0
      %2247 = vmatpush.msra.mxu0 0.0
      %2248 = vmatpush.msra.mxu0 0.0
      %2249 = vmatpush.msra.mxu0 0.0
      %2250 = vmatpush.msra.mxu0 0.0
      %2251 = vmatpush.msra.mxu0 0.0
      %2252 = vmatpush.msra.mxu0 0.0
      %2253 = vmatpush.msra.mxu0 0.0
      %2254 = vmatpush.msra.mxu0 %v1539
      %2255 = vmatpush.msra.mxu0 %v1538
      %2256 = vmatpush.msra.mxu0 %v1537
      %2257 = vmatpush.msra.mxu0 %v1536
      %2258 = vmatmul.f32.gmra.mxu0 %v2240
      %v2259 = vpop.f32.mrf.mxu0
      %v2260 = vadd.f32 0.0, %v2259
      %2261 = vdwg.mxu0
      %v2262 = vadd.f32 %v1637, %v2260
      %v2263 = vxor.u32 %v2262, 2147483648
      %v2264 = vmul.f32 %v2263, 1.442695
      %v2265 = vpow.pop %v2264
      %v2266 = vadd.f32 %v2265, 1.0
      %v2267 = vrcp.pop %v2266
      %v2268 = vmul.f32 %v2266, %v2267
      %v2269 = vsub.f32 1.0, %v2268
      %v2270 = vmul.f32 %v2267, %v2269
      %v2271 = vadd.f32 %v2267, %v2270
      %vm2272 = vweird.f32 %v2266
      %vm2273 = vweird.f32 %v2267
      %vm2274 = vmor %vm2272, %vm2273
      %v2275 = vsel %vm2274, %v2267, %v2271
      %v2276 = vand.u32 2147483647, %v2266
      %vm2277 = vcmp.eq.f32.partialorder %v2276, 8.507059e+37
      %v2278 = vand.u32 %v2266, 2147483648
      %v2279 = vor.u32 1.1754944e-38, %v2278
      %v2280 = vsel %vm2277, %v2279, %v2275
      %v2281 = vmul.f32 1.0, %v2280
      %v2282 = vtanh.pop %v2262
      %v2283 = vmul.f32 %v2281, %v2228
      %2285 = vrot.lane.b32.xlu0 %v2282, 32
      %v2286 = vpop.permute.xlu0 %2285
      %v2288 = vmul.f32 %v2281, %v2286
      %2290 = vrot.lane.b32.xlu0 %v2288, 32
      %v2291 = vpop.permute.xlu0 %2290
      %v2293 = vadd.f32 %v2283, %v2291
      %v2294 = vtanh.pop %v2293
      %2296 = vrot.lane.b32.xlu0 %v2294, 32
      %v2297 = vpop.permute.xlu0 %2296
      %v2299 = vmul.f32 %v2281, %v2297
      %2301 = vrot.lane.b32.xlu0 %v2299, 64
      %v2302 = vpop.permute.xlu0 %2301
      %2304 = vst.msk [vmem:[#allocation3 + $0x48] sm:$0xff] %vm361, %v2302
      %v2305 = vsel %vm361, %v2302, 0
      %2307 = vmatpush.msra.mxu0 0.0
      %2308 = vmatpush.msra.mxu0 0.0
      %2309 = vmatpush.msra.mxu0 0.0
      %2310 = vmatpush.msra.mxu0 0.0
      %2311 = vmatpush.msra.mxu0 0.0
      %2312 = vmatpush.msra.mxu0 0.0
      %2313 = vmatpush.msra.mxu0 0.0
      %2314 = vmatpush.msra.mxu0 0.0
      %2315 = vmatpush.msra.mxu0 0.0
      %2316 = vmatpush.msra.mxu0 0.0
      %2317 = vmatpush.msra.mxu0 0.0
      %2318 = vmatpush.msra.mxu0 0.0
      %2319 = vmatpush.msra.mxu0 %v1539
      %2320 = vmatpush.msra.mxu0 %v1538
      %2321 = vmatpush.msra.mxu0 %v1537
      %2322 = vmatpush.msra.mxu0 %v1536
      %2323 = vmatmul.f32.gmra.mxu0 %v2305
      %v2324 = vpop.f32.mrf.mxu0
      %v2325 = vadd.f32 0.0, %v2324
      %2326 = vdwg.mxu0
      %v2327 = vadd.f32 %v1640, %v2325
      %v2328 = vxor.u32 %v2327, 2147483648
      %v2329 = vmul.f32 %v2328, 1.442695
      %v2330 = vpow.pop %v2329
      %v2331 = vadd.f32 %v2330, 1.0
      %v2332 = vrcp.pop %v2331
      %v2333 = vmul.f32 %v2331, %v2332
      %v2334 = vsub.f32 1.0, %v2333
      %v2335 = vmul.f32 %v2332, %v2334
      %v2336 = vadd.f32 %v2332, %v2335
      %vm2337 = vweird.f32 %v2331
      %vm2338 = vweird.f32 %v2332
      %vm2339 = vmor %vm2337, %vm2338
      %v2340 = vsel %vm2339, %v2332, %v2336
      %v2341 = vand.u32 2147483647, %v2331
      %vm2342 = vcmp.eq.f32.partialorder %v2341, 8.507059e+37
      %v2343 = vand.u32 %v2331, 2147483648
      %v2344 = vor.u32 1.1754944e-38, %v2343
      %v2345 = vsel %vm2342, %v2344, %v2340
      %v2346 = vmul.f32 1.0, %v2345
      %v2347 = vtanh.pop %v2327
      %v2348 = vmul.f32 %v2346, %v2293
      %2350 = vrot.lane.b32.xlu0 %v2347, 32
      %v2351 = vpop.permute.xlu0 %2350
      %v2353 = vmul.f32 %v2346, %v2351
      %2355 = vrot.lane.b32.xlu0 %v2353, 32
      %v2356 = vpop.permute.xlu0 %2355
      %v2358 = vadd.f32 %v2348, %v2356
      %v2359 = vtanh.pop %v2358
      %2361 = vrot.lane.b32.xlu0 %v2359, 32
      %v2362 = vpop.permute.xlu0 %2361
      %v2364 = vmul.f32 %v2346, %v2362
      %2366 = vrot.lane.b32.xlu0 %v2364, 64
      %v2367 = vpop.permute.xlu0 %2366
      %2369 = vst.msk [vmem:[#allocation3 + $0x50] sm:$0xff] %vm361, %v2367
      %v2370 = vsel %vm361, %v2367, 0
      %2372 = vmatpush.msra.mxu0 0.0
      %2373 = vmatpush.msra.mxu0 0.0
      %2374 = vmatpush.msra.mxu0 0.0
      %2375 = vmatpush.msra.mxu0 0.0
      %2376 = vmatpush.msra.mxu0 0.0
      %2377 = vmatpush.msra.mxu0 0.0
      %2378 = vmatpush.msra.mxu0 0.0
      %2379 = vmatpush.msra.mxu0 0.0
      %2380 = vmatpush.msra.mxu0 0.0
      %2381 = vmatpush.msra.mxu0 0.0
      %2382 = vmatpush.msra.mxu0 0.0
      %2383 = vmatpush.msra.mxu0 0.0
      %2384 = vmatpush.msra.mxu0 %v1539
      %2385 = vmatpush.msra.mxu0 %v1538
      %2386 = vmatpush.msra.mxu0 %v1537
      %2387 = vmatpush.msra.mxu0 %v1536
      %2388 = vmatmul.f32.gmra.mxu0 %v2370
      %v2389 = vpop.f32.mrf.mxu0
      %v2390 = vadd.f32 0.0, %v2389
      %2391 = vdwg.mxu0
      %v2392 = vadd.f32 %v1643, %v2390
      %v2393 = vxor.u32 %v2392, 2147483648
      %v2394 = vmul.f32 %v2393, 1.442695
      %v2395 = vpow.pop %v2394
      %v2396 = vadd.f32 %v2395, 1.0
      %v2397 = vrcp.pop %v2396
      %v2398 = vmul.f32 %v2396, %v2397
      %v2399 = vsub.f32 1.0, %v2398
      %v2400 = vmul.f32 %v2397, %v2399
      %v2401 = vadd.f32 %v2397, %v2400
      %vm2402 = vweird.f32 %v2396
      %vm2403 = vweird.f32 %v2397
      %vm2404 = vmor %vm2402, %vm2403
      %v2405 = vsel %vm2404, %v2397, %v2401
      %v2406 = vand.u32 2147483647, %v2396
      %vm2407 = vcmp.eq.f32.partialorder %v2406, 8.507059e+37
      %v2408 = vand.u32 %v2396, 2147483648
      %v2409 = vor.u32 1.1754944e-38, %v2408
      %v2410 = vsel %vm2407, %v2409, %v2405
      %v2411 = vmul.f32 1.0, %v2410
      %v2412 = vtanh.pop %v2392
      %v2413 = vmul.f32 %v2411, %v2358
      %2415 = vrot.lane.b32.xlu0 %v2412, 32
      %v2416 = vpop.permute.xlu0 %2415
      %v2418 = vmul.f32 %v2411, %v2416
      %2420 = vrot.lane.b32.xlu0 %v2418, 32
      %v2421 = vpop.permute.xlu0 %2420
      %v2423 = vadd.f32 %v2413, %v2421
      %v2424 = vtanh.pop %v2423
      %2426 = vrot.lane.b32.xlu0 %v2424, 32
      %v2427 = vpop.permute.xlu0 %2426
      %v2429 = vmul.f32 %v2411, %v2427
      %2431 = vrot.lane.b32.xlu0 %v2429, 64
      %v2432 = vpop.permute.xlu0 %2431
      %2434 = vst.msk [vmem:[#allocation3 + $0x58] sm:$0xff] %vm361, %v2432
      %v2435 = vsel %vm361, %v2432, 0
      %2437 = vmatpush.msra.mxu0 0.0
      %2438 = vmatpush.msra.mxu0 0.0
      %2439 = vmatpush.msra.mxu0 0.0
      %2440 = vmatpush.msra.mxu0 0.0
      %2441 = vmatpush.msra.mxu0 0.0
      %2442 = vmatpush.msra.mxu0 0.0
      %2443 = vmatpush.msra.mxu0 0.0
      %2444 = vmatpush.msra.mxu0 0.0
      %2445 = vmatpush.msra.mxu0 0.0
      %2446 = vmatpush.msra.mxu0 0.0
      %2447 = vmatpush.msra.mxu0 0.0
      %2448 = vmatpush.msra.mxu0 0.0
      %2449 = vmatpush.msra.mxu0 %v1539
      %2450 = vmatpush.msra.mxu0 %v1538
      %2451 = vmatpush.msra.mxu0 %v1537
      %2452 = vmatpush.msra.mxu0 %v1536
      %2453 = vmatmul.f32.gmra.mxu0 %v2435
      %v2454 = vpop.f32.mrf.mxu0
      %v2455 = vadd.f32 0.0, %v2454
      %2456 = vdwg.mxu0
      %v2457 = vadd.f32 %v1646, %v2455
      %v2458 = vxor.u32 %v2457, 2147483648
      %v2459 = vmul.f32 %v2458, 1.442695
      %v2460 = vpow.pop %v2459
      %v2461 = vadd.f32 %v2460, 1.0
      %v2462 = vrcp.pop %v2461
      %v2463 = vmul.f32 %v2461, %v2462
      %v2464 = vsub.f32 1.0, %v2463
      %v2465 = vmul.f32 %v2462, %v2464
      %v2466 = vadd.f32 %v2462, %v2465
      %vm2467 = vweird.f32 %v2461
      %vm2468 = vweird.f32 %v2462
      %vm2469 = vmor %vm2467, %vm2468
      %v2470 = vsel %vm2469, %v2462, %v2466
      %v2471 = vand.u32 2147483647, %v2461
      %vm2472 = vcmp.eq.f32.partialorder %v2471, 8.507059e+37
      %v2473 = vand.u32 %v2461, 2147483648
      %v2474 = vor.u32 1.1754944e-38, %v2473
      %v2475 = vsel %vm2472, %v2474, %v2470
      %v2476 = vmul.f32 1.0, %v2475
      %v2477 = vtanh.pop %v2457
      %v2478 = vmul.f32 %v2476, %v2423
      %2480 = vrot.lane.b32.xlu0 %v2477, 32
      %v2481 = vpop.permute.xlu0 %2480
      %v2483 = vmul.f32 %v2476, %v2481
      %2485 = vrot.lane.b32.xlu0 %v2483, 32
      %v2486 = vpop.permute.xlu0 %2485
      %v2488 = vadd.f32 %v2478, %v2486
      %v2489 = vtanh.pop %v2488
      %2491 = vrot.lane.b32.xlu0 %v2489, 32
      %v2492 = vpop.permute.xlu0 %2491
      %v2494 = vmul.f32 %v2476, %v2492
      %2496 = vrot.lane.b32.xlu0 %v2494, 64
      %v2497 = vpop.permute.xlu0 %2496
      %2499 = vst.msk [vmem:[#allocation3 + $0x60] sm:$0xff] %vm361, %v2497
      %v2500 = vsel %vm361, %v2497, 0
      %2502 = vmatpush.msra.mxu0 0.0
      %2503 = vmatpush.msra.mxu0 0.0
      %2504 = vmatpush.msra.mxu0 0.0
      %2505 = vmatpush.msra.mxu0 0.0
      %2506 = vmatpush.msra.mxu0 0.0
      %2507 = vmatpush.msra.mxu0 0.0
      %2508 = vmatpush.msra.mxu0 0.0
      %2509 = vmatpush.msra.mxu0 0.0
      %2510 = vmatpush.msra.mxu0 0.0
      %2511 = vmatpush.msra.mxu0 0.0
      %2512 = vmatpush.msra.mxu0 0.0
      %2513 = vmatpush.msra.mxu0 0.0
      %2514 = vmatpush.msra.mxu0 %v1539
      %2515 = vmatpush.msra.mxu0 %v1538
      %2516 = vmatpush.msra.mxu0 %v1537
      %2517 = vmatpush.msra.mxu0 %v1536
      %2518 = vmatmul.f32.gmra.mxu0 %v2500
      %v2519 = vpop.f32.mrf.mxu0
      %v2520 = vadd.f32 0.0, %v2519
      %2521 = vdwg.mxu0
      %v2522 = vadd.f32 %v1649, %v2520
      %v2523 = vxor.u32 %v2522, 2147483648
      %v2524 = vmul.f32 %v2523, 1.442695
      %v2525 = vpow.pop %v2524
      %v2526 = vadd.f32 %v2525, 1.0
      %v2527 = vrcp.pop %v2526
      %v2528 = vmul.f32 %v2526, %v2527
      %v2529 = vsub.f32 1.0, %v2528
      %v2530 = vmul.f32 %v2527, %v2529
      %v2531 = vadd.f32 %v2527, %v2530
      %vm2532 = vweird.f32 %v2526
      %vm2533 = vweird.f32 %v2527
      %vm2534 = vmor %vm2532, %vm2533
      %v2535 = vsel %vm2534, %v2527, %v2531
      %v2536 = vand.u32 2147483647, %v2526
      %vm2537 = vcmp.eq.f32.partialorder %v2536, 8.507059e+37
      %v2538 = vand.u32 %v2526, 2147483648
      %v2539 = vor.u32 1.1754944e-38, %v2538
      %v2540 = vsel %vm2537, %v2539, %v2535
      %v2541 = vmul.f32 1.0, %v2540
      %v2542 = vtanh.pop %v2522
      %v2543 = vmul.f32 %v2541, %v2488
      %2545 = vrot.lane.b32.xlu0 %v2542, 32
      %v2546 = vpop.permute.xlu0 %2545
      %v2548 = vmul.f32 %v2541, %v2546
      %2550 = vrot.lane.b32.xlu0 %v2548, 32
      %v2551 = vpop.permute.xlu0 %2550
      %v2553 = vadd.f32 %v2543, %v2551
      %v2554 = vtanh.pop %v2553
      %2556 = vrot.lane.b32.xlu0 %v2554, 32
      %v2557 = vpop.permute.xlu0 %2556
      %v2559 = vmul.f32 %v2541, %v2557
      %2561 = vrot.lane.b32.xlu0 %v2559, 64
      %v2562 = vpop.permute.xlu0 %2561
      %2564 = vst.msk [vmem:[#allocation3 + $0x68] sm:$0xff] %vm361, %v2562
      %v2565 = vsel %vm361, %v2562, 0
      %2567 = vmatpush.msra.mxu0 0.0
      %2568 = vmatpush.msra.mxu0 0.0
      %2569 = vmatpush.msra.mxu0 0.0
      %2570 = vmatpush.msra.mxu0 0.0
      %2571 = vmatpush.msra.mxu0 0.0
      %2572 = vmatpush.msra.mxu0 0.0
      %2573 = vmatpush.msra.mxu0 0.0
      %2574 = vmatpush.msra.mxu0 0.0
      %2575 = vmatpush.msra.mxu0 0.0
      %2576 = vmatpush.msra.mxu0 0.0
      %2577 = vmatpush.msra.mxu0 0.0
      %2578 = vmatpush.msra.mxu0 0.0
      %2579 = vmatpush.msra.mxu0 %v1539
      %2580 = vmatpush.msra.mxu0 %v1538
      %2581 = vmatpush.msra.mxu0 %v1537
      %2582 = vmatpush.msra.mxu0 %v1536
      %2583 = vmatmul.f32.gmra.mxu0 %v2565
      %v2584 = vpop.f32.mrf.mxu0
      %v2585 = vadd.f32 0.0, %v2584
      %2586 = vdwg.mxu0
      %v2587 = vadd.f32 %v1652, %v2585
      %v2588 = vxor.u32 %v2587, 2147483648
      %v2589 = vmul.f32 %v2588, 1.442695
      %v2590 = vpow.pop %v2589
      %v2591 = vadd.f32 %v2590, 1.0
      %v2592 = vrcp.pop %v2591
      %v2593 = vmul.f32 %v2591, %v2592
      %v2594 = vsub.f32 1.0, %v2593
      %v2595 = vmul.f32 %v2592, %v2594
      %v2596 = vadd.f32 %v2592, %v2595
      %vm2597 = vweird.f32 %v2591
      %vm2598 = vweird.f32 %v2592
      %vm2599 = vmor %vm2597, %vm2598
      %v2600 = vsel %vm2599, %v2592, %v2596
      %v2601 = vand.u32 2147483647, %v2591
      %vm2602 = vcmp.eq.f32.partialorder %v2601, 8.507059e+37
      %v2603 = vand.u32 %v2591, 2147483648
      %v2604 = vor.u32 1.1754944e-38, %v2603
      %v2605 = vsel %vm2602, %v2604, %v2600
      %v2606 = vmul.f32 1.0, %v2605
      %v2607 = vtanh.pop %v2587
      %v2608 = vmul.f32 %v2606, %v2553
      %2610 = vrot.lane.b32.xlu0 %v2607, 32
      %v2611 = vpop.permute.xlu0 %2610
      %v2613 = vmul.f32 %v2606, %v2611
      %2615 = vrot.lane.b32.xlu0 %v2613, 32
      %v2616 = vpop.permute.xlu0 %2615
      %v2618 = vadd.f32 %v2608, %v2616
      %v2619 = vtanh.pop %v2618
      %2621 = vrot.lane.b32.xlu0 %v2619, 32
      %v2622 = vpop.permute.xlu0 %2621
      %v2624 = vmul.f32 %v2606, %v2622
      %2626 = vrot.lane.b32.xlu0 %v2624, 64
      %v2627 = vpop.permute.xlu0 %2626
      %2629 = vst.msk [vmem:[#allocation3 + $0x70] sm:$0xff] %vm361, %v2627
      %v2630 = vsel %vm361, %v2627, 0
      %2632 = vmatpush.msra.mxu0 0.0
      %2633 = vmatpush.msra.mxu0 0.0
      %2634 = vmatpush.msra.mxu0 0.0
      %2635 = vmatpush.msra.mxu0 0.0
      %2636 = vmatpush.msra.mxu0 0.0
      %2637 = vmatpush.msra.mxu0 0.0
      %2638 = vmatpush.msra.mxu0 0.0
      %2639 = vmatpush.msra.mxu0 0.0
      %2640 = vmatpush.msra.mxu0 0.0
      %2641 = vmatpush.msra.mxu0 0.0
      %2642 = vmatpush.msra.mxu0 0.0
      %2643 = vmatpush.msra.mxu0 0.0
      %2644 = vmatpush.msra.mxu0 %v1539
      %2645 = vmatpush.msra.mxu0 %v1538
      %2646 = vmatpush.msra.mxu0 %v1537
      %2647 = vmatpush.msra.mxu0 %v1536
      %2648 = vmatmul.f32.gmra.mxu0 %v2630
      %v2649 = vpop.f32.mrf.mxu0
      %v2650 = vadd.f32 0.0, %v2649
      %2651 = vdwg.mxu0
      %v2652 = vadd.f32 %v1655, %v2650
      %v2653 = vxor.u32 %v2652, 2147483648
      %v2654 = vmul.f32 %v2653, 1.442695
      %v2655 = vpow.pop %v2654
      %v2656 = vadd.f32 %v2655, 1.0
      %v2657 = vrcp.pop %v2656
      %v2658 = vmul.f32 %v2656, %v2657
      %v2659 = vsub.f32 1.0, %v2658
      %v2660 = vmul.f32 %v2657, %v2659
      %v2661 = vadd.f32 %v2657, %v2660
      %vm2662 = vweird.f32 %v2656
      %vm2663 = vweird.f32 %v2657
      %vm2664 = vmor %vm2662, %vm2663
      %v2665 = vsel %vm2664, %v2657, %v2661
      %v2666 = vand.u32 2147483647, %v2656
      %vm2667 = vcmp.eq.f32.partialorder %v2666, 8.507059e+37
      %v2668 = vand.u32 %v2656, 2147483648
      %v2669 = vor.u32 1.1754944e-38, %v2668
      %v2670 = vsel %vm2667, %v2669, %v2665
      %v2671 = vmul.f32 1.0, %v2670
      %v2672 = vtanh.pop %v2652
      %v2673 = vmul.f32 %v2671, %v2618
      %2675 = vrot.lane.b32.xlu0 %v2672, 32
      %v2676 = vpop.permute.xlu0 %2675
      %v2678 = vmul.f32 %v2671, %v2676
      %2680 = vrot.lane.b32.xlu0 %v2678, 32
      %v2681 = vpop.permute.xlu0 %2680
      %v2683 = vadd.f32 %v2673, %v2681
      %v2684 = vtanh.pop %v2683
      %2686 = vrot.lane.b32.xlu0 %v2684, 32
      %v2687 = vpop.permute.xlu0 %2686
      %v2689 = vmul.f32 %v2671, %v2687
      %2691 = vrot.lane.b32.xlu0 %v2689, 64
      %v2692 = vpop.permute.xlu0 %2691
      %2694 = vst.msk [vmem:[#allocation3 + $0x78] sm:$0xff] %vm361, %v2692
      %v2695 = vld [vmem:[#allocation3] sm:$0xff]
      %v2696 = vld [vmem:[#allocation3 + $0x8] sm:$0xff]
      %v2697 = vld [vmem:[#allocation3 + $0x10] sm:$0xff]
      %v2698 = vld [vmem:[#allocation3 + $0x18] sm:$0xff]
      %v2699 = vld [vmem:[#allocation3 + $0x20] sm:$0xff]
      %v2700 = vld [vmem:[#allocation3 + $0x28] sm:$0xff]
      %v2701 = vld [vmem:[#allocation3 + $0x30] sm:$0xff]
      %v2702 = vld [vmem:[#allocation3 + $0x38] sm:$0xff]
      %v2703 = vld [vmem:[#allocation3 + $0x40] sm:$0xff]
      %v2704 = vld [vmem:[#allocation3 + $0x48] sm:$0xff]
      %v2705 = vld [vmem:[#allocation3 + $0x50] sm:$0xff]
      %v2706 = vld [vmem:[#allocation3 + $0x58] sm:$0xff]
      %v2707 = vld [vmem:[#allocation3 + $0x60] sm:$0xff]
      %v2708 = vld [vmem:[#allocation3 + $0x68] sm:$0xff]
      %v2709 = vld [vmem:[#allocation3 + $0x70] sm:$0xff]
      %v2710 = vld [vmem:[#allocation3 + $0x78] sm:$0xff]
      %v2711 = vld [vmem:[%s7] sm:$0xff]
      %v2712 = vld [vmem:[%s7 + $0x8] sm:$0xff]
      %v2713 = vld [vmem:[%s7 + $0x10] sm:$0xff]
      %v2714 = vld [vmem:[%s7 + $0x18] sm:$0xff]
      %v2715 = vld [vmem:[%s8] sm:$0x1]
      %v2717 = vperm.slane %v2715, 0
      %v2720 = vsel %vm361, %v2695, 0
      %v2723 = vsel %vm361, %v2696, 0
      %v2726 = vsel %vm361, %v2697, 0
      %v2729 = vsel %vm361, %v2698, 0
      %v2732 = vsel %vm361, %v2699, 0
      %v2735 = vsel %vm361, %v2700, 0
      %v2738 = vsel %vm361, %v2701, 0
      %v2741 = vsel %vm361, %v2702, 0
      %v2744 = vsel %vm361, %v2703, 0
      %v2747 = vsel %vm361, %v2704, 0
      %v2750 = vsel %vm361, %v2705, 0
      %v2753 = vsel %vm361, %v2706, 0
      %v2756 = vsel %vm361, %v2707, 0
      %v2759 = vsel %vm361, %v2708, 0
      %v2762 = vsel %vm361, %v2709, 0
      %v2765 = vsel %vm361, %v2710, 0
      %2767 = vmatpush.msra.mxu0 0.0
      %2768 = vmatpush.msra.mxu0 0.0
      %2769 = vmatpush.msra.mxu0 0.0
      %2770 = vmatpush.msra.mxu0 0.0
      %2771 = vmatpush.msra.mxu0 0.0
      %2772 = vmatpush.msra.mxu0 0.0
      %2773 = vmatpush.msra.mxu0 0.0
      %2774 = vmatpush.msra.mxu0 0.0
      %2775 = vmatpush.msra.mxu0 0.0
      %2776 = vmatpush.msra.mxu0 0.0
      %2777 = vmatpush.msra.mxu0 0.0
      %2778 = vmatpush.msra.mxu0 0.0
      %2779 = vmatpush.msra.mxu0 %v2714
      %2780 = vmatpush.msra.mxu0 %v2713
      %2781 = vmatpush.msra.mxu0 %v2712
      %2782 = vmatpush.msra.mxu0 %v2711
      %2783 = vmatmul.f32.gmra.mxu0 %v2720
      %v2784 = vpop.f32.mrf.mxu0
      %v2785 = vadd.f32 %v2717, %v2784
      %2786 = vmatmul.f32.gmra.mxu0 %v2723
      %v2787 = vpop.f32.mrf.mxu0
      %v2788 = vadd.f32 %v2717, %v2787
      %2789 = vmatmul.f32.gmra.mxu0 %v2726
      %v2790 = vpop.f32.mrf.mxu0
      %v2791 = vadd.f32 %v2717, %v2790
      %2792 = vmatmul.f32.gmra.mxu0 %v2729
      %v2793 = vpop.f32.mrf.mxu0
      %v2794 = vadd.f32 %v2717, %v2793
      %2795 = vmatmul.f32.gmra.mxu0 %v2732
      %v2796 = vpop.f32.mrf.mxu0
      %v2797 = vadd.f32 %v2717, %v2796
      %2798 = vmatmul.f32.gmra.mxu0 %v2735
      %v2799 = vpop.f32.mrf.mxu0
      %v2800 = vadd.f32 %v2717, %v2799
      %2801 = vmatmul.f32.gmra.mxu0 %v2738
      %v2802 = vpop.f32.mrf.mxu0
      %v2803 = vadd.f32 %v2717, %v2802
      %2804 = vmatmul.f32.gmra.mxu0 %v2741
      %v2805 = vpop.f32.mrf.mxu0
      %v2806 = vadd.f32 %v2717, %v2805
      %2807 = vmatmul.f32.gmra.mxu0 %v2744
      %v2808 = vpop.f32.mrf.mxu0
      %v2809 = vadd.f32 %v2717, %v2808
      %2810 = vmatmul.f32.gmra.mxu0 %v2747
      %v2811 = vpop.f32.mrf.mxu0
      %v2812 = vadd.f32 %v2717, %v2811
      %2813 = vmatmul.f32.gmra.mxu0 %v2750
      %v2814 = vpop.f32.mrf.mxu0
      %v2815 = vadd.f32 %v2717, %v2814
      %2816 = vmatmul.f32.gmra.mxu0 %v2753
      %v2817 = vpop.f32.mrf.mxu0
      %v2818 = vadd.f32 %v2717, %v2817
      %2819 = vmatmul.f32.gmra.mxu0 %v2756
      %v2820 = vpop.f32.mrf.mxu0
      %v2821 = vadd.f32 %v2717, %v2820
      %2822 = vmatmul.f32.gmra.mxu0 %v2759
      %v2823 = vpop.f32.mrf.mxu0
      %v2824 = vadd.f32 %v2717, %v2823
      %2825 = vmatmul.f32.gmra.mxu0 %v2762
      %v2826 = vpop.f32.mrf.mxu0
      %v2827 = vadd.f32 %v2717, %v2826
      %2828 = vmatmul.f32.gmra.mxu0 %v2765
      %v2829 = vpop.f32.mrf.mxu0
      %v2830 = vadd.f32 %v2717, %v2829
      %2831 = vdwg.mxu0
      %2832 = vmax.xlane.f32.xlu0 %v2785
      %v2833 = vpop.xlane.xlu0 %2832
      %2834 = vmax.xlane.f32.xlu0 %v2788
      %v2835 = vpop.xlane.xlu0 %2834
      %2836 = vmax.xlane.f32.xlu0 %v2791
      %v2837 = vpop.xlane.xlu0 %2836
      %2838 = vmax.xlane.f32.xlu0 %v2794
      %v2839 = vpop.xlane.xlu0 %2838
      %2840 = vmax.xlane.f32.xlu0 %v2797
      %v2841 = vpop.xlane.xlu0 %2840
      %2842 = vmax.xlane.f32.xlu0 %v2800
      %v2843 = vpop.xlane.xlu0 %2842
      %2844 = vmax.xlane.f32.xlu0 %v2803
      %v2845 = vpop.xlane.xlu0 %2844
      %2846 = vmax.xlane.f32.xlu0 %v2806
      %v2847 = vpop.xlane.xlu0 %2846
      %2848 = vmax.xlane.f32.xlu0 %v2809
      %v2849 = vpop.xlane.xlu0 %2848
      %2850 = vmax.xlane.f32.xlu0 %v2812
      %v2851 = vpop.xlane.xlu0 %2850
      %2852 = vmax.xlane.f32.xlu0 %v2815
      %v2853 = vpop.xlane.xlu0 %2852
      %2854 = vmax.xlane.f32.xlu0 %v2818
      %v2855 = vpop.xlane.xlu0 %2854
      %2856 = vmax.xlane.f32.xlu0 %v2821
      %v2857 = vpop.xlane.xlu0 %2856
      %2858 = vmax.xlane.f32.xlu0 %v2824
      %v2859 = vpop.xlane.xlu0 %2858
      %2860 = vmax.xlane.f32.xlu0 %v2827
      %v2861 = vpop.xlane.xlu0 %2860
      %2862 = vmax.xlane.f32.xlu0 %v2830
      %v2863 = vpop.xlane.xlu0 %2862
      %v2864 = vsub.f32 %v2785, %v2833
      %v2865 = vsub.f32 %v2788, %v2835
      %v2866 = vsub.f32 %v2791, %v2837
      %v2867 = vsub.f32 %v2794, %v2839
      %v2868 = vsub.f32 %v2797, %v2841
      %v2869 = vsub.f32 %v2800, %v2843
      %v2870 = vsub.f32 %v2803, %v2845
      %v2871 = vsub.f32 %v2806, %v2847
      %v2872 = vsub.f32 %v2809, %v2849
      %v2873 = vsub.f32 %v2812, %v2851
      %v2874 = vsub.f32 %v2815, %v2853
      %v2875 = vsub.f32 %v2818, %v2855
      %v2876 = vsub.f32 %v2821, %v2857
      %v2877 = vsub.f32 %v2824, %v2859
      %v2878 = vsub.f32 %v2827, %v2861
      %v2879 = vsub.f32 %v2830, %v2863
      %v2880 = vmul.f32 %v2864, 1.442695
      %v2881 = vpow.pop %v2880
      %v2882 = vmul.f32 %v2865, 1.442695
      %v2883 = vpow.pop %v2882
      %v2884 = vmul.f32 %v2866, 1.442695
      %v2885 = vpow.pop %v2884
      %v2886 = vmul.f32 %v2867, 1.442695
      %v2887 = vpow.pop %v2886
      %v2888 = vmul.f32 %v2868, 1.442695
      %v2889 = vpow.pop %v2888
      %v2890 = vmul.f32 %v2869, 1.442695
      %v2891 = vpow.pop %v2890
      %v2892 = vmul.f32 %v2870, 1.442695
      %v2893 = vpow.pop %v2892
      %v2894 = vmul.f32 %v2871, 1.442695
      %v2895 = vpow.pop %v2894
      %v2896 = vmul.f32 %v2872, 1.442695
      %v2897 = vpow.pop %v2896
      %v2898 = vmul.f32 %v2873, 1.442695
      %v2899 = vpow.pop %v2898
      %v2900 = vmul.f32 %v2874, 1.442695
      %v2901 = vpow.pop %v2900
      %v2902 = vmul.f32 %v2875, 1.442695
      %v2903 = vpow.pop %v2902
      %v2904 = vmul.f32 %v2876, 1.442695
      %v2905 = vpow.pop %v2904
      %v2906 = vmul.f32 %v2877, 1.442695
      %v2907 = vpow.pop %v2906
      %v2908 = vmul.f32 %v2878, 1.442695
      %v2909 = vpow.pop %v2908
      %v2910 = vmul.f32 %v2879, 1.442695
      %v2911 = vpow.pop %v2910
      %2912 = vadd.xlane.f32.xlu0 %v2881
      %v2913 = vpop.xlane.xlu0 %2912
      %2914 = vadd.xlane.f32.xlu0 %v2883
      %v2915 = vpop.xlane.xlu0 %2914
      %2916 = vadd.xlane.f32.xlu0 %v2885
      %v2917 = vpop.xlane.xlu0 %2916
      %2918 = vadd.xlane.f32.xlu0 %v2887
      %v2919 = vpop.xlane.xlu0 %2918
      %2920 = vadd.xlane.f32.xlu0 %v2889
      %v2921 = vpop.xlane.xlu0 %2920
      %2922 = vadd.xlane.f32.xlu0 %v2891
      %v2923 = vpop.xlane.xlu0 %2922
      %2924 = vadd.xlane.f32.xlu0 %v2893
      %v2925 = vpop.xlane.xlu0 %2924
      %2926 = vadd.xlane.f32.xlu0 %v2895
      %v2927 = vpop.xlane.xlu0 %2926
      %2928 = vadd.xlane.f32.xlu0 %v2897
      %v2929 = vpop.xlane.xlu0 %2928
      %2930 = vadd.xlane.f32.xlu0 %v2899
      %v2931 = vpop.xlane.xlu0 %2930
      %2932 = vadd.xlane.f32.xlu0 %v2901
      %v2933 = vpop.xlane.xlu0 %2932
      %2934 = vadd.xlane.f32.xlu0 %v2903
      %v2935 = vpop.xlane.xlu0 %2934
      %2936 = vadd.xlane.f32.xlu0 %v2905
      %v2937 = vpop.xlane.xlu0 %2936
      %2938 = vadd.xlane.f32.xlu0 %v2907
      %v2939 = vpop.xlane.xlu0 %2938
      %2940 = vadd.xlane.f32.xlu0 %v2909
      %v2941 = vpop.xlane.xlu0 %2940
      %2942 = vadd.xlane.f32.xlu0 %v2911
      %v2943 = vpop.xlane.xlu0 %2942
      %v2944 = vlog2.pop %v2913
      %v2945 = vmul.f32 %v2944, 0.6931472
      %v2946 = vlog2.pop %v2915
      %v2947 = vmul.f32 %v2946, 0.6931472
      %v2948 = vlog2.pop %v2917
      %v2949 = vmul.f32 %v2948, 0.6931472
      %v2950 = vlog2.pop %v2919
      %v2951 = vmul.f32 %v2950, 0.6931472
      %v2952 = vlog2.pop %v2921
      %v2953 = vmul.f32 %v2952, 0.6931472
      %v2954 = vlog2.pop %v2923
      %v2955 = vmul.f32 %v2954, 0.6931472
      %v2956 = vlog2.pop %v2925
      %v2957 = vmul.f32 %v2956, 0.6931472
      %v2958 = vlog2.pop %v2927
      %v2959 = vmul.f32 %v2958, 0.6931472
      %v2960 = vlog2.pop %v2929
      %v2961 = vmul.f32 %v2960, 0.6931472
      %v2962 = vlog2.pop %v2931
      %v2963 = vmul.f32 %v2962, 0.6931472
      %v2964 = vlog2.pop %v2933
      %v2965 = vmul.f32 %v2964, 0.6931472
      %v2966 = vlog2.pop %v2935
      %v2967 = vmul.f32 %v2966, 0.6931472
      %v2968 = vlog2.pop %v2937
      %v2969 = vmul.f32 %v2968, 0.6931472
      %v2970 = vlog2.pop %v2939
      %v2971 = vmul.f32 %v2970, 0.6931472
      %v2972 = vlog2.pop %v2941
      %v2973 = vmul.f32 %v2972, 0.6931472
      %v2974 = vlog2.pop %v2943
      %v2975 = vmul.f32 %v2974, 0.6931472
      %v2976 = vadd.f32 %v2833, %v2945
      %v2977 = vadd.f32 %v2835, %v2947
      %v2978 = vadd.f32 %v2837, %v2949
      %v2979 = vadd.f32 %v2839, %v2951
      %v2980 = vadd.f32 %v2841, %v2953
      %v2981 = vadd.f32 %v2843, %v2955
      %v2982 = vadd.f32 %v2845, %v2957
      %v2983 = vadd.f32 %v2847, %v2959
      %v2984 = vadd.f32 %v2849, %v2961
      %v2985 = vadd.f32 %v2851, %v2963
      %v2986 = vadd.f32 %v2853, %v2965
      %v2987 = vadd.f32 %v2855, %v2967
      %v2988 = vadd.f32 %v2857, %v2969
      %v2989 = vadd.f32 %v2859, %v2971
      %v2990 = vadd.f32 %v2861, %v2973
      %v2991 = vadd.f32 %v2863, %v2975
      %v2992 = vsub.f32 %v2785, %v2976
      %v2993 = vsub.f32 %v2788, %v2977
      %v2994 = vsub.f32 %v2791, %v2978
      %v2995 = vsub.f32 %v2794, %v2979
      %v2996 = vsub.f32 %v2797, %v2980
      %v2997 = vsub.f32 %v2800, %v2981
      %v2998 = vsub.f32 %v2803, %v2982
      %v2999 = vsub.f32 %v2806, %v2983
      %v3000 = vsub.f32 %v2809, %v2984
      %v3001 = vsub.f32 %v2812, %v2985
      %v3002 = vsub.f32 %v2815, %v2986
      %v3003 = vsub.f32 %v2818, %v2987
      %v3004 = vsub.f32 %v2821, %v2988
      %v3005 = vsub.f32 %v2824, %v2989
      %v3006 = vsub.f32 %v2827, %v2990
      %v3007 = vsub.f32 %v2830, %v2991
      %3008 = vst [vmem:[%s332] sm:$0xff] %v2992
      %3009 = vst [vmem:[%s332 + $0x8] sm:$0xff] %v2993
      %3010 = vst [vmem:[%s332 + $0x10] sm:$0xff] %v2994
      %3011 = vst [vmem:[%s332 + $0x18] sm:$0xff] %v2995
      %3012 = vst [vmem:[%s332 + $0x20] sm:$0xff] %v2996
      %3013 = vst [vmem:[%s332 + $0x28] sm:$0xff] %v2997
      %3014 = vst [vmem:[%s332 + $0x30] sm:$0xff] %v2998
      %3015 = vst [vmem:[%s332 + $0x38] sm:$0xff] %v2999
      %3016 = vst [vmem:[%s332 + $0x40] sm:$0xff] %v3000
      %3017 = vst [vmem:[%s332 + $0x48] sm:$0xff] %v3001
      %3018 = vst [vmem:[%s332 + $0x50] sm:$0xff] %v3002
      %3019 = vst [vmem:[%s332 + $0x58] sm:$0xff] %v3003
      %3020 = vst [vmem:[%s332 + $0x60] sm:$0xff] %v3004
      %3021 = vst [vmem:[%s332 + $0x68] sm:$0xff] %v3005
      %3022 = vst [vmem:[%s332 + $0x70] sm:$0xff] %v3006
      %3023 = vst [vmem:[%s332 + $0x78] sm:$0xff] %v3007
      %p3024 = scmp.lt.s32.totalorder %s20, 1
      %s3025 = scalar_select %p3024, %s20, 1
      %s3026 = smul.addr %s3025, 16
      %s3027 = smul.addr %s3026, 8
      %s3028 = scalar_lea.vmem %s9, %s3027
      // Predicated region
      $region57: #{token_predictor_forward.1} parent=55 // pred_check
        %p3029 = pneg %p232
      $region58: #{token_predictor_forward.1} parent=55 // pred_check_branch
        %3031 = sbr.rel (%p3029) target = $region60
      $region59: #{token_predictor_forward.1} parent=55 // pred_region
        _
      $region60: #{token_predictor_forward.1} parent=55 // pred_fallthru
        _
    $region56: #{token_predictor_forward.1} parent=5 // pred_fallthru
      _
    %p3032 = scmp.le.s32.totalorder 2, %s15
    // Predicated region
    $region61: #{token_predictor_forward.1} parent=5 // pred_check
      %p3033 = pneg %p3032
    $region62: #{token_predictor_forward.1} parent=5 // pred_check_branch
      %3035 = sbr.rel (%p3033) target = $region64
    $region63: #{token_predictor_forward.1} parent=5 // pred_region
      %s3036 = ssub.s32 %s15, 2
      // Predicated region
      $region65: #{token_predictor_forward.1} parent=63 // pred_check
        %p3037 = pneg %p238
      $region66: #{token_predictor_forward.1} parent=63 // pred_check_branch
        %3039 = sbr.rel (%p3037) target = $region68
      $region67: #{token_predictor_forward.1} parent=63 // pred_region
        %p3040 = scmp.lt.s32.totalorder %s21, 1
        %s3041 = scalar_select %p3040, %s21, 1
        %s3042 = smul.addr %s3041, 16
        %s3043 = smul.addr %s3042, 8
        %s3044 = scalar_lea.vmem %s9, %s3043
      $region68: #{token_predictor_forward.1} parent=63 // pred_fallthru
        _
    $region64: #{token_predictor_forward.1} parent=5 // pred_fallthru
      _
  $region6: #{token_predictor_forward.1} parent=0 // loop_footer
    %s19 = sadd.s32 1, %s15
  $region7: #{token_predictor_forward.1} parent=0 // loop_footer_branch
    %14 = sbr.rel target = $region3
  $region8: #{token_predictor_forward.1} parent=0 // loop_exit
    _

</llo_original>
